<compile_context>
chip_gen: v6e
topology: v6e:2x2x1
jax: 0.10.0
libtpu: 0.0.40
codegen_flags: <defaults>
</compile_context>

<pallas_src>
import functools

import jax
import jax.numpy as jnp
from jax.experimental import pallas as pl
from jax.experimental.pallas import tpu as pltpu


def _round_up(x, m):
    return ((x + m - 1) // m) * m


def _cdiv(a, b):
    return -(-a // b)


def _largest_aligned_divisor(total, align, cap):
    """Largest t with t % align == 0, total % t == 0 and t <= cap (>= align)."""
    best = align
    t = align
    while t <= min(total, cap):
        if total % t == 0:
            best = t
        t += align
    return best


def _tpu_generation():
    """Chip-generation-aware tiling knobs (conservative fallback if unknown)."""
    try:
        kind = jax.devices()[0].device_kind.lower()
    except Exception:  # pragma: no cover
        kind = ""
    if "v7" in kind:
        # v7x: 2 TensorCores/chip, 64 MiB VMEM per TC -> leave headroom.
        return {"num_tensorcores": 2, "vmem_budget": 28 << 20, "vmem_cap": 48 << 20}
    # v5e / v6e (and unknown): single TensorCore, 128 MiB VMEM.
    return {"num_tensorcores": 1, "vmem_budget": 80 << 20, "vmem_cap": 100 << 20}


def _sine_layer_kernel(x_ref, w_ref, b_ref, o_ref, *, omega_0, compute_dtype):
    # x_ref: (tm, in_f)   w_ref: (in_f, tn)   b_ref: (1, tn)   o_ref: (tm, tn)
    x = x_ref[...]
    if x.dtype != compute_dtype:
        x = x.astype(compute_dtype)           # bf16 MXU feed on v6e/v7x fast path
    acc = jnp.dot(x, w_ref[...], preferred_element_type=jnp.float32)
    # omega_0 applied once on the f32 accumulator (NOT folded into possibly
    # low-precision W); the bias already carries the omega_0 factor in f32.
    acc = jnp.float32(omega_0) * acc + b_ref[...]
    o_ref[...] = jnp.sin(acc).astype(o_ref.dtype)


def prepare_sine_layer_params(w, b, omega_0=30.0, *, compute_dtype=jnp.float32,
                              lane_multiple=128):
    """One-time parameter prep (call at init, NOT per forward step).

    * W transposed to (in_f, out_f) (MXU-native operand) and cast to
      compute_dtype (use jnp.bfloat16 on v6e/v7x for the fast MXU path).
    * omega_0 folded into the f32 bias only; the matching omega_0 multiply on
      the accumulator happens inside the kernel in f32.
    * out_features padded up to a multiple of 128 lanes (only).
    """
    out_f, in_f = w.shape
    out_f_pad = _round_up(out_f, lane_multiple)
    w_p = jnp.asarray(w, jnp.float32).T.astype(compute_dtype)        # (in_f, out_f)
    b_p = (jnp.float32(omega_0) * jnp.asarray(b, jnp.float32)).reshape(1, out_f)
    pad = out_f_pad - out_f
    if pad:
        w_p = jnp.pad(w_p, ((0, 0), (0, pad)))
        b_p = jnp.pad(b_p, ((0, 0), (0, pad)))
    return {"w": w_p, "b": b_p, "out_features": int(out_f),
            "omega_0": float(omega_0), "compute_dtype": jnp.dtype(compute_dtype)}


def sine_layer_apply(x, params, *, max_tm=1024, max_tn=512, out_dtype=None):
    """x: (N, in_features) -> (N, out_features) = sin(omega_0 * (x @ W.T + b))."""
    w_p, b_p = params["w"], params["b"]
    out_f = params["out_features"]
    omega_0 = params["omega_0"]
    compute_dtype = params["compute_dtype"]

    N, in_f = x.shape
    in_f_w, out_f_pad = w_p.shape
    assert in_f == in_f_w, (in_f, in_f_w)
    out_dtype = jnp.dtype(out_dtype) if out_dtype is not None else x.dtype

    info = _tpu_generation()
    num_tc = info["num_tensorcores"]
    vmem_budget = info["vmem_budget"]

    # Sublane packing: bf16 packs 16 rows per vreg, f32 packs 8.
    sublane = 16 if compute_dtype.itemsize < 4 else 8

    # ---- Column tile: largest multiple of 128 that DIVIDES out_f_pad.
    tn = _largest_aligned_divisor(out_f_pad, 128, max_tn)
    n_col_blocks = out_f_pad // tn

    # ---- Row blocks: balanced split.  Force >1 grid block only on 2-TC chips.
    min_row_blocks = 1
    if num_tc >= 2 and n_col_blocks == 1:
        if N >= 256:
            min_row_blocks = num_tc                   # batch split across TCs
        elif out_f_pad >= 256:
            # Small batch: split the feature axis instead so both TCs get work.
            tn = _largest_aligned_divisor(out_f_pad, 128, out_f_pad // 2)
            n_col_blocks = out_f_pad // tn
        elif N >= 2 * sublane:
            min_row_blocks = num_tc

    x_item = jnp.dtype(x.dtype).itemsize
    w_item = w_p.dtype.itemsize
    o_item = out_dtype.itemsize

    # Double-buffered x / W / bias / out tiles + f32 accumulator scratch.
    fixed_bytes = 2 * (in_f * tn * w_item + tn * 4)
    per_row_bytes = 2 * (in_f * x_item + tn * o_item) + tn * 4

    def _pick_tm(n_blocks):
        rows = _cdiv(N, n_blocks)
        tm_sub = _round_up(rows, sublane)
        tm_128 = _round_up(rows, 128)
        pad_sub = n_blocks * tm_sub - N
        pad_128 = n_blocks * tm_128 - N
        # Prefer MXU/store-aligned 128-row tiles only when the extra padding is negligible.
        tm = tm_128 if pad_128 <= max(pad_sub, N // 16) else tm_sub
        return min(tm, max(max_tm, sublane))

    n_row_blocks = max(min_row_blocks, _cdiv(N, max_tm))
    tm = _pick_tm(n_row_blocks)
    while fixed_bytes + tm * per_row_bytes > vmem_budget and tm > sublane:
        n_row_blocks += 1
        tm = _pick_tm(n_row_blocks)

    n_pad = _round_up(N, tm)
    x_in = x if n_pad == N else jnp.pad(x, ((0, n_pad - N), (0, 0)))
    # TODO(synk): for a full SIREN MLP, fuse consecutive layers into a single
    # pallas_call (all W fit in VMEM) and keep activations in the padded
    # (n_pad, out_f_pad) layout so this pad and the final slice leave the
    # steady-state path entirely.

    # Columns outer -> W/bias block index is constant across the inner row loop.
    grid = (n_col_blocks, n_pad // tm)

    kernel = functools.partial(_sine_layer_kernel, omega_0=omega_0,
                               compute_dtype=compute_dtype)

    cost = pl.CostEstimate(
        flops=2 * n_pad * in_f * out_f_pad,
        transcendentals=n_pad * out_f_pad,
        bytes_accessed=(n_pad * in_f * x_item + in_f * out_f_pad * w_item
                        + out_f_pad * 4 + n_pad * out_f_pad * o_item),
    )

    est = fixed_bytes + tm * per_row_bytes
    vmem_limit = int(min(info["vmem_cap"], max(32 << 20, 2 * est)))

    out = pl.pallas_call(
        kernel,
        out_shape=jax.ShapeDtypeStruct((n_pad, out_f_pad), out_dtype),
        grid_spec=pltpu.PrefetchScalarGridSpec(
            num_scalar_prefetch=0,
            grid=grid,
            in_specs=[
                pl.BlockSpec((tm, in_f), lambda j, i: (i, 0)),   # x row tile
                pl.BlockSpec((in_f, tn), lambda j, i: (0, j)),   # W cols (pre-transposed)
                pl.BlockSpec((1, tn), lambda j, i: (0, j)),      # bias cols (omega-folded f32)
            ],
            out_specs=pl.BlockSpec((tm, tn), lambda j, i: (i, j)),
        ),
        compiler_params=pltpu.CompilerParams(
            dimension_semantics=("parallel", "parallel"),
            vmem_limit_bytes=vmem_limit,
        ),
        cost_estimate=cost,
    )(x_in, w_p, b_p)

    if n_pad != N or out_f_pad != out_f:
        out = out[:N, :out_f]
    return out


def sine_layer(x, w, b, omega_0=30.0, *, compute_dtype=jnp.float32):
    """Convenience wrapper: y = sin(omega_0 * (x @ w.T + b)).

    For repeated forward passes, call prepare_sine_layer_params once and then
    sine_layer_apply per call so the transpose / pad / cast are not redone.
    Pass compute_dtype=jnp.bfloat16 for the fast MXU path on v6e/v7x.
    """
    params = prepare_sine_layer_params(w, b, omega_0, compute_dtype=compute_dtype)
    return sine_layer_apply(x, params)


if __name__ == "__main__":
    # SineLayer(in_features=32, out_features=32, is_first=True), batch of 256.
    in_features, out_features, batch = 32, 32, 256
    omega_0, is_first = 30.0, True

    key = jax.random.PRNGKey(0)
    kx, kw, kb = jax.random.split(key, 3)

    x = jax.random.normal(kx, (batch, in_features), dtype=jnp.float32)

    # SIREN weight init (is_first=True branch): U(-1/in, 1/in)
    w_bound = (1.0 / in_features) if is_first else float(
        jnp.sqrt(6.0 / in_features) / omega_0)
    w = jax.random.uniform(kw, (out_features, in_features), dtype=jnp.float32,
                           minval=-w_bound, maxval=w_bound)
    # nn.Linear default bias init: U(-1/sqrt(in), 1/sqrt(in))
    b_bound = 1.0 / float(jnp.sqrt(jnp.float32(in_features)))
    b = jax.random.uniform(kb, (out_features,), dtype=jnp.float32,
                           minval=-b_bound, maxval=b_bound)

    # --- exact-precision path (f32 weights / compute) ---
    params_f32 = prepare_sine_layer_params(w, b, omega_0, compute_dtype=jnp.float32)
    out_f32 = jax.block_until_ready(sine_layer_apply(x, params_f32))

    ref = jnp.sin(omega_0 * (x @ w.T + b))
    assert out_f32.shape == (batch, out_features)
    assert jnp.allclose(out_f32, ref, atol=1e-4, rtol=1e-4), "f32 path mismatch"

    # --- bf16-weight fast path (f32 accumulate; omega_0 kept out of bf16 W) ---
    params_bf16 = prepare_sine_layer_params(w, b, omega_0, compute_dtype=jnp.bfloat16)
    out_bf16 = jax.block_until_ready(sine_layer_apply(x, params_bf16))

    x_q = x.astype(jnp.bfloat16).astype(jnp.float32)
    w_q = w.astype(jnp.bfloat16).astype(jnp.float32)
    ref_bf16 = jnp.sin(omega_0 * (x_q @ w_q.T) + omega_0 * b)
    assert out_bf16.shape == (batch, out_features)
    assert jnp.allclose(out_bf16, ref_bf16, atol=2e-3, rtol=2e-3), "bf16 path mismatch"

    print("KERNEL_OK")
</pallas_src>

<mosaic_0001>
module attributes {stable_mosaic.version = 11 : i64} {
  func.func @_sine_layer_kernel(%arg0: i32, %arg1: i32, %arg2: memref<256x32xf32, #tpu.memory_space<vmem>>, %arg3: memref<32x128xf32, #tpu.memory_space<vmem>>, %arg4: memref<1x128xf32, #tpu.memory_space<vmem>>, %arg5: memref<256x128xf32, #tpu.memory_space<vmem>>) attributes {dimension_semantics = [#tpu.dimension_semantics<parallel>, #tpu.dimension_semantics<parallel>], iteration_bounds = array<i64: 1, 1>, scalar_prefetch = 0 : i64, scratch_operands = 0 : i64, tpu.core_type = #tpu.core_type<tc>, window_params = [{transform_indices = @transform_0, window_bounds = array<i64: 256, 32>}, {transform_indices = @transform_1, window_bounds = array<i64: 32, 128>}, {transform_indices = @transform_2, window_bounds = array<i64: 1, 128>}, {transform_indices = @transform_3, window_bounds = array<i64: 256, 128>}]} {
    %c0 = arith.constant 0 : index
    %c0_0 = arith.constant 0 : index
    %0 = vector.load %arg2[%c0, %c0_0] : memref<256x32xf32, #tpu.memory_space<vmem>>, vector<256x32xf32>
    %c0_1 = arith.constant 0 : index
    %c0_2 = arith.constant 0 : index
    %1 = vector.load %arg3[%c0_1, %c0_2] : memref<32x128xf32, #tpu.memory_space<vmem>>, vector<32x128xf32>
    %cst = arith.constant dense<0.000000e+00> : vector<256x128xf32>
    %2 = tpu.matmul %0, %1, %cst {dimension_numbers = #tpu.dot_dimension_numbers<[1], [0], [0], [1], [0, 0, 1, 1], [], []>} : vector<256x32xf32>, vector<32x128xf32>, vector<256x128xf32> -> vector<256x128xf32>
    %cst_3 = arith.constant 3.000000e+01 : f32
    %3 = vector.broadcast %cst_3 : f32 to vector<256x128xf32>
    %4 = arith.mulf %3, %2 : vector<256x128xf32>
    %c0_4 = arith.constant 0 : index
    %c0_5 = arith.constant 0 : index
    %5 = vector.load %arg4[%c0_4, %c0_5] : memref<1x128xf32, #tpu.memory_space<vmem>>, vector<1x128xf32>
    %6 = vector.broadcast %5 : vector<1x128xf32> to vector<256x128xf32>
    %7 = arith.addf %4, %6 : vector<256x128xf32>
    %8 = math.sin %7 : vector<256x128xf32>
    %c0_6 = arith.constant 0 : index
    %c0_7 = arith.constant 0 : index
    %9 = vector.load %arg5[%c0_6, %c0_7] : memref<256x128xf32, #tpu.memory_space<vmem>>, vector<256x128xf32>
    tpu.vector_store %arg5[%c0_6, %c0_7], %8 {strides = array<i32>} : memref<256x128xf32, #tpu.memory_space<vmem>>, vector<256x128xf32>,
    return
  }
  func.func @transform_0(%arg0: i32, %arg1: i32) -> (i32, i32) {
    %c0_i32 = arith.constant 0 : i32
    %c0_i32_0 = arith.constant 0 : i32
    return %arg1, %c0_i32 : i32, i32
  }
  func.func @transform_1(%arg0: i32, %arg1: i32) -> (i32, i32) {
    %c0_i32 = arith.constant 0 : i32
    %c0_i32_0 = arith.constant 0 : i32
    return %c0_i32, %arg0 : i32, i32
  }
  func.func @transform_2(%arg0: i32, %arg1: i32) -> (i32, i32) {
    %c0_i32 = arith.constant 0 : i32
    %c0_i32_0 = arith.constant 0 : i32
    return %c0_i32, %arg0 : i32, i32
  }
  func.func @transform_3(%arg0: i32, %arg1: i32) -> (i32, i32) {
    %c0_i32 = arith.constant 0 : i32
    return %arg1, %arg0 : i32, i32
  }
}

</mosaic_0001>

<llo_original>
// kernel: tpu_custom_call.1
$region0: #{tpu_custom_call.1}
  #allocation0 [shape = 'u32[]', space=smem, size = 0x4, offset = 0x4, fixed_abs, tag = 'smem constant byte address 0x4 - core index']
  #allocation1 [shape = 'u32[144,128]{1,0:T(1,128)}', space=vmem, size = 0x12000, scoped, tag = 'internal scratch']
  %s0 = inlined_call_operand.vmem [shape: f32[256,32], index: 0, kind: input, shape index: {}]
  %s1 = inlined_call_operand.vmem [shape: f32[32,128], index: 1, kind: input, shape index: {}]
  %s2 = inlined_call_operand.vmem [shape: f32[1,128], index: 2, kind: input, shape index: {}]
  %s3 = inlined_call_operand.hbm [shape: f32[256,128], index: 3, kind: output, shape index: {}]
  %s4 = sld [smem:[#allocation0]]
  $region22: #{tpu_custom_call.1} parent=0
    _
  %s6 = ssub.s32 1, %s4
  %s7 = scalar_select 0, %s6, %s4
  $region1: #{tpu_custom_call.1} parent=0
    #allocation2 [shape = 'u8[131072]{0}', space=vmem, size = 0x20000, scoped, tag = 'output window, operand 0, single buffered']
    #allocation3 [shape = 's32[1]{0}', space=sflag, size = 0x4, scoped, tag = 'scoped memory for tpu_custom_call.1']
    %8 = vsyncpa [#allocation3], 0
    // Predicated region
    $region2: #{tpu_custom_call.1} parent=1 // pred_check
      _
    $region3: #{tpu_custom_call.1} parent=1 // pred_check_branch
      %10 = sbr.rel (0) target = $region5
    $region4: #{tpu_custom_call.1} parent=1 // pred_region
      _
    $region5: #{tpu_custom_call.1} parent=1 // pred_fallthru
      _
    // Predicated region
    $region6: #{tpu_custom_call.1} parent=1 // pred_check
      _
    $region7: #{tpu_custom_call.1} parent=1 // pred_check_branch
      %12 = sbr.rel (0) target = $region9
    $region8: #{tpu_custom_call.1} parent=1 // pred_region
      _
    $region9: #{tpu_custom_call.1} parent=1 // pred_fallthru
      _
    // Predicated region
    $region10: #{tpu_custom_call.1} parent=1 // pred_check
      _
    $region11: #{tpu_custom_call.1} parent=1 // pred_check_branch
      %14 = sbr.rel (0) target = $region13
    $region12: #{tpu_custom_call.1} parent=1 // pred_region
      _
    $region13: #{tpu_custom_call.1} parent=1 // pred_fallthru
      _
    %v15 = vld [vmem:[%s0] sm:$0xff]
    %v16 = vld [vmem:[%s0 + $0x8] sm:$0xff]
    %v17 = vld [vmem:[%s0 + $0x10] sm:$0xff]
    %v18 = vld [vmem:[%s0 + $0x18] sm:$0xff]
    %v19 = vld [vmem:[%s0 + $0x20] sm:$0xff]
    %v20 = vld [vmem:[%s0 + $0x28] sm:$0xff]
    %v21 = vld [vmem:[%s0 + $0x30] sm:$0xff]
    %v22 = vld [vmem:[%s0 + $0x38] sm:$0xff]
    %v23 = vld [vmem:[%s0 + $0x40] sm:$0xff]
    %v24 = vld [vmem:[%s0 + $0x48] sm:$0xff]
    %v25 = vld [vmem:[%s0 + $0x50] sm:$0xff]
    %v26 = vld [vmem:[%s0 + $0x58] sm:$0xff]
    %v27 = vld [vmem:[%s0 + $0x60] sm:$0xff]
    %v28 = vld [vmem:[%s0 + $0x68] sm:$0xff]
    %v29 = vld [vmem:[%s0 + $0x70] sm:$0xff]
    %v30 = vld [vmem:[%s0 + $0x78] sm:$0xff]
    %v31 = vld [vmem:[%s0 + $0x80] sm:$0xff]
    %v32 = vld [vmem:[%s0 + $0x88] sm:$0xff]
    %v33 = vld [vmem:[%s0 + $0x90] sm:$0xff]
    %v34 = vld [vmem:[%s0 + $0x98] sm:$0xff]
    %v35 = vld [vmem:[%s0 + $0xa0] sm:$0xff]
    %v36 = vld [vmem:[%s0 + $0xa8] sm:$0xff]
    %v37 = vld [vmem:[%s0 + $0xb0] sm:$0xff]
    %v38 = vld [vmem:[%s0 + $0xb8] sm:$0xff]
    %v39 = vld [vmem:[%s0 + $0xc0] sm:$0xff]
    %v40 = vld [vmem:[%s0 + $0xc8] sm:$0xff]
    %v41 = vld [vmem:[%s0 + $0xd0] sm:$0xff]
    %v42 = vld [vmem:[%s0 + $0xd8] sm:$0xff]
    %v43 = vld [vmem:[%s0 + $0xe0] sm:$0xff]
    %v44 = vld [vmem:[%s0 + $0xe8] sm:$0xff]
    %v45 = vld [vmem:[%s0 + $0xf0] sm:$0xff]
    %v46 = vld [vmem:[%s0 + $0xf8] sm:$0xff]
    %v47 = vld [vmem:[%s1] sm:$0xff]
    %v48 = vld [vmem:[%s1 + $0x8] sm:$0xff]
    %v49 = vld [vmem:[%s1 + $0x10] sm:$0xff]
    %v50 = vld [vmem:[%s1 + $0x18] sm:$0xff]
    %vm51 = vcmask 261120
    %v53 = vsel %vm51, %v15, 0
    %v56 = vsel %vm51, %v16, 0
    %v59 = vsel %vm51, %v17, 0
    %v62 = vsel %vm51, %v18, 0
    %v65 = vsel %vm51, %v19, 0
    %v68 = vsel %vm51, %v20, 0
    %v71 = vsel %vm51, %v21, 0
    %v74 = vsel %vm51, %v22, 0
    %v77 = vsel %vm51, %v23, 0
    %v80 = vsel %vm51, %v24, 0
    %v83 = vsel %vm51, %v25, 0
    %v86 = vsel %vm51, %v26, 0
    %v89 = vsel %vm51, %v27, 0
    %v92 = vsel %vm51, %v28, 0
    %v95 = vsel %vm51, %v29, 0
    %v98 = vsel %vm51, %v30, 0
    %v101 = vsel %vm51, %v31, 0
    %v104 = vsel %vm51, %v32, 0
    %v107 = vsel %vm51, %v33, 0
    %v110 = vsel %vm51, %v34, 0
    %v113 = vsel %vm51, %v35, 0
    %v116 = vsel %vm51, %v36, 0
    %v119 = vsel %vm51, %v37, 0
    %v122 = vsel %vm51, %v38, 0
    %v125 = vsel %vm51, %v39, 0
    %v128 = vsel %vm51, %v40, 0
    %v131 = vsel %vm51, %v41, 0
    %v134 = vsel %vm51, %v42, 0
    %v137 = vsel %vm51, %v43, 0
    %v140 = vsel %vm51, %v44, 0
    %v143 = vsel %vm51, %v45, 0
    %v146 = vsel %vm51, %v46, 0
    %148 = vmatprep.subr.mxu0 0.0
    %149 = vmatpush1.msra.mxu0 0.0
    %150 = vmatprep.subr.mxu0 0.0
    %151 = vmatpush1.msra.mxu0 0.0
    %152 = vmatprep.subr.mxu0 0.0
    %153 = vmatpush1.msra.mxu0 0.0
    %154 = vmatprep.subr.mxu0 0.0
    %155 = vmatpush1.msra.mxu0 0.0
    %156 = vmatprep.subr.mxu0 0.0
    %157 = vmatpush1.msra.mxu0 0.0
    %158 = vmatprep.subr.mxu0 0.0
    %159 = vmatpush1.msra.mxu0 0.0
    %160 = vmatprep.subr.mxu0 0.0
    %161 = vmatpush1.msra.mxu0 0.0
    %162 = vmatprep.subr.mxu0 0.0
    %163 = vmatpush1.msra.mxu0 0.0
    %164 = vmatprep.subr.mxu0 0.0
    %165 = vmatpush1.msra.mxu0 0.0
    %166 = vmatprep.subr.mxu0 0.0
    %167 = vmatpush1.msra.mxu0 0.0
    %168 = vmatprep.subr.mxu0 0.0
    %169 = vmatpush1.msra.mxu0 0.0
    %170 = vmatprep.subr.mxu0 0.0
    %171 = vmatpush1.msra.mxu0 0.0
    %172 = vmatprep.subr.mxu0 0.0
    %173 = vmatpush1.msra.mxu0 %v50
    %174 = vmatprep.subr.mxu0 0.0
    %175 = vmatpush1.msra.mxu0 %v49
    %176 = vmatprep.subr.mxu0 0.0
    %177 = vmatpush1.msra.mxu0 %v48
    %178 = vmatprep.subr.mxu0 0.0
    %179 = vmatpush1.msra.mxu0 %v47
    %180 = vmatprep.subr.mxu0 0.0
    %181 = vmatpush2.msra.mxu0 0.0
    %182 = vmatprep.subr.mxu0 0.0
    %183 = vmatpush2.msra.mxu0 0.0
    %184 = vmatprep.subr.mxu0 0.0
    %185 = vmatpush2.msra.mxu0 0.0
    %186 = vmatprep.subr.mxu0 0.0
    %187 = vmatpush2.msra.mxu0 0.0
    %188 = vmatprep.subr.mxu0 0.0
    %189 = vmatpush2.msra.mxu0 0.0
    %190 = vmatprep.subr.mxu0 0.0
    %191 = vmatpush2.msra.mxu0 0.0
    %192 = vmatprep.subr.mxu0 0.0
    %193 = vmatpush2.msra.mxu0 0.0
    %194 = vmatprep.subr.mxu0 0.0
    %195 = vmatpush2.msra.mxu0 0.0
    %196 = vmatprep.subr.mxu0 0.0
    %197 = vmatpush2.msra.mxu0 0.0
    %198 = vmatprep.subr.mxu0 0.0
    %199 = vmatpush2.msra.mxu0 0.0
    %200 = vmatprep.subr.mxu0 0.0
    %201 = vmatpush2.msra.mxu0 0.0
    %202 = vmatprep.subr.mxu0 0.0
    %203 = vmatpush2.msra.mxu0 0.0
    %204 = vmatprep.subr.mxu0 0.0
    %205 = vmatpush2.msra.mxu0 0.0
    %206 = vmatprep.subr.mxu0 0.0
    %207 = vmatpush2.msra.mxu0 0.0
    %208 = vmatprep.subr.mxu0 0.0
    %209 = vmatpush2.msra.mxu0 0.0
    %210 = vmatprep.subr.mxu0 0.0
    %211 = vmatpush2.msra.mxu0 0.0
    %212 = vmatprep.mubr.f32.mxu0 0.0
    %213 = vmatmul.mubr.f32.gmra.mxu0 %v53
    %v214 = vpop.f32.mrf.mxu0
    %v215 = vadd.f32 0.0, %v214
    %v216 = vpop.f32.mrf.mxu0
    %217 = vmatprep.mubr.f32.mxu0 0.0
    %218 = vmatmul.mubr.f32.gmra.mxu0 %v56
    %v219 = vpop.f32.mrf.mxu0
    %v220 = vadd.f32 0.0, %v219
    %v221 = vpop.f32.mrf.mxu0
    %222 = vmatprep.mubr.f32.mxu0 0.0
    %223 = vmatmul.mubr.f32.gmra.mxu0 %v59
    %v224 = vpop.f32.mrf.mxu0
    %v225 = vadd.f32 0.0, %v224
    %v226 = vpop.f32.mrf.mxu0
    %227 = vmatprep.mubr.f32.mxu0 0.0
    %228 = vmatmul.mubr.f32.gmra.mxu0 %v62
    %v229 = vpop.f32.mrf.mxu0
    %v230 = vadd.f32 0.0, %v229
    %v231 = vpop.f32.mrf.mxu0
    %232 = vmatprep.mubr.f32.mxu0 0.0
    %233 = vmatmul.mubr.f32.gmra.mxu0 %v65
    %v234 = vpop.f32.mrf.mxu0
    %v235 = vadd.f32 0.0, %v234
    %v236 = vpop.f32.mrf.mxu0
    %237 = vmatprep.mubr.f32.mxu0 0.0
    %238 = vmatmul.mubr.f32.gmra.mxu0 %v68
    %v239 = vpop.f32.mrf.mxu0
    %v240 = vadd.f32 0.0, %v239
    %v241 = vpop.f32.mrf.mxu0
    %242 = vmatprep.mubr.f32.mxu0 0.0
    %243 = vmatmul.mubr.f32.gmra.mxu0 %v71
    %v244 = vpop.f32.mrf.mxu0
    %v245 = vadd.f32 0.0, %v244
    %v246 = vpop.f32.mrf.mxu0
    %247 = vmatprep.mubr.f32.mxu0 0.0
    %248 = vmatmul.mubr.f32.gmra.mxu0 %v74
    %v249 = vpop.f32.mrf.mxu0
    %v250 = vadd.f32 0.0, %v249
    %v251 = vpop.f32.mrf.mxu0
    %252 = vmatprep.mubr.f32.mxu0 0.0
    %253 = vmatmul.mubr.f32.gmra.mxu0 %v77
    %v254 = vpop.f32.mrf.mxu0
    %v255 = vadd.f32 0.0, %v254
    %v256 = vpop.f32.mrf.mxu0
    %257 = vmatprep.mubr.f32.mxu0 0.0
    %258 = vmatmul.mubr.f32.gmra.mxu0 %v80
    %v259 = vpop.f32.mrf.mxu0
    %v260 = vadd.f32 0.0, %v259
    %v261 = vpop.f32.mrf.mxu0
    %262 = vmatprep.mubr.f32.mxu0 0.0
    %263 = vmatmul.mubr.f32.gmra.mxu0 %v83
    %v264 = vpop.f32.mrf.mxu0
    %v265 = vadd.f32 0.0, %v264
    %v266 = vpop.f32.mrf.mxu0
    %267 = vmatprep.mubr.f32.mxu0 0.0
    %268 = vmatmul.mubr.f32.gmra.mxu0 %v86
    %v269 = vpop.f32.mrf.mxu0
    %v270 = vadd.f32 0.0, %v269
    %v271 = vpop.f32.mrf.mxu0
    %272 = vmatprep.mubr.f32.mxu0 0.0
    %273 = vmatmul.mubr.f32.gmra.mxu0 %v89
    %v274 = vpop.f32.mrf.mxu0
    %v275 = vadd.f32 0.0, %v274
    %v276 = vpop.f32.mrf.mxu0
    %277 = vmatprep.mubr.f32.mxu0 0.0
    %278 = vmatmul.mubr.f32.gmra.mxu0 %v92
    %v279 = vpop.f32.mrf.mxu0
    %v280 = vadd.f32 0.0, %v279
    %v281 = vpop.f32.mrf.mxu0
    %282 = vmatprep.mubr.f32.mxu0 0.0
    %283 = vmatmul.mubr.f32.gmra.mxu0 %v95
    %v284 = vpop.f32.mrf.mxu0
    %v285 = vadd.f32 0.0, %v284
    %v286 = vpop.f32.mrf.mxu0
    %287 = vmatprep.mubr.f32.mxu0 0.0
    %288 = vmatmul.mubr.f32.gmra.mxu0 %v98
    %v289 = vpop.f32.mrf.mxu0
    %v290 = vadd.f32 0.0, %v289
    %v291 = vpop.f32.mrf.mxu0
    %292 = vmatprep.mubr.f32.mxu0 0.0
    %293 = vmatmul.mubr.f32.gmra.mxu0 %v101
    %v294 = vpop.f32.mrf.mxu0
    %v295 = vadd.f32 0.0, %v294
    %v296 = vpop.f32.mrf.mxu0
    %297 = vmatprep.mubr.f32.mxu0 0.0
    %298 = vmatmul.mubr.f32.gmra.mxu0 %v104
    %v299 = vpop.f32.mrf.mxu0
    %v300 = vadd.f32 0.0, %v299
    %v301 = vpop.f32.mrf.mxu0
    %302 = vmatprep.mubr.f32.mxu0 0.0
    %303 = vmatmul.mubr.f32.gmra.mxu0 %v107
    %v304 = vpop.f32.mrf.mxu0
    %v305 = vadd.f32 0.0, %v304
    %v306 = vpop.f32.mrf.mxu0
    %307 = vmatprep.mubr.f32.mxu0 0.0
    %308 = vmatmul.mubr.f32.gmra.mxu0 %v110
    %v309 = vpop.f32.mrf.mxu0
    %v310 = vadd.f32 0.0, %v309
    %v311 = vpop.f32.mrf.mxu0
    %312 = vmatprep.mubr.f32.mxu0 0.0
    %313 = vmatmul.mubr.f32.gmra.mxu0 %v113
    %v314 = vpop.f32.mrf.mxu0
    %v315 = vadd.f32 0.0, %v314
    %v316 = vpop.f32.mrf.mxu0
    %317 = vmatprep.mubr.f32.mxu0 0.0
    %318 = vmatmul.mubr.f32.gmra.mxu0 %v116
    %v319 = vpop.f32.mrf.mxu0
    %v320 = vadd.f32 0.0, %v319
    %v321 = vpop.f32.mrf.mxu0
    %322 = vmatprep.mubr.f32.mxu0 0.0
    %323 = vmatmul.mubr.f32.gmra.mxu0 %v119
    %v324 = vpop.f32.mrf.mxu0
    %v325 = vadd.f32 0.0, %v324
    %v326 = vpop.f32.mrf.mxu0
    %327 = vmatprep.mubr.f32.mxu0 0.0
    %328 = vmatmul.mubr.f32.gmra.mxu0 %v122
    %v329 = vpop.f32.mrf.mxu0
    %v330 = vadd.f32 0.0, %v329
    %v331 = vpop.f32.mrf.mxu0
    %332 = vmatprep.mubr.f32.mxu0 0.0
    %333 = vmatmul.mubr.f32.gmra.mxu0 %v125
    %v334 = vpop.f32.mrf.mxu0
    %v335 = vadd.f32 0.0, %v334
    %v336 = vpop.f32.mrf.mxu0
    %337 = vmatprep.mubr.f32.mxu0 0.0
    %338 = vmatmul.mubr.f32.gmra.mxu0 %v128
    %v339 = vpop.f32.mrf.mxu0
    %v340 = vadd.f32 0.0, %v339
    %v341 = vpop.f32.mrf.mxu0
    %342 = vmatprep.mubr.f32.mxu0 0.0
    %343 = vmatmul.mubr.f32.gmra.mxu0 %v131
    %v344 = vpop.f32.mrf.mxu0
    %v345 = vadd.f32 0.0, %v344
    %v346 = vpop.f32.mrf.mxu0
    %347 = vmatprep.mubr.f32.mxu0 0.0
    %348 = vmatmul.mubr.f32.gmra.mxu0 %v134
    %v349 = vpop.f32.mrf.mxu0
    %v350 = vadd.f32 0.0, %v349
    %v351 = vpop.f32.mrf.mxu0
    %352 = vmatprep.mubr.f32.mxu0 0.0
    %353 = vmatmul.mubr.f32.gmra.mxu0 %v137
    %v354 = vpop.f32.mrf.mxu0
    %v355 = vadd.f32 0.0, %v354
    %v356 = vpop.f32.mrf.mxu0
    %357 = vmatprep.mubr.f32.mxu0 0.0
    %358 = vmatmul.mubr.f32.gmra.mxu0 %v140
    %v359 = vpop.f32.mrf.mxu0
    %v360 = vadd.f32 0.0, %v359
    %v361 = vpop.f32.mrf.mxu0
    %362 = vmatprep.mubr.f32.mxu0 0.0
    %363 = vmatmul.mubr.f32.gmra.mxu0 %v143
    %v364 = vpop.f32.mrf.mxu0
    %v365 = vadd.f32 0.0, %v364
    %v366 = vpop.f32.mrf.mxu0
    %367 = vmatprep.mubr.f32.mxu0 0.0
    %368 = vmatmul.mubr.f32.gmra.mxu0 %v146
    %v369 = vpop.f32.mrf.mxu0
    %v370 = vadd.f32 0.0, %v369
    %v371 = vpop.f32.mrf.mxu0
    %372 = vdwg.mxu0
    %v373 = vmul.f32 %v215, 30.0
    %v374 = vmul.f32 %v220, 30.0
    %v375 = vmul.f32 %v225, 30.0
    %v376 = vmul.f32 %v230, 30.0
    %v377 = vmul.f32 %v235, 30.0
    %v378 = vmul.f32 %v240, 30.0
    %v379 = vmul.f32 %v245, 30.0
    %v380 = vmul.f32 %v250, 30.0
    %v381 = vmul.f32 %v255, 30.0
    %v382 = vmul.f32 %v260, 30.0
    %v383 = vmul.f32 %v265, 30.0
    %v384 = vmul.f32 %v270, 30.0
    %v385 = vmul.f32 %v275, 30.0
    %v386 = vmul.f32 %v280, 30.0
    %v387 = vmul.f32 %v285, 30.0
    %v388 = vmul.f32 %v290, 30.0
    %v389 = vmul.f32 %v295, 30.0
    %v390 = vmul.f32 %v300, 30.0
    %v391 = vmul.f32 %v305, 30.0
    %v392 = vmul.f32 %v310, 30.0
    %v393 = vmul.f32 %v315, 30.0
    %v394 = vmul.f32 %v320, 30.0
    %v395 = vmul.f32 %v325, 30.0
    %v396 = vmul.f32 %v330, 30.0
    %v397 = vmul.f32 %v335, 30.0
    %v398 = vmul.f32 %v340, 30.0
    %v399 = vmul.f32 %v345, 30.0
    %v400 = vmul.f32 %v350, 30.0
    %v401 = vmul.f32 %v355, 30.0
    %v402 = vmul.f32 %v360, 30.0
    %v403 = vmul.f32 %v365, 30.0
    %v404 = vmul.f32 %v370, 30.0
    %v405 = vld [vmem:[%s2] sm:$0x1]
    %v407 = vlaneseq
    %v408 = vshrl.u32 %v407, 7
    %v409 = vsub.s32 0, %v408
    %v410 = vrot.slane %v405, %v409
    %v412 = vadd.f32 %v373, %v410
    %v413 = vadd.f32 %v374, %v410
    %v414 = vadd.f32 %v375, %v410
    %v415 = vadd.f32 %v376, %v410
    %v416 = vadd.f32 %v377, %v410
    %v417 = vadd.f32 %v378, %v410
    %v418 = vadd.f32 %v379, %v410
    %v419 = vadd.f32 %v380, %v410
    %v420 = vadd.f32 %v381, %v410
    %v421 = vadd.f32 %v382, %v410
    %v422 = vadd.f32 %v383, %v410
    %v423 = vadd.f32 %v384, %v410
    %v424 = vadd.f32 %v385, %v410
    %v425 = vadd.f32 %v386, %v410
    %v426 = vadd.f32 %v387, %v410
    %v427 = vadd.f32 %v388, %v410
    %v428 = vadd.f32 %v389, %v410
    %v429 = vadd.f32 %v390, %v410
    %v430 = vadd.f32 %v391, %v410
    %v431 = vadd.f32 %v392, %v410
    %v432 = vadd.f32 %v393, %v410
    %v433 = vadd.f32 %v394, %v410
    %v434 = vadd.f32 %v395, %v410
    %v435 = vadd.f32 %v396, %v410
    %v436 = vadd.f32 %v397, %v410
    %v437 = vadd.f32 %v398, %v410
    %v438 = vadd.f32 %v399, %v410
    %v439 = vadd.f32 %v400, %v410
    %v440 = vadd.f32 %v401, %v410
    %v441 = vadd.f32 %v402, %v410
    %v442 = vadd.f32 %v403, %v410
    %v443 = vadd.f32 %v404, %v410
    %v444 = vand.u32 2147483647, %v412
    %vm445 = vcmp.le.f32.partialorder %v444, 0.7853982
    %vm446 = vcmp.lt.s32.totalorder %v412, 0
    %v447 = vand.u32 %v412, 2139095040
    %v448 = vshrl.u32 %v447, 23
    %v449 = vsub.s32 %v448, 127
    %v450 = vand.u32 2147483647, %v412
    %v451 = vand.u32 %v450, 8388607
    %v452 = vor.u32 %v451, 8388608
    %v453 = vsub.s32 0, %v452
    %v454 = vadd.s32 %v449, 1
    %vm455 = vcmp.gt.s32.totalorder %v454, 0
    %v456 = vsel %vm455, %v454, 0
    %v457 = vshrl.u32 %v456, 5
    %v458 = vand.u32 %v456, 31
    %v459 = vsub.s32 32, %v458
    %v460 = vshrl.u32 683565275, %v459
    %v461 = vshll.u32 683565275, %v458
    %v462 = vshrl.u32 2475754826, %v459
    %v463 = vor.u32 %v461, %v462
    %v464 = vshll.u32 2475754826, %v458
    %v465 = vshrl.u32 2131351028, %v459
    %v466 = vor.u32 %v464, %v465
    %v467 = vshll.u32 2131351028, %v458
    %v468 = vshrl.u32 2102212464, %v459
    %v469 = vor.u32 %v467, %v468
    %v470 = vshll.u32 2102212464, %v458
    %v471 = vshrl.u32 920167782, %v459
    %v472 = vor.u32 %v470, %v471
    %v473 = vshll.u32 920167782, %v458
    %v474 = vshrl.u32 1326507024, %v459
    %v475 = vor.u32 %v473, %v474
    %vm476 = vcmp.lt.s32.totalorder %v457, 1
    %vm477 = vcmp.lt.s32.totalorder %v457, 2
    %vm478 = vcmp.lt.s32.totalorder %v457, 3
    %vm479 = vcmp.lt.s32.totalorder %v457, 4
    %v480 = vsel %vm476, %v460, %v463
    %v481 = vsel %vm479, %v469, 2102212464
    %v482 = vsel %vm478, %v466, %v481
    %v483 = vsel %vm477, %v480, %v482
    %v484 = vsel %vm476, %v463, %v466
    %v485 = vsel %vm479, %v472, 920167782
    %v486 = vsel %vm478, %v469, %v485
    %v487 = vsel %vm477, %v484, %v486
    %v488 = vsel %vm476, %v466, %v469
    %v489 = vsel %vm479, %v475, 1326507024
    %v490 = vsel %vm478, %v472, %v489
    %v491 = vsel %vm477, %v488, %v490
    %v492 = vshll.u32 %v452, 8
    %v493 = vmul.u32.u64.compose %v492, %v491
    %v494 = vextract.low.u32 %v493
    %v495 = vextract.high.u32 %v493
    %v496 = vmul.u32.u64.compose %v492, %v487
    %v497 = vextract.low.u32 %v496
    %v498 = vextract.high.u32 %v496
    %v499 = vmul.u32 %v492, %v483
    %v500 = vadd.s32 %v495, %v497
    %vm501 = vc.u32 %v495, %v497
    %v502 = vadd.s32 %v498, 1
    %v503 = vsel %vm501, %v502, %v498
    %v504 = vadd.s32 %v499, %v503
    %v505 = vadd.s32 %v504, 536870912
    %v506 = vshrl.u32 %v505, 30
    %v507 = vshll.u32 %v506, 30
    %v508 = vsub.s32 %v504, %v507
    %vm509 = vcmp.lt.s32.totalorder %v508, 0
    %v510 = vsub.s32 0, %v508
    %v511 = vsel %vm509, %v510, %v508
    %v512 = vclz %v511
    %v513 = vsub.s32 %v512, 2
    %vm514 = vcmp.gt.s32.totalorder 0, %v513
    %v515 = vsel %vm514, 0, %v513
    %v516 = vsub.s32 32, %v515
    %v517 = vshll.u32 %v508, %v515
    %v518 = vshrl.u32 %v500, %v516
    %v519 = vor.u32 %v517, %v518
    %v520 = vsub.s32 4294967266, %v515
    %v521 = vadd.s32 %v520, 127
    %v522 = vshll.u32 %v521, 23
    %v523 = vor.u32 4788187, %v522
    %v524 = vand.u32 2147483647, %v523
    %v526 = vcvt.s32.f32 %v519
    %v527 = vmul.f32 %v526, %v524
    %v528 = vxor.u32 %v527, 2147483648
    %v529 = vsel %vm446, %v528, %v527
    %v530 = vsub.s32 4, %v506
    %v531 = vsel %vm446, %v530, %v506
    %v532 = vsel %vm445, %v412, %v529
    %v533 = vsel %vm445, 0, %v531
    %v534 = vcosq.f32.pop %v532
    %v535 = vsinq.f32.pop %v532
    %vm536 = vweird.f32 %v412
    %v537 = vadd.s32 %v533, 3
    %v538 = vand.u32 %v537, 3
    %vm539 = vcmp.lt.s32.totalorder %v538, 2
    %vm540 = vcmp.eq.s32.totalorder %v538, 0
    %v541 = vxor.u32 %v535, 2147483648
    %v542 = vsel %vm540, %v534, %v541
    %vm543 = vcmp.eq.s32.totalorder %v538, 2
    %v544 = vxor.u32 %v534, 2147483648
    %v545 = vsel %vm543, %v544, %v535
    %v546 = vsel %vm539, %v542, %v545
    %v547 = vsel %vm536, nan, %v546
    %v548 = vand.u32 2147483647, %v413
    %vm549 = vcmp.le.f32.partialorder %v548, 0.7853982
    %vm550 = vcmp.lt.s32.totalorder %v413, 0
    %v551 = vand.u32 %v413, 2139095040
    %v552 = vshrl.u32 %v551, 23
    %v553 = vsub.s32 %v552, 127
    %v554 = vand.u32 2147483647, %v413
    %v555 = vand.u32 %v554, 8388607
    %v556 = vor.u32 %v555, 8388608
    %v557 = vsub.s32 0, %v556
    %v558 = vadd.s32 %v553, 1
    %vm559 = vcmp.gt.s32.totalorder %v558, 0
    %v560 = vsel %vm559, %v558, 0
    %v561 = vshrl.u32 %v560, 5
    %v562 = vand.u32 %v560, 31
    %v563 = vsub.s32 32, %v562
    %v564 = vshrl.u32 683565275, %v563
    %v565 = vshll.u32 683565275, %v562
    %v566 = vshrl.u32 2475754826, %v563
    %v567 = vor.u32 %v565, %v566
    %v568 = vshll.u32 2475754826, %v562
    %v569 = vshrl.u32 2131351028, %v563
    %v570 = vor.u32 %v568, %v569
    %v571 = vshll.u32 2131351028, %v562
    %v572 = vshrl.u32 2102212464, %v563
    %v573 = vor.u32 %v571, %v572
    %v574 = vshll.u32 2102212464, %v562
    %v575 = vshrl.u32 920167782, %v563
    %v576 = vor.u32 %v574, %v575
    %v577 = vshll.u32 920167782, %v562
    %v578 = vshrl.u32 1326507024, %v563
    %v579 = vor.u32 %v577, %v578
    %vm580 = vcmp.lt.s32.totalorder %v561, 1
    %vm581 = vcmp.lt.s32.totalorder %v561, 2
    %vm582 = vcmp.lt.s32.totalorder %v561, 3
    %vm583 = vcmp.lt.s32.totalorder %v561, 4
    %v584 = vsel %vm580, %v564, %v567
    %v585 = vsel %vm583, %v573, 2102212464
    %v586 = vsel %vm582, %v570, %v585
    %v587 = vsel %vm581, %v584, %v586
    %v588 = vsel %vm580, %v567, %v570
    %v589 = vsel %vm583, %v576, 920167782
    %v590 = vsel %vm582, %v573, %v589
    %v591 = vsel %vm581, %v588, %v590
    %v592 = vsel %vm580, %v570, %v573
    %v593 = vsel %vm583, %v579, 1326507024
    %v594 = vsel %vm582, %v576, %v593
    %v595 = vsel %vm581, %v592, %v594
    %v596 = vshll.u32 %v556, 8
    %v597 = vmul.u32.u64.compose %v596, %v595
    %v598 = vextract.low.u32 %v597
    %v599 = vextract.high.u32 %v597
    %v600 = vmul.u32.u64.compose %v596, %v591
    %v601 = vextract.low.u32 %v600
    %v602 = vextract.high.u32 %v600
    %v603 = vmul.u32 %v596, %v587
    %v604 = vadd.s32 %v599, %v601
    %vm605 = vc.u32 %v599, %v601
    %v606 = vadd.s32 %v602, 1
    %v607 = vsel %vm605, %v606, %v602
    %v608 = vadd.s32 %v603, %v607
    %v609 = vadd.s32 %v608, 536870912
    %v610 = vshrl.u32 %v609, 30
    %v611 = vshll.u32 %v610, 30
    %v612 = vsub.s32 %v608, %v611
    %vm613 = vcmp.lt.s32.totalorder %v612, 0
    %v614 = vsub.s32 0, %v612
    %v615 = vsel %vm613, %v614, %v612
    %v616 = vclz %v615
    %v617 = vsub.s32 %v616, 2
    %vm618 = vcmp.gt.s32.totalorder 0, %v617
    %v619 = vsel %vm618, 0, %v617
    %v620 = vsub.s32 32, %v619
    %v621 = vshll.u32 %v612, %v619
    %v622 = vshrl.u32 %v604, %v620
    %v623 = vor.u32 %v621, %v622
    %v624 = vsub.s32 4294967266, %v619
    %v625 = vadd.s32 %v624, 127
    %v626 = vshll.u32 %v625, 23
    %v627 = vor.u32 4788187, %v626
    %v628 = vand.u32 2147483647, %v627
    %v630 = vcvt.s32.f32 %v623
    %v631 = vmul.f32 %v630, %v628
    %v632 = vxor.u32 %v631, 2147483648
    %v633 = vsel %vm550, %v632, %v631
    %v634 = vsub.s32 4, %v610
    %v635 = vsel %vm550, %v634, %v610
    %v636 = vsel %vm549, %v413, %v633
    %v637 = vsel %vm549, 0, %v635
    %v638 = vcosq.f32.pop %v636
    %v639 = vsinq.f32.pop %v636
    %vm640 = vweird.f32 %v413
    %v641 = vadd.s32 %v637, 3
    %v642 = vand.u32 %v641, 3
    %vm643 = vcmp.lt.s32.totalorder %v642, 2
    %vm644 = vcmp.eq.s32.totalorder %v642, 0
    %v645 = vxor.u32 %v639, 2147483648
    %v646 = vsel %vm644, %v638, %v645
    %vm647 = vcmp.eq.s32.totalorder %v642, 2
    %v648 = vxor.u32 %v638, 2147483648
    %v649 = vsel %vm647, %v648, %v639
    %v650 = vsel %vm643, %v646, %v649
    %v651 = vsel %vm640, nan, %v650
    %v652 = vand.u32 2147483647, %v414
    %vm653 = vcmp.le.f32.partialorder %v652, 0.7853982
    %vm654 = vcmp.lt.s32.totalorder %v414, 0
    %v655 = vand.u32 %v414, 2139095040
    %v656 = vshrl.u32 %v655, 23
    %v657 = vsub.s32 %v656, 127
    %v658 = vand.u32 2147483647, %v414
    %v659 = vand.u32 %v658, 8388607
    %v660 = vor.u32 %v659, 8388608
    %v661 = vsub.s32 0, %v660
    %v662 = vadd.s32 %v657, 1
    %vm663 = vcmp.gt.s32.totalorder %v662, 0
    %v664 = vsel %vm663, %v662, 0
    %v665 = vshrl.u32 %v664, 5
    %v666 = vand.u32 %v664, 31
    %v667 = vsub.s32 32, %v666
    %v668 = vshrl.u32 683565275, %v667
    %v669 = vshll.u32 683565275, %v666
    %v670 = vshrl.u32 2475754826, %v667
    %v671 = vor.u32 %v669, %v670
    %v672 = vshll.u32 2475754826, %v666
    %v673 = vshrl.u32 2131351028, %v667
    %v674 = vor.u32 %v672, %v673
    %v675 = vshll.u32 2131351028, %v666
    %v676 = vshrl.u32 2102212464, %v667
    %v677 = vor.u32 %v675, %v676
    %v678 = vshll.u32 2102212464, %v666
    %v679 = vshrl.u32 920167782, %v667
    %v680 = vor.u32 %v678, %v679
    %v681 = vshll.u32 920167782, %v666
    %v682 = vshrl.u32 1326507024, %v667
    %v683 = vor.u32 %v681, %v682
    %vm684 = vcmp.lt.s32.totalorder %v665, 1
    %vm685 = vcmp.lt.s32.totalorder %v665, 2
    %vm686 = vcmp.lt.s32.totalorder %v665, 3
    %vm687 = vcmp.lt.s32.totalorder %v665, 4
    %v688 = vsel %vm684, %v668, %v671
    %v689 = vsel %vm687, %v677, 2102212464
    %v690 = vsel %vm686, %v674, %v689
    %v691 = vsel %vm685, %v688, %v690
    %v692 = vsel %vm684, %v671, %v674
    %v693 = vsel %vm687, %v680, 920167782
    %v694 = vsel %vm686, %v677, %v693
    %v695 = vsel %vm685, %v692, %v694
    %v696 = vsel %vm684, %v674, %v677
    %v697 = vsel %vm687, %v683, 1326507024
    %v698 = vsel %vm686, %v680, %v697
    %v699 = vsel %vm685, %v696, %v698
    %v700 = vshll.u32 %v660, 8
    %v701 = vmul.u32.u64.compose %v700, %v699
    %v702 = vextract.low.u32 %v701
    %v703 = vextract.high.u32 %v701
    %v704 = vmul.u32.u64.compose %v700, %v695
    %v705 = vextract.low.u32 %v704
    %v706 = vextract.high.u32 %v704
    %v707 = vmul.u32 %v700, %v691
    %v708 = vadd.s32 %v703, %v705
    %vm709 = vc.u32 %v703, %v705
    %v710 = vadd.s32 %v706, 1
    %v711 = vsel %vm709, %v710, %v706
    %v712 = vadd.s32 %v707, %v711
    %v713 = vadd.s32 %v712, 536870912
    %v714 = vshrl.u32 %v713, 30
    %v715 = vshll.u32 %v714, 30
    %v716 = vsub.s32 %v712, %v715
    %vm717 = vcmp.lt.s32.totalorder %v716, 0
    %v718 = vsub.s32 0, %v716
    %v719 = vsel %vm717, %v718, %v716
    %v720 = vclz %v719
    %v721 = vsub.s32 %v720, 2
    %vm722 = vcmp.gt.s32.totalorder 0, %v721
    %v723 = vsel %vm722, 0, %v721
    %v724 = vsub.s32 32, %v723
    %v725 = vshll.u32 %v716, %v723
    %v726 = vshrl.u32 %v708, %v724
    %v727 = vor.u32 %v725, %v726
    %v728 = vsub.s32 4294967266, %v723
    %v729 = vadd.s32 %v728, 127
    %v730 = vshll.u32 %v729, 23
    %v731 = vor.u32 4788187, %v730
    %v732 = vand.u32 2147483647, %v731
    %v734 = vcvt.s32.f32 %v727
    %v735 = vmul.f32 %v734, %v732
    %v736 = vxor.u32 %v735, 2147483648
    %v737 = vsel %vm654, %v736, %v735
    %v738 = vsub.s32 4, %v714
    %v739 = vsel %vm654, %v738, %v714
    %v740 = vsel %vm653, %v414, %v737
    %v741 = vsel %vm653, 0, %v739
    %v742 = vcosq.f32.pop %v740
    %v743 = vsinq.f32.pop %v740
    %vm744 = vweird.f32 %v414
    %v745 = vadd.s32 %v741, 3
    %v746 = vand.u32 %v745, 3
    %vm747 = vcmp.lt.s32.totalorder %v746, 2
    %vm748 = vcmp.eq.s32.totalorder %v746, 0
    %v749 = vxor.u32 %v743, 2147483648
    %v750 = vsel %vm748, %v742, %v749
    %vm751 = vcmp.eq.s32.totalorder %v746, 2
    %v752 = vxor.u32 %v742, 2147483648
    %v753 = vsel %vm751, %v752, %v743
    %v754 = vsel %vm747, %v750, %v753
    %v755 = vsel %vm744, nan, %v754
    %v756 = vand.u32 2147483647, %v415
    %vm757 = vcmp.le.f32.partialorder %v756, 0.7853982
    %vm758 = vcmp.lt.s32.totalorder %v415, 0
    %v759 = vand.u32 %v415, 2139095040
    %v760 = vshrl.u32 %v759, 23
    %v761 = vsub.s32 %v760, 127
    %v762 = vand.u32 2147483647, %v415
    %v763 = vand.u32 %v762, 8388607
    %v764 = vor.u32 %v763, 8388608
    %v765 = vsub.s32 0, %v764
    %v766 = vadd.s32 %v761, 1
    %vm767 = vcmp.gt.s32.totalorder %v766, 0
    %v768 = vsel %vm767, %v766, 0
    %v769 = vshrl.u32 %v768, 5
    %v770 = vand.u32 %v768, 31
    %v771 = vsub.s32 32, %v770
    %v772 = vshrl.u32 683565275, %v771
    %v773 = vshll.u32 683565275, %v770
    %v774 = vshrl.u32 2475754826, %v771
    %v775 = vor.u32 %v773, %v774
    %v776 = vshll.u32 2475754826, %v770
    %v777 = vshrl.u32 2131351028, %v771
    %v778 = vor.u32 %v776, %v777
    %v779 = vshll.u32 2131351028, %v770
    %v780 = vshrl.u32 2102212464, %v771
    %v781 = vor.u32 %v779, %v780
    %v782 = vshll.u32 2102212464, %v770
    %v783 = vshrl.u32 920167782, %v771
    %v784 = vor.u32 %v782, %v783
    %v785 = vshll.u32 920167782, %v770
    %v786 = vshrl.u32 1326507024, %v771
    %v787 = vor.u32 %v785, %v786
    %vm788 = vcmp.lt.s32.totalorder %v769, 1
    %vm789 = vcmp.lt.s32.totalorder %v769, 2
    %vm790 = vcmp.lt.s32.totalorder %v769, 3
    %vm791 = vcmp.lt.s32.totalorder %v769, 4
    %v792 = vsel %vm788, %v772, %v775
    %v793 = vsel %vm791, %v781, 2102212464
    %v794 = vsel %vm790, %v778, %v793
    %v795 = vsel %vm789, %v792, %v794
    %v796 = vsel %vm788, %v775, %v778
    %v797 = vsel %vm791, %v784, 920167782
    %v798 = vsel %vm790, %v781, %v797
    %v799 = vsel %vm789, %v796, %v798
    %v800 = vsel %vm788, %v778, %v781
    %v801 = vsel %vm791, %v787, 1326507024
    %v802 = vsel %vm790, %v784, %v801
    %v803 = vsel %vm789, %v800, %v802
    %v804 = vshll.u32 %v764, 8
    %v805 = vmul.u32.u64.compose %v804, %v803
    %v806 = vextract.low.u32 %v805
    %v807 = vextract.high.u32 %v805
    %v808 = vmul.u32.u64.compose %v804, %v799
    %v809 = vextract.low.u32 %v808
    %v810 = vextract.high.u32 %v808
    %v811 = vmul.u32 %v804, %v795
    %v812 = vadd.s32 %v807, %v809
    %vm813 = vc.u32 %v807, %v809
    %v814 = vadd.s32 %v810, 1
    %v815 = vsel %vm813, %v814, %v810
    %v816 = vadd.s32 %v811, %v815
    %v817 = vadd.s32 %v816, 536870912
    %v818 = vshrl.u32 %v817, 30
    %v819 = vshll.u32 %v818, 30
    %v820 = vsub.s32 %v816, %v819
    %vm821 = vcmp.lt.s32.totalorder %v820, 0
    %v822 = vsub.s32 0, %v820
    %v823 = vsel %vm821, %v822, %v820
    %v824 = vclz %v823
    %v825 = vsub.s32 %v824, 2
    %vm826 = vcmp.gt.s32.totalorder 0, %v825
    %v827 = vsel %vm826, 0, %v825
    %v828 = vsub.s32 32, %v827
    %v829 = vshll.u32 %v820, %v827
    %v830 = vshrl.u32 %v812, %v828
    %v831 = vor.u32 %v829, %v830
    %v832 = vsub.s32 4294967266, %v827
    %v833 = vadd.s32 %v832, 127
    %v834 = vshll.u32 %v833, 23
    %v835 = vor.u32 4788187, %v834
    %v836 = vand.u32 2147483647, %v835
    %v838 = vcvt.s32.f32 %v831
    %v839 = vmul.f32 %v838, %v836
    %v840 = vxor.u32 %v839, 2147483648
    %v841 = vsel %vm758, %v840, %v839
    %v842 = vsub.s32 4, %v818
    %v843 = vsel %vm758, %v842, %v818
    %v844 = vsel %vm757, %v415, %v841
    %v845 = vsel %vm757, 0, %v843
    %v846 = vcosq.f32.pop %v844
    %v847 = vsinq.f32.pop %v844
    %vm848 = vweird.f32 %v415
    %v849 = vadd.s32 %v845, 3
    %v850 = vand.u32 %v849, 3
    %vm851 = vcmp.lt.s32.totalorder %v850, 2
    %vm852 = vcmp.eq.s32.totalorder %v850, 0
    %v853 = vxor.u32 %v847, 2147483648
    %v854 = vsel %vm852, %v846, %v853
    %vm855 = vcmp.eq.s32.totalorder %v850, 2
    %v856 = vxor.u32 %v846, 2147483648
    %v857 = vsel %vm855, %v856, %v847
    %v858 = vsel %vm851, %v854, %v857
    %v859 = vsel %vm848, nan, %v858
    %v860 = vand.u32 2147483647, %v416
    %vm861 = vcmp.le.f32.partialorder %v860, 0.7853982
    %vm862 = vcmp.lt.s32.totalorder %v416, 0
    %v863 = vand.u32 %v416, 2139095040
    %v864 = vshrl.u32 %v863, 23
    %v865 = vsub.s32 %v864, 127
    %v866 = vand.u32 2147483647, %v416
    %v867 = vand.u32 %v866, 8388607
    %v868 = vor.u32 %v867, 8388608
    %v869 = vsub.s32 0, %v868
    %v870 = vadd.s32 %v865, 1
    %vm871 = vcmp.gt.s32.totalorder %v870, 0
    %v872 = vsel %vm871, %v870, 0
    %v873 = vshrl.u32 %v872, 5
    %v874 = vand.u32 %v872, 31
    %v875 = vsub.s32 32, %v874
    %v876 = vshrl.u32 683565275, %v875
    %v877 = vshll.u32 683565275, %v874
    %v878 = vshrl.u32 2475754826, %v875
    %v879 = vor.u32 %v877, %v878
    %v880 = vshll.u32 2475754826, %v874
    %v881 = vshrl.u32 2131351028, %v875
    %v882 = vor.u32 %v880, %v881
    %v883 = vshll.u32 2131351028, %v874
    %v884 = vshrl.u32 2102212464, %v875
    %v885 = vor.u32 %v883, %v884
    %v886 = vshll.u32 2102212464, %v874
    %v887 = vshrl.u32 920167782, %v875
    %v888 = vor.u32 %v886, %v887
    %v889 = vshll.u32 920167782, %v874
    %v890 = vshrl.u32 1326507024, %v875
    %v891 = vor.u32 %v889, %v890
    %vm892 = vcmp.lt.s32.totalorder %v873, 1
    %vm893 = vcmp.lt.s32.totalorder %v873, 2
    %vm894 = vcmp.lt.s32.totalorder %v873, 3
    %vm895 = vcmp.lt.s32.totalorder %v873, 4
    %v896 = vsel %vm892, %v876, %v879
    %v897 = vsel %vm895, %v885, 2102212464
    %v898 = vsel %vm894, %v882, %v897
    %v899 = vsel %vm893, %v896, %v898
    %v900 = vsel %vm892, %v879, %v882
    %v901 = vsel %vm895, %v888, 920167782
    %v902 = vsel %vm894, %v885, %v901
    %v903 = vsel %vm893, %v900, %v902
    %v904 = vsel %vm892, %v882, %v885
    %v905 = vsel %vm895, %v891, 1326507024
    %v906 = vsel %vm894, %v888, %v905
    %v907 = vsel %vm893, %v904, %v906
    %v908 = vshll.u32 %v868, 8
    %v909 = vmul.u32.u64.compose %v908, %v907
    %v910 = vextract.low.u32 %v909
    %v911 = vextract.high.u32 %v909
    %v912 = vmul.u32.u64.compose %v908, %v903
    %v913 = vextract.low.u32 %v912
    %v914 = vextract.high.u32 %v912
    %v915 = vmul.u32 %v908, %v899
    %v916 = vadd.s32 %v911, %v913
    %vm917 = vc.u32 %v911, %v913
    %v918 = vadd.s32 %v914, 1
    %v919 = vsel %vm917, %v918, %v914
    %v920 = vadd.s32 %v915, %v919
    %v921 = vadd.s32 %v920, 536870912
    %v922 = vshrl.u32 %v921, 30
    %v923 = vshll.u32 %v922, 30
    %v924 = vsub.s32 %v920, %v923
    %vm925 = vcmp.lt.s32.totalorder %v924, 0
    %v926 = vsub.s32 0, %v924
    %v927 = vsel %vm925, %v926, %v924
    %v928 = vclz %v927
    %v929 = vsub.s32 %v928, 2
    %vm930 = vcmp.gt.s32.totalorder 0, %v929
    %v931 = vsel %vm930, 0, %v929
    %v932 = vsub.s32 32, %v931
    %v933 = vshll.u32 %v924, %v931
    %v934 = vshrl.u32 %v916, %v932
    %v935 = vor.u32 %v933, %v934
    %v936 = vsub.s32 4294967266, %v931
    %v937 = vadd.s32 %v936, 127
    %v938 = vshll.u32 %v937, 23
    %v939 = vor.u32 4788187, %v938
    %v940 = vand.u32 2147483647, %v939
    %v942 = vcvt.s32.f32 %v935
    %v943 = vmul.f32 %v942, %v940
    %v944 = vxor.u32 %v943, 2147483648
    %v945 = vsel %vm862, %v944, %v943
    %v946 = vsub.s32 4, %v922
    %v947 = vsel %vm862, %v946, %v922
    %v948 = vsel %vm861, %v416, %v945
    %v949 = vsel %vm861, 0, %v947
    %v950 = vcosq.f32.pop %v948
    %v951 = vsinq.f32.pop %v948
    %vm952 = vweird.f32 %v416
    %v953 = vadd.s32 %v949, 3
    %v954 = vand.u32 %v953, 3
    %vm955 = vcmp.lt.s32.totalorder %v954, 2
    %vm956 = vcmp.eq.s32.totalorder %v954, 0
    %v957 = vxor.u32 %v951, 2147483648
    %v958 = vsel %vm956, %v950, %v957
    %vm959 = vcmp.eq.s32.totalorder %v954, 2
    %v960 = vxor.u32 %v950, 2147483648
    %v961 = vsel %vm959, %v960, %v951
    %v962 = vsel %vm955, %v958, %v961
    %v963 = vsel %vm952, nan, %v962
    %v964 = vand.u32 2147483647, %v417
    %vm965 = vcmp.le.f32.partialorder %v964, 0.7853982
    %vm966 = vcmp.lt.s32.totalorder %v417, 0
    %v967 = vand.u32 %v417, 2139095040
    %v968 = vshrl.u32 %v967, 23
    %v969 = vsub.s32 %v968, 127
    %v970 = vand.u32 2147483647, %v417
    %v971 = vand.u32 %v970, 8388607
    %v972 = vor.u32 %v971, 8388608
    %v973 = vsub.s32 0, %v972
    %v974 = vadd.s32 %v969, 1
    %vm975 = vcmp.gt.s32.totalorder %v974, 0
    %v976 = vsel %vm975, %v974, 0
    %v977 = vshrl.u32 %v976, 5
    %v978 = vand.u32 %v976, 31
    %v979 = vsub.s32 32, %v978
    %v980 = vshrl.u32 683565275, %v979
    %v981 = vshll.u32 683565275, %v978
    %v982 = vshrl.u32 2475754826, %v979
    %v983 = vor.u32 %v981, %v982
    %v984 = vshll.u32 2475754826, %v978
    %v985 = vshrl.u32 2131351028, %v979
    %v986 = vor.u32 %v984, %v985
    %v987 = vshll.u32 2131351028, %v978
    %v988 = vshrl.u32 2102212464, %v979
    %v989 = vor.u32 %v987, %v988
    %v990 = vshll.u32 2102212464, %v978
    %v991 = vshrl.u32 920167782, %v979
    %v992 = vor.u32 %v990, %v991
    %v993 = vshll.u32 920167782, %v978
    %v994 = vshrl.u32 1326507024, %v979
    %v995 = vor.u32 %v993, %v994
    %vm996 = vcmp.lt.s32.totalorder %v977, 1
    %vm997 = vcmp.lt.s32.totalorder %v977, 2
    %vm998 = vcmp.lt.s32.totalorder %v977, 3
    %vm999 = vcmp.lt.s32.totalorder %v977, 4
    %v1000 = vsel %vm996, %v980, %v983
    %v1001 = vsel %vm999, %v989, 2102212464
    %v1002 = vsel %vm998, %v986, %v1001
    %v1003 = vsel %vm997, %v1000, %v1002
    %v1004 = vsel %vm996, %v983, %v986
    %v1005 = vsel %vm999, %v992, 920167782
    %v1006 = vsel %vm998, %v989, %v1005
    %v1007 = vsel %vm997, %v1004, %v1006
    %v1008 = vsel %vm996, %v986, %v989
    %v1009 = vsel %vm999, %v995, 1326507024
    %v1010 = vsel %vm998, %v992, %v1009
    %v1011 = vsel %vm997, %v1008, %v1010
    %v1012 = vshll.u32 %v972, 8
    %v1013 = vmul.u32.u64.compose %v1012, %v1011
    %v1014 = vextract.low.u32 %v1013
    %v1015 = vextract.high.u32 %v1013
    %v1016 = vmul.u32.u64.compose %v1012, %v1007
    %v1017 = vextract.low.u32 %v1016
    %v1018 = vextract.high.u32 %v1016
    %v1019 = vmul.u32 %v1012, %v1003
    %v1020 = vadd.s32 %v1015, %v1017
    %vm1021 = vc.u32 %v1015, %v1017
    %v1022 = vadd.s32 %v1018, 1
    %v1023 = vsel %vm1021, %v1022, %v1018
    %v1024 = vadd.s32 %v1019, %v1023
    %v1025 = vadd.s32 %v1024, 536870912
    %v1026 = vshrl.u32 %v1025, 30
    %v1027 = vshll.u32 %v1026, 30
    %v1028 = vsub.s32 %v1024, %v1027
    %vm1029 = vcmp.lt.s32.totalorder %v1028, 0
    %v1030 = vsub.s32 0, %v1028
    %v1031 = vsel %vm1029, %v1030, %v1028
    %v1032 = vclz %v1031
    %v1033 = vsub.s32 %v1032, 2
    %vm1034 = vcmp.gt.s32.totalorder 0, %v1033
    %v1035 = vsel %vm1034, 0, %v1033
    %v1036 = vsub.s32 32, %v1035
    %v1037 = vshll.u32 %v1028, %v1035
    %v1038 = vshrl.u32 %v1020, %v1036
    %v1039 = vor.u32 %v1037, %v1038
    %v1040 = vsub.s32 4294967266, %v1035
    %v1041 = vadd.s32 %v1040, 127
    %v1042 = vshll.u32 %v1041, 23
    %v1043 = vor.u32 4788187, %v1042
    %v1044 = vand.u32 2147483647, %v1043
    %v1046 = vcvt.s32.f32 %v1039
    %v1047 = vmul.f32 %v1046, %v1044
    %v1048 = vxor.u32 %v1047, 2147483648
    %v1049 = vsel %vm966, %v1048, %v1047
    %v1050 = vsub.s32 4, %v1026
    %v1051 = vsel %vm966, %v1050, %v1026
    %v1052 = vsel %vm965, %v417, %v1049
    %v1053 = vsel %vm965, 0, %v1051
    %v1054 = vcosq.f32.pop %v1052
    %v1055 = vsinq.f32.pop %v1052
    %vm1056 = vweird.f32 %v417
    %v1057 = vadd.s32 %v1053, 3
    %v1058 = vand.u32 %v1057, 3
    %vm1059 = vcmp.lt.s32.totalorder %v1058, 2
    %vm1060 = vcmp.eq.s32.totalorder %v1058, 0
    %v1061 = vxor.u32 %v1055, 2147483648
    %v1062 = vsel %vm1060, %v1054, %v1061
    %vm1063 = vcmp.eq.s32.totalorder %v1058, 2
    %v1064 = vxor.u32 %v1054, 2147483648
    %v1065 = vsel %vm1063, %v1064, %v1055
    %v1066 = vsel %vm1059, %v1062, %v1065
    %v1067 = vsel %vm1056, nan, %v1066
    %v1068 = vand.u32 2147483647, %v418
    %vm1069 = vcmp.le.f32.partialorder %v1068, 0.7853982
    %vm1070 = vcmp.lt.s32.totalorder %v418, 0
    %v1071 = vand.u32 %v418, 2139095040
    %v1072 = vshrl.u32 %v1071, 23
    %v1073 = vsub.s32 %v1072, 127
    %v1074 = vand.u32 2147483647, %v418
    %v1075 = vand.u32 %v1074, 8388607
    %v1076 = vor.u32 %v1075, 8388608
    %v1077 = vsub.s32 0, %v1076
    %v1078 = vadd.s32 %v1073, 1
    %vm1079 = vcmp.gt.s32.totalorder %v1078, 0
    %v1080 = vsel %vm1079, %v1078, 0
    %v1081 = vshrl.u32 %v1080, 5
    %v1082 = vand.u32 %v1080, 31
    %v1083 = vsub.s32 32, %v1082
    %v1084 = vshrl.u32 683565275, %v1083
    %v1085 = vshll.u32 683565275, %v1082
    %v1086 = vshrl.u32 2475754826, %v1083
    %v1087 = vor.u32 %v1085, %v1086
    %v1088 = vshll.u32 2475754826, %v1082
    %v1089 = vshrl.u32 2131351028, %v1083
    %v1090 = vor.u32 %v1088, %v1089
    %v1091 = vshll.u32 2131351028, %v1082
    %v1092 = vshrl.u32 2102212464, %v1083
    %v1093 = vor.u32 %v1091, %v1092
    %v1094 = vshll.u32 2102212464, %v1082
    %v1095 = vshrl.u32 920167782, %v1083
    %v1096 = vor.u32 %v1094, %v1095
    %v1097 = vshll.u32 920167782, %v1082
    %v1098 = vshrl.u32 1326507024, %v1083
    %v1099 = vor.u32 %v1097, %v1098
    %vm1100 = vcmp.lt.s32.totalorder %v1081, 1
    %vm1101 = vcmp.lt.s32.totalorder %v1081, 2
    %vm1102 = vcmp.lt.s32.totalorder %v1081, 3
    %vm1103 = vcmp.lt.s32.totalorder %v1081, 4
    %v1104 = vsel %vm1100, %v1084, %v1087
    %v1105 = vsel %vm1103, %v1093, 2102212464
    %v1106 = vsel %vm1102, %v1090, %v1105
    %v1107 = vsel %vm1101, %v1104, %v1106
    %v1108 = vsel %vm1100, %v1087, %v1090
    %v1109 = vsel %vm1103, %v1096, 920167782
    %v1110 = vsel %vm1102, %v1093, %v1109
    %v1111 = vsel %vm1101, %v1108, %v1110
    %v1112 = vsel %vm1100, %v1090, %v1093
    %v1113 = vsel %vm1103, %v1099, 1326507024
    %v1114 = vsel %vm1102, %v1096, %v1113
    %v1115 = vsel %vm1101, %v1112, %v1114
    %v1116 = vshll.u32 %v1076, 8
    %v1117 = vmul.u32.u64.compose %v1116, %v1115
    %v1118 = vextract.low.u32 %v1117
    %v1119 = vextract.high.u32 %v1117
    %v1120 = vmul.u32.u64.compose %v1116, %v1111
    %v1121 = vextract.low.u32 %v1120
    %v1122 = vextract.high.u32 %v1120
    %v1123 = vmul.u32 %v1116, %v1107
    %v1124 = vadd.s32 %v1119, %v1121
    %vm1125 = vc.u32 %v1119, %v1121
    %v1126 = vadd.s32 %v1122, 1
    %v1127 = vsel %vm1125, %v1126, %v1122
    %v1128 = vadd.s32 %v1123, %v1127
    %v1129 = vadd.s32 %v1128, 536870912
    %v1130 = vshrl.u32 %v1129, 30
    %v1131 = vshll.u32 %v1130, 30
    %v1132 = vsub.s32 %v1128, %v1131
    %vm1133 = vcmp.lt.s32.totalorder %v1132, 0
    %v1134 = vsub.s32 0, %v1132
    %v1135 = vsel %vm1133, %v1134, %v1132
    %v1136 = vclz %v1135
    %v1137 = vsub.s32 %v1136, 2
    %vm1138 = vcmp.gt.s32.totalorder 0, %v1137
    %v1139 = vsel %vm1138, 0, %v1137
    %v1140 = vsub.s32 32, %v1139
    %v1141 = vshll.u32 %v1132, %v1139
    %v1142 = vshrl.u32 %v1124, %v1140
    %v1143 = vor.u32 %v1141, %v1142
    %v1144 = vsub.s32 4294967266, %v1139
    %v1145 = vadd.s32 %v1144, 127
    %v1146 = vshll.u32 %v1145, 23
    %v1147 = vor.u32 4788187, %v1146
    %v1148 = vand.u32 2147483647, %v1147
    %v1150 = vcvt.s32.f32 %v1143
    %v1151 = vmul.f32 %v1150, %v1148
    %v1152 = vxor.u32 %v1151, 2147483648
    %v1153 = vsel %vm1070, %v1152, %v1151
    %v1154 = vsub.s32 4, %v1130
    %v1155 = vsel %vm1070, %v1154, %v1130
    %v1156 = vsel %vm1069, %v418, %v1153
    %v1157 = vsel %vm1069, 0, %v1155
    %v1158 = vcosq.f32.pop %v1156
    %v1159 = vsinq.f32.pop %v1156
    %vm1160 = vweird.f32 %v418
    %v1161 = vadd.s32 %v1157, 3
    %v1162 = vand.u32 %v1161, 3
    %vm1163 = vcmp.lt.s32.totalorder %v1162, 2
    %vm1164 = vcmp.eq.s32.totalorder %v1162, 0
    %v1165 = vxor.u32 %v1159, 2147483648
    %v1166 = vsel %vm1164, %v1158, %v1165
    %vm1167 = vcmp.eq.s32.totalorder %v1162, 2
    %v1168 = vxor.u32 %v1158, 2147483648
    %v1169 = vsel %vm1167, %v1168, %v1159
    %v1170 = vsel %vm1163, %v1166, %v1169
    %v1171 = vsel %vm1160, nan, %v1170
    %v1172 = vand.u32 2147483647, %v419
    %vm1173 = vcmp.le.f32.partialorder %v1172, 0.7853982
    %vm1174 = vcmp.lt.s32.totalorder %v419, 0
    %v1175 = vand.u32 %v419, 2139095040
    %v1176 = vshrl.u32 %v1175, 23
    %v1177 = vsub.s32 %v1176, 127
    %v1178 = vand.u32 2147483647, %v419
    %v1179 = vand.u32 %v1178, 8388607
    %v1180 = vor.u32 %v1179, 8388608
    %v1181 = vsub.s32 0, %v1180
    %v1182 = vadd.s32 %v1177, 1
    %vm1183 = vcmp.gt.s32.totalorder %v1182, 0
    %v1184 = vsel %vm1183, %v1182, 0
    %v1185 = vshrl.u32 %v1184, 5
    %v1186 = vand.u32 %v1184, 31
    %v1187 = vsub.s32 32, %v1186
    %v1188 = vshrl.u32 683565275, %v1187
    %v1189 = vshll.u32 683565275, %v1186
    %v1190 = vshrl.u32 2475754826, %v1187
    %v1191 = vor.u32 %v1189, %v1190
    %v1192 = vshll.u32 2475754826, %v1186
    %v1193 = vshrl.u32 2131351028, %v1187
    %v1194 = vor.u32 %v1192, %v1193
    %v1195 = vshll.u32 2131351028, %v1186
    %v1196 = vshrl.u32 2102212464, %v1187
    %v1197 = vor.u32 %v1195, %v1196
    %v1198 = vshll.u32 2102212464, %v1186
    %v1199 = vshrl.u32 920167782, %v1187
    %v1200 = vor.u32 %v1198, %v1199
    %v1201 = vshll.u32 920167782, %v1186
    %v1202 = vshrl.u32 1326507024, %v1187
    %v1203 = vor.u32 %v1201, %v1202
    %vm1204 = vcmp.lt.s32.totalorder %v1185, 1
    %vm1205 = vcmp.lt.s32.totalorder %v1185, 2
    %vm1206 = vcmp.lt.s32.totalorder %v1185, 3
    %vm1207 = vcmp.lt.s32.totalorder %v1185, 4
    %v1208 = vsel %vm1204, %v1188, %v1191
    %v1209 = vsel %vm1207, %v1197, 2102212464
    %v1210 = vsel %vm1206, %v1194, %v1209
    %v1211 = vsel %vm1205, %v1208, %v1210
    %v1212 = vsel %vm1204, %v1191, %v1194
    %v1213 = vsel %vm1207, %v1200, 920167782
    %v1214 = vsel %vm1206, %v1197, %v1213
    %v1215 = vsel %vm1205, %v1212, %v1214
    %v1216 = vsel %vm1204, %v1194, %v1197
    %v1217 = vsel %vm1207, %v1203, 1326507024
    %v1218 = vsel %vm1206, %v1200, %v1217
    %v1219 = vsel %vm1205, %v1216, %v1218
    %v1220 = vshll.u32 %v1180, 8
    %v1221 = vmul.u32.u64.compose %v1220, %v1219
    %v1222 = vextract.low.u32 %v1221
    %v1223 = vextract.high.u32 %v1221
    %v1224 = vmul.u32.u64.compose %v1220, %v1215
    %v1225 = vextract.low.u32 %v1224
    %v1226 = vextract.high.u32 %v1224
    %v1227 = vmul.u32 %v1220, %v1211
    %v1228 = vadd.s32 %v1223, %v1225
    %vm1229 = vc.u32 %v1223, %v1225
    %v1230 = vadd.s32 %v1226, 1
    %v1231 = vsel %vm1229, %v1230, %v1226
    %v1232 = vadd.s32 %v1227, %v1231
    %v1233 = vadd.s32 %v1232, 536870912
    %v1234 = vshrl.u32 %v1233, 30
    %v1235 = vshll.u32 %v1234, 30
    %v1236 = vsub.s32 %v1232, %v1235
    %vm1237 = vcmp.lt.s32.totalorder %v1236, 0
    %v1238 = vsub.s32 0, %v1236
    %v1239 = vsel %vm1237, %v1238, %v1236
    %v1240 = vclz %v1239
    %v1241 = vsub.s32 %v1240, 2
    %vm1242 = vcmp.gt.s32.totalorder 0, %v1241
    %v1243 = vsel %vm1242, 0, %v1241
    %v1244 = vsub.s32 32, %v1243
    %v1245 = vshll.u32 %v1236, %v1243
    %v1246 = vshrl.u32 %v1228, %v1244
    %v1247 = vor.u32 %v1245, %v1246
    %v1248 = vsub.s32 4294967266, %v1243
    %v1249 = vadd.s32 %v1248, 127
    %v1250 = vshll.u32 %v1249, 23
    %v1251 = vor.u32 4788187, %v1250
    %v1252 = vand.u32 2147483647, %v1251
    %v1254 = vcvt.s32.f32 %v1247
    %v1255 = vmul.f32 %v1254, %v1252
    %v1256 = vxor.u32 %v1255, 2147483648
    %v1257 = vsel %vm1174, %v1256, %v1255
    %v1258 = vsub.s32 4, %v1234
    %v1259 = vsel %vm1174, %v1258, %v1234
    %v1260 = vsel %vm1173, %v419, %v1257
    %v1261 = vsel %vm1173, 0, %v1259
    %v1262 = vcosq.f32.pop %v1260
    %v1263 = vsinq.f32.pop %v1260
    %vm1264 = vweird.f32 %v419
    %v1265 = vadd.s32 %v1261, 3
    %v1266 = vand.u32 %v1265, 3
    %vm1267 = vcmp.lt.s32.totalorder %v1266, 2
    %vm1268 = vcmp.eq.s32.totalorder %v1266, 0
    %v1269 = vxor.u32 %v1263, 2147483648
    %v1270 = vsel %vm1268, %v1262, %v1269
    %vm1271 = vcmp.eq.s32.totalorder %v1266, 2
    %v1272 = vxor.u32 %v1262, 2147483648
    %v1273 = vsel %vm1271, %v1272, %v1263
    %v1274 = vsel %vm1267, %v1270, %v1273
    %v1275 = vsel %vm1264, nan, %v1274
    %v1276 = vand.u32 2147483647, %v420
    %vm1277 = vcmp.le.f32.partialorder %v1276, 0.7853982
    %vm1278 = vcmp.lt.s32.totalorder %v420, 0
    %v1279 = vand.u32 %v420, 2139095040
    %v1280 = vshrl.u32 %v1279, 23
    %v1281 = vsub.s32 %v1280, 127
    %v1282 = vand.u32 2147483647, %v420
    %v1283 = vand.u32 %v1282, 8388607
    %v1284 = vor.u32 %v1283, 8388608
    %v1285 = vsub.s32 0, %v1284
    %v1286 = vadd.s32 %v1281, 1
    %vm1287 = vcmp.gt.s32.totalorder %v1286, 0
    %v1288 = vsel %vm1287, %v1286, 0
    %v1289 = vshrl.u32 %v1288, 5
    %v1290 = vand.u32 %v1288, 31
    %v1291 = vsub.s32 32, %v1290
    %v1292 = vshrl.u32 683565275, %v1291
    %v1293 = vshll.u32 683565275, %v1290
    %v1294 = vshrl.u32 2475754826, %v1291
    %v1295 = vor.u32 %v1293, %v1294
    %v1296 = vshll.u32 2475754826, %v1290
    %v1297 = vshrl.u32 2131351028, %v1291
    %v1298 = vor.u32 %v1296, %v1297
    %v1299 = vshll.u32 2131351028, %v1290
    %v1300 = vshrl.u32 2102212464, %v1291
    %v1301 = vor.u32 %v1299, %v1300
    %v1302 = vshll.u32 2102212464, %v1290
    %v1303 = vshrl.u32 920167782, %v1291
    %v1304 = vor.u32 %v1302, %v1303
    %v1305 = vshll.u32 920167782, %v1290
    %v1306 = vshrl.u32 1326507024, %v1291
    %v1307 = vor.u32 %v1305, %v1306
    %vm1308 = vcmp.lt.s32.totalorder %v1289, 1
    %vm1309 = vcmp.lt.s32.totalorder %v1289, 2
    %vm1310 = vcmp.lt.s32.totalorder %v1289, 3
    %vm1311 = vcmp.lt.s32.totalorder %v1289, 4
    %v1312 = vsel %vm1308, %v1292, %v1295
    %v1313 = vsel %vm1311, %v1301, 2102212464
    %v1314 = vsel %vm1310, %v1298, %v1313
    %v1315 = vsel %vm1309, %v1312, %v1314
    %v1316 = vsel %vm1308, %v1295, %v1298
    %v1317 = vsel %vm1311, %v1304, 920167782
    %v1318 = vsel %vm1310, %v1301, %v1317
    %v1319 = vsel %vm1309, %v1316, %v1318
    %v1320 = vsel %vm1308, %v1298, %v1301
    %v1321 = vsel %vm1311, %v1307, 1326507024
    %v1322 = vsel %vm1310, %v1304, %v1321
    %v1323 = vsel %vm1309, %v1320, %v1322
    %v1324 = vshll.u32 %v1284, 8
    %v1325 = vmul.u32.u64.compose %v1324, %v1323
    %v1326 = vextract.low.u32 %v1325
    %v1327 = vextract.high.u32 %v1325
    %v1328 = vmul.u32.u64.compose %v1324, %v1319
    %v1329 = vextract.low.u32 %v1328
    %v1330 = vextract.high.u32 %v1328
    %v1331 = vmul.u32 %v1324, %v1315
    %v1332 = vadd.s32 %v1327, %v1329
    %vm1333 = vc.u32 %v1327, %v1329
    %v1334 = vadd.s32 %v1330, 1
    %v1335 = vsel %vm1333, %v1334, %v1330
    %v1336 = vadd.s32 %v1331, %v1335
    %v1337 = vadd.s32 %v1336, 536870912
    %v1338 = vshrl.u32 %v1337, 30
    %v1339 = vshll.u32 %v1338, 30
    %v1340 = vsub.s32 %v1336, %v1339
    %vm1341 = vcmp.lt.s32.totalorder %v1340, 0
    %v1342 = vsub.s32 0, %v1340
    %v1343 = vsel %vm1341, %v1342, %v1340
    %v1344 = vclz %v1343
    %v1345 = vsub.s32 %v1344, 2
    %vm1346 = vcmp.gt.s32.totalorder 0, %v1345
    %v1347 = vsel %vm1346, 0, %v1345
    %v1348 = vsub.s32 32, %v1347
    %v1349 = vshll.u32 %v1340, %v1347
    %v1350 = vshrl.u32 %v1332, %v1348
    %v1351 = vor.u32 %v1349, %v1350
    %v1352 = vsub.s32 4294967266, %v1347
    %v1353 = vadd.s32 %v1352, 127
    %v1354 = vshll.u32 %v1353, 23
    %v1355 = vor.u32 4788187, %v1354
    %v1356 = vand.u32 2147483647, %v1355
    %v1358 = vcvt.s32.f32 %v1351
    %v1359 = vmul.f32 %v1358, %v1356
    %v1360 = vxor.u32 %v1359, 2147483648
    %v1361 = vsel %vm1278, %v1360, %v1359
    %v1362 = vsub.s32 4, %v1338
    %v1363 = vsel %vm1278, %v1362, %v1338
    %v1364 = vsel %vm1277, %v420, %v1361
    %v1365 = vsel %vm1277, 0, %v1363
    %v1366 = vcosq.f32.pop %v1364
    %v1367 = vsinq.f32.pop %v1364
    %vm1368 = vweird.f32 %v420
    %v1369 = vadd.s32 %v1365, 3
    %v1370 = vand.u32 %v1369, 3
    %vm1371 = vcmp.lt.s32.totalorder %v1370, 2
    %vm1372 = vcmp.eq.s32.totalorder %v1370, 0
    %v1373 = vxor.u32 %v1367, 2147483648
    %v1374 = vsel %vm1372, %v1366, %v1373
    %vm1375 = vcmp.eq.s32.totalorder %v1370, 2
    %v1376 = vxor.u32 %v1366, 2147483648
    %v1377 = vsel %vm1375, %v1376, %v1367
    %v1378 = vsel %vm1371, %v1374, %v1377
    %v1379 = vsel %vm1368, nan, %v1378
    %v1380 = vand.u32 2147483647, %v421
    %vm1381 = vcmp.le.f32.partialorder %v1380, 0.7853982
    %vm1382 = vcmp.lt.s32.totalorder %v421, 0
    %v1383 = vand.u32 %v421, 2139095040
    %v1384 = vshrl.u32 %v1383, 23
    %v1385 = vsub.s32 %v1384, 127
    %v1386 = vand.u32 2147483647, %v421
    %v1387 = vand.u32 %v1386, 8388607
    %v1388 = vor.u32 %v1387, 8388608
    %v1389 = vsub.s32 0, %v1388
    %v1390 = vadd.s32 %v1385, 1
    %vm1391 = vcmp.gt.s32.totalorder %v1390, 0
    %v1392 = vsel %vm1391, %v1390, 0
    %v1393 = vshrl.u32 %v1392, 5
    %v1394 = vand.u32 %v1392, 31
    %v1395 = vsub.s32 32, %v1394
    %v1396 = vshrl.u32 683565275, %v1395
    %v1397 = vshll.u32 683565275, %v1394
    %v1398 = vshrl.u32 2475754826, %v1395
    %v1399 = vor.u32 %v1397, %v1398
    %v1400 = vshll.u32 2475754826, %v1394
    %v1401 = vshrl.u32 2131351028, %v1395
    %v1402 = vor.u32 %v1400, %v1401
    %v1403 = vshll.u32 2131351028, %v1394
    %v1404 = vshrl.u32 2102212464, %v1395
    %v1405 = vor.u32 %v1403, %v1404
    %v1406 = vshll.u32 2102212464, %v1394
    %v1407 = vshrl.u32 920167782, %v1395
    %v1408 = vor.u32 %v1406, %v1407
    %v1409 = vshll.u32 920167782, %v1394
    %v1410 = vshrl.u32 1326507024, %v1395
    %v1411 = vor.u32 %v1409, %v1410
    %vm1412 = vcmp.lt.s32.totalorder %v1393, 1
    %vm1413 = vcmp.lt.s32.totalorder %v1393, 2
    %vm1414 = vcmp.lt.s32.totalorder %v1393, 3
    %vm1415 = vcmp.lt.s32.totalorder %v1393, 4
    %v1416 = vsel %vm1412, %v1396, %v1399
    %v1417 = vsel %vm1415, %v1405, 2102212464
    %v1418 = vsel %vm1414, %v1402, %v1417
    %v1419 = vsel %vm1413, %v1416, %v1418
    %v1420 = vsel %vm1412, %v1399, %v1402
    %v1421 = vsel %vm1415, %v1408, 920167782
    %v1422 = vsel %vm1414, %v1405, %v1421
    %v1423 = vsel %vm1413, %v1420, %v1422
    %v1424 = vsel %vm1412, %v1402, %v1405
    %v1425 = vsel %vm1415, %v1411, 1326507024
    %v1426 = vsel %vm1414, %v1408, %v1425
    %v1427 = vsel %vm1413, %v1424, %v1426
    %v1428 = vshll.u32 %v1388, 8
    %v1429 = vmul.u32.u64.compose %v1428, %v1427
    %v1430 = vextract.low.u32 %v1429
    %v1431 = vextract.high.u32 %v1429
    %v1432 = vmul.u32.u64.compose %v1428, %v1423
    %v1433 = vextract.low.u32 %v1432
    %v1434 = vextract.high.u32 %v1432
    %v1435 = vmul.u32 %v1428, %v1419
    %v1436 = vadd.s32 %v1431, %v1433
    %vm1437 = vc.u32 %v1431, %v1433
    %v1438 = vadd.s32 %v1434, 1
    %v1439 = vsel %vm1437, %v1438, %v1434
    %v1440 = vadd.s32 %v1435, %v1439
    %v1441 = vadd.s32 %v1440, 536870912
    %v1442 = vshrl.u32 %v1441, 30
    %v1443 = vshll.u32 %v1442, 30
    %v1444 = vsub.s32 %v1440, %v1443
    %vm1445 = vcmp.lt.s32.totalorder %v1444, 0
    %v1446 = vsub.s32 0, %v1444
    %v1447 = vsel %vm1445, %v1446, %v1444
    %v1448 = vclz %v1447
    %v1449 = vsub.s32 %v1448, 2
    %vm1450 = vcmp.gt.s32.totalorder 0, %v1449
    %v1451 = vsel %vm1450, 0, %v1449
    %v1452 = vsub.s32 32, %v1451
    %v1453 = vshll.u32 %v1444, %v1451
    %v1454 = vshrl.u32 %v1436, %v1452
    %v1455 = vor.u32 %v1453, %v1454
    %v1456 = vsub.s32 4294967266, %v1451
    %v1457 = vadd.s32 %v1456, 127
    %v1458 = vshll.u32 %v1457, 23
    %v1459 = vor.u32 4788187, %v1458
    %v1460 = vand.u32 2147483647, %v1459
    %v1462 = vcvt.s32.f32 %v1455
    %v1463 = vmul.f32 %v1462, %v1460
    %v1464 = vxor.u32 %v1463, 2147483648
    %v1465 = vsel %vm1382, %v1464, %v1463
    %v1466 = vsub.s32 4, %v1442
    %v1467 = vsel %vm1382, %v1466, %v1442
    %v1468 = vsel %vm1381, %v421, %v1465
    %v1469 = vsel %vm1381, 0, %v1467
    %v1470 = vcosq.f32.pop %v1468
    %v1471 = vsinq.f32.pop %v1468
    %vm1472 = vweird.f32 %v421
    %v1473 = vadd.s32 %v1469, 3
    %v1474 = vand.u32 %v1473, 3
    %vm1475 = vcmp.lt.s32.totalorder %v1474, 2
    %vm1476 = vcmp.eq.s32.totalorder %v1474, 0
    %v1477 = vxor.u32 %v1471, 2147483648
    %v1478 = vsel %vm1476, %v1470, %v1477
    %vm1479 = vcmp.eq.s32.totalorder %v1474, 2
    %v1480 = vxor.u32 %v1470, 2147483648
    %v1481 = vsel %vm1479, %v1480, %v1471
    %v1482 = vsel %vm1475, %v1478, %v1481
    %v1483 = vsel %vm1472, nan, %v1482
    %v1484 = vand.u32 2147483647, %v422
    %vm1485 = vcmp.le.f32.partialorder %v1484, 0.7853982
    %vm1486 = vcmp.lt.s32.totalorder %v422, 0
    %v1487 = vand.u32 %v422, 2139095040
    %v1488 = vshrl.u32 %v1487, 23
    %v1489 = vsub.s32 %v1488, 127
    %v1490 = vand.u32 2147483647, %v422
    %v1491 = vand.u32 %v1490, 8388607
    %v1492 = vor.u32 %v1491, 8388608
    %v1493 = vsub.s32 0, %v1492
    %v1494 = vadd.s32 %v1489, 1
    %vm1495 = vcmp.gt.s32.totalorder %v1494, 0
    %v1496 = vsel %vm1495, %v1494, 0
    %v1497 = vshrl.u32 %v1496, 5
    %v1498 = vand.u32 %v1496, 31
    %v1499 = vsub.s32 32, %v1498
    %v1500 = vshrl.u32 683565275, %v1499
    %v1501 = vshll.u32 683565275, %v1498
    %v1502 = vshrl.u32 2475754826, %v1499
    %v1503 = vor.u32 %v1501, %v1502
    %v1504 = vshll.u32 2475754826, %v1498
    %v1505 = vshrl.u32 2131351028, %v1499
    %v1506 = vor.u32 %v1504, %v1505
    %v1507 = vshll.u32 2131351028, %v1498
    %v1508 = vshrl.u32 2102212464, %v1499
    %v1509 = vor.u32 %v1507, %v1508
    %v1510 = vshll.u32 2102212464, %v1498
    %v1511 = vshrl.u32 920167782, %v1499
    %v1512 = vor.u32 %v1510, %v1511
    %v1513 = vshll.u32 920167782, %v1498
    %v1514 = vshrl.u32 1326507024, %v1499
    %v1515 = vor.u32 %v1513, %v1514
    %vm1516 = vcmp.lt.s32.totalorder %v1497, 1
    %vm1517 = vcmp.lt.s32.totalorder %v1497, 2
    %vm1518 = vcmp.lt.s32.totalorder %v1497, 3
    %vm1519 = vcmp.lt.s32.totalorder %v1497, 4
    %v1520 = vsel %vm1516, %v1500, %v1503
    %v1521 = vsel %vm1519, %v1509, 2102212464
    %v1522 = vsel %vm1518, %v1506, %v1521
    %v1523 = vsel %vm1517, %v1520, %v1522
    %v1524 = vsel %vm1516, %v1503, %v1506
    %v1525 = vsel %vm1519, %v1512, 920167782
    %v1526 = vsel %vm1518, %v1509, %v1525
    %v1527 = vsel %vm1517, %v1524, %v1526
    %v1528 = vsel %vm1516, %v1506, %v1509
    %v1529 = vsel %vm1519, %v1515, 1326507024
    %v1530 = vsel %vm1518, %v1512, %v1529
    %v1531 = vsel %vm1517, %v1528, %v1530
    %v1532 = vshll.u32 %v1492, 8
    %v1533 = vmul.u32.u64.compose %v1532, %v1531
    %v1534 = vextract.low.u32 %v1533
    %v1535 = vextract.high.u32 %v1533
    %v1536 = vmul.u32.u64.compose %v1532, %v1527
    %v1537 = vextract.low.u32 %v1536
    %v1538 = vextract.high.u32 %v1536
    %v1539 = vmul.u32 %v1532, %v1523
    %v1540 = vadd.s32 %v1535, %v1537
    %vm1541 = vc.u32 %v1535, %v1537
    %v1542 = vadd.s32 %v1538, 1
    %v1543 = vsel %vm1541, %v1542, %v1538
    %v1544 = vadd.s32 %v1539, %v1543
    %v1545 = vadd.s32 %v1544, 536870912
    %v1546 = vshrl.u32 %v1545, 30
    %v1547 = vshll.u32 %v1546, 30
    %v1548 = vsub.s32 %v1544, %v1547
    %vm1549 = vcmp.lt.s32.totalorder %v1548, 0
    %v1550 = vsub.s32 0, %v1548
    %v1551 = vsel %vm1549, %v1550, %v1548
    %v1552 = vclz %v1551
    %v1553 = vsub.s32 %v1552, 2
    %vm1554 = vcmp.gt.s32.totalorder 0, %v1553
    %v1555 = vsel %vm1554, 0, %v1553
    %v1556 = vsub.s32 32, %v1555
    %v1557 = vshll.u32 %v1548, %v1555
    %v1558 = vshrl.u32 %v1540, %v1556
    %v1559 = vor.u32 %v1557, %v1558
    %v1560 = vsub.s32 4294967266, %v1555
    %v1561 = vadd.s32 %v1560, 127
    %v1562 = vshll.u32 %v1561, 23
    %v1563 = vor.u32 4788187, %v1562
    %v1564 = vand.u32 2147483647, %v1563
    %v1566 = vcvt.s32.f32 %v1559
    %v1567 = vmul.f32 %v1566, %v1564
    %v1568 = vxor.u32 %v1567, 2147483648
    %v1569 = vsel %vm1486, %v1568, %v1567
    %v1570 = vsub.s32 4, %v1546
    %v1571 = vsel %vm1486, %v1570, %v1546
    %v1572 = vsel %vm1485, %v422, %v1569
    %v1573 = vsel %vm1485, 0, %v1571
    %v1574 = vcosq.f32.pop %v1572
    %v1575 = vsinq.f32.pop %v1572
    %vm1576 = vweird.f32 %v422
    %v1577 = vadd.s32 %v1573, 3
    %v1578 = vand.u32 %v1577, 3
    %vm1579 = vcmp.lt.s32.totalorder %v1578, 2
    %vm1580 = vcmp.eq.s32.totalorder %v1578, 0
    %v1581 = vxor.u32 %v1575, 2147483648
    %v1582 = vsel %vm1580, %v1574, %v1581
    %vm1583 = vcmp.eq.s32.totalorder %v1578, 2
    %v1584 = vxor.u32 %v1574, 2147483648
    %v1585 = vsel %vm1583, %v1584, %v1575
    %v1586 = vsel %vm1579, %v1582, %v1585
    %v1587 = vsel %vm1576, nan, %v1586
    %v1588 = vand.u32 2147483647, %v423
    %vm1589 = vcmp.le.f32.partialorder %v1588, 0.7853982
    %vm1590 = vcmp.lt.s32.totalorder %v423, 0
    %v1591 = vand.u32 %v423, 2139095040
    %v1592 = vshrl.u32 %v1591, 23
    %v1593 = vsub.s32 %v1592, 127
    %v1594 = vand.u32 2147483647, %v423
    %v1595 = vand.u32 %v1594, 8388607
    %v1596 = vor.u32 %v1595, 8388608
    %v1597 = vsub.s32 0, %v1596
    %v1598 = vadd.s32 %v1593, 1
    %vm1599 = vcmp.gt.s32.totalorder %v1598, 0
    %v1600 = vsel %vm1599, %v1598, 0
    %v1601 = vshrl.u32 %v1600, 5
    %v1602 = vand.u32 %v1600, 31
    %v1603 = vsub.s32 32, %v1602
    %v1604 = vshrl.u32 683565275, %v1603
    %v1605 = vshll.u32 683565275, %v1602
    %v1606 = vshrl.u32 2475754826, %v1603
    %v1607 = vor.u32 %v1605, %v1606
    %v1608 = vshll.u32 2475754826, %v1602
    %v1609 = vshrl.u32 2131351028, %v1603
    %v1610 = vor.u32 %v1608, %v1609
    %v1611 = vshll.u32 2131351028, %v1602
    %v1612 = vshrl.u32 2102212464, %v1603
    %v1613 = vor.u32 %v1611, %v1612
    %v1614 = vshll.u32 2102212464, %v1602
    %v1615 = vshrl.u32 920167782, %v1603
    %v1616 = vor.u32 %v1614, %v1615
    %v1617 = vshll.u32 920167782, %v1602
    %v1618 = vshrl.u32 1326507024, %v1603
    %v1619 = vor.u32 %v1617, %v1618
    %vm1620 = vcmp.lt.s32.totalorder %v1601, 1
    %vm1621 = vcmp.lt.s32.totalorder %v1601, 2
    %vm1622 = vcmp.lt.s32.totalorder %v1601, 3
    %vm1623 = vcmp.lt.s32.totalorder %v1601, 4
    %v1624 = vsel %vm1620, %v1604, %v1607
    %v1625 = vsel %vm1623, %v1613, 2102212464
    %v1626 = vsel %vm1622, %v1610, %v1625
    %v1627 = vsel %vm1621, %v1624, %v1626
    %v1628 = vsel %vm1620, %v1607, %v1610
    %v1629 = vsel %vm1623, %v1616, 920167782
    %v1630 = vsel %vm1622, %v1613, %v1629
    %v1631 = vsel %vm1621, %v1628, %v1630
    %v1632 = vsel %vm1620, %v1610, %v1613
    %v1633 = vsel %vm1623, %v1619, 1326507024
    %v1634 = vsel %vm1622, %v1616, %v1633
    %v1635 = vsel %vm1621, %v1632, %v1634
    %v1636 = vshll.u32 %v1596, 8
    %v1637 = vmul.u32.u64.compose %v1636, %v1635
    %v1638 = vextract.low.u32 %v1637
    %v1639 = vextract.high.u32 %v1637
    %v1640 = vmul.u32.u64.compose %v1636, %v1631
    %v1641 = vextract.low.u32 %v1640
    %v1642 = vextract.high.u32 %v1640
    %v1643 = vmul.u32 %v1636, %v1627
    %v1644 = vadd.s32 %v1639, %v1641
    %vm1645 = vc.u32 %v1639, %v1641
    %v1646 = vadd.s32 %v1642, 1
    %v1647 = vsel %vm1645, %v1646, %v1642
    %v1648 = vadd.s32 %v1643, %v1647
    %v1649 = vadd.s32 %v1648, 536870912
    %v1650 = vshrl.u32 %v1649, 30
    %v1651 = vshll.u32 %v1650, 30
    %v1652 = vsub.s32 %v1648, %v1651
    %vm1653 = vcmp.lt.s32.totalorder %v1652, 0
    %v1654 = vsub.s32 0, %v1652
    %v1655 = vsel %vm1653, %v1654, %v1652
    %v1656 = vclz %v1655
    %v1657 = vsub.s32 %v1656, 2
    %vm1658 = vcmp.gt.s32.totalorder 0, %v1657
    %v1659 = vsel %vm1658, 0, %v1657
    %v1660 = vsub.s32 32, %v1659
    %v1661 = vshll.u32 %v1652, %v1659
    %v1662 = vshrl.u32 %v1644, %v1660
    %v1663 = vor.u32 %v1661, %v1662
    %v1664 = vsub.s32 4294967266, %v1659
    %v1665 = vadd.s32 %v1664, 127
    %v1666 = vshll.u32 %v1665, 23
    %v1667 = vor.u32 4788187, %v1666
    %v1668 = vand.u32 2147483647, %v1667
    %v1670 = vcvt.s32.f32 %v1663
    %v1671 = vmul.f32 %v1670, %v1668
    %v1672 = vxor.u32 %v1671, 2147483648
    %v1673 = vsel %vm1590, %v1672, %v1671
    %v1674 = vsub.s32 4, %v1650
    %v1675 = vsel %vm1590, %v1674, %v1650
    %v1676 = vsel %vm1589, %v423, %v1673
    %v1677 = vsel %vm1589, 0, %v1675
    %v1678 = vcosq.f32.pop %v1676
    %v1679 = vsinq.f32.pop %v1676
    %vm1680 = vweird.f32 %v423
    %v1681 = vadd.s32 %v1677, 3
    %v1682 = vand.u32 %v1681, 3
    %vm1683 = vcmp.lt.s32.totalorder %v1682, 2
    %vm1684 = vcmp.eq.s32.totalorder %v1682, 0
    %v1685 = vxor.u32 %v1679, 2147483648
    %v1686 = vsel %vm1684, %v1678, %v1685
    %vm1687 = vcmp.eq.s32.totalorder %v1682, 2
    %v1688 = vxor.u32 %v1678, 2147483648
    %v1689 = vsel %vm1687, %v1688, %v1679
    %v1690 = vsel %vm1683, %v1686, %v1689
    %v1691 = vsel %vm1680, nan, %v1690
    %v1692 = vand.u32 2147483647, %v424
    %vm1693 = vcmp.le.f32.partialorder %v1692, 0.7853982
    %vm1694 = vcmp.lt.s32.totalorder %v424, 0
    %v1695 = vand.u32 %v424, 2139095040
    %v1696 = vshrl.u32 %v1695, 23
    %v1697 = vsub.s32 %v1696, 127
    %v1698 = vand.u32 2147483647, %v424
    %v1699 = vand.u32 %v1698, 8388607
    %v1700 = vor.u32 %v1699, 8388608
    %v1701 = vsub.s32 0, %v1700
    %v1702 = vadd.s32 %v1697, 1
    %vm1703 = vcmp.gt.s32.totalorder %v1702, 0
    %v1704 = vsel %vm1703, %v1702, 0
    %v1705 = vshrl.u32 %v1704, 5
    %v1706 = vand.u32 %v1704, 31
    %v1707 = vsub.s32 32, %v1706
    %v1708 = vshrl.u32 683565275, %v1707
    %v1709 = vshll.u32 683565275, %v1706
    %v1710 = vshrl.u32 2475754826, %v1707
    %v1711 = vor.u32 %v1709, %v1710
    %v1712 = vshll.u32 2475754826, %v1706
    %v1713 = vshrl.u32 2131351028, %v1707
    %v1714 = vor.u32 %v1712, %v1713
    %v1715 = vshll.u32 2131351028, %v1706
    %v1716 = vshrl.u32 2102212464, %v1707
    %v1717 = vor.u32 %v1715, %v1716
    %v1718 = vshll.u32 2102212464, %v1706
    %v1719 = vshrl.u32 920167782, %v1707
    %v1720 = vor.u32 %v1718, %v1719
    %v1721 = vshll.u32 920167782, %v1706
    %v1722 = vshrl.u32 1326507024, %v1707
    %v1723 = vor.u32 %v1721, %v1722
    %vm1724 = vcmp.lt.s32.totalorder %v1705, 1
    %vm1725 = vcmp.lt.s32.totalorder %v1705, 2
    %vm1726 = vcmp.lt.s32.totalorder %v1705, 3
    %vm1727 = vcmp.lt.s32.totalorder %v1705, 4
    %v1728 = vsel %vm1724, %v1708, %v1711
    %v1729 = vsel %vm1727, %v1717, 2102212464
    %v1730 = vsel %vm1726, %v1714, %v1729
    %v1731 = vsel %vm1725, %v1728, %v1730
    %v1732 = vsel %vm1724, %v1711, %v1714
    %v1733 = vsel %vm1727, %v1720, 920167782
    %v1734 = vsel %vm1726, %v1717, %v1733
    %v1735 = vsel %vm1725, %v1732, %v1734
    %v1736 = vsel %vm1724, %v1714, %v1717
    %v1737 = vsel %vm1727, %v1723, 1326507024
    %v1738 = vsel %vm1726, %v1720, %v1737
    %v1739 = vsel %vm1725, %v1736, %v1738
    %v1740 = vshll.u32 %v1700, 8
    %v1741 = vmul.u32.u64.compose %v1740, %v1739
    %v1742 = vextract.low.u32 %v1741
    %v1743 = vextract.high.u32 %v1741
    %v1744 = vmul.u32.u64.compose %v1740, %v1735
    %v1745 = vextract.low.u32 %v1744
    %v1746 = vextract.high.u32 %v1744
    %v1747 = vmul.u32 %v1740, %v1731
    %v1748 = vadd.s32 %v1743, %v1745
    %vm1749 = vc.u32 %v1743, %v1745
    %v1750 = vadd.s32 %v1746, 1
    %v1751 = vsel %vm1749, %v1750, %v1746
    %v1752 = vadd.s32 %v1747, %v1751
    %v1753 = vadd.s32 %v1752, 536870912
    %v1754 = vshrl.u32 %v1753, 30
    %v1755 = vshll.u32 %v1754, 30
    %v1756 = vsub.s32 %v1752, %v1755
    %vm1757 = vcmp.lt.s32.totalorder %v1756, 0
    %v1758 = vsub.s32 0, %v1756
    %v1759 = vsel %vm1757, %v1758, %v1756
    %v1760 = vclz %v1759
    %v1761 = vsub.s32 %v1760, 2
    %vm1762 = vcmp.gt.s32.totalorder 0, %v1761
    %v1763 = vsel %vm1762, 0, %v1761
    %v1764 = vsub.s32 32, %v1763
    %v1765 = vshll.u32 %v1756, %v1763
    %v1766 = vshrl.u32 %v1748, %v1764
    %v1767 = vor.u32 %v1765, %v1766
    %v1768 = vsub.s32 4294967266, %v1763
    %v1769 = vadd.s32 %v1768, 127
    %v1770 = vshll.u32 %v1769, 23
    %v1771 = vor.u32 4788187, %v1770
    %v1772 = vand.u32 2147483647, %v1771
    %v1774 = vcvt.s32.f32 %v1767
    %v1775 = vmul.f32 %v1774, %v1772
    %v1776 = vxor.u32 %v1775, 2147483648
    %v1777 = vsel %vm1694, %v1776, %v1775
    %v1778 = vsub.s32 4, %v1754
    %v1779 = vsel %vm1694, %v1778, %v1754
    %v1780 = vsel %vm1693, %v424, %v1777
    %v1781 = vsel %vm1693, 0, %v1779
    %v1782 = vcosq.f32.pop %v1780
    %v1783 = vsinq.f32.pop %v1780
    %vm1784 = vweird.f32 %v424
    %v1785 = vadd.s32 %v1781, 3
    %v1786 = vand.u32 %v1785, 3
    %vm1787 = vcmp.lt.s32.totalorder %v1786, 2
    %vm1788 = vcmp.eq.s32.totalorder %v1786, 0
    %v1789 = vxor.u32 %v1783, 2147483648
    %v1790 = vsel %vm1788, %v1782, %v1789
    %vm1791 = vcmp.eq.s32.totalorder %v1786, 2
    %v1792 = vxor.u32 %v1782, 2147483648
    %v1793 = vsel %vm1791, %v1792, %v1783
    %v1794 = vsel %vm1787, %v1790, %v1793
    %v1795 = vsel %vm1784, nan, %v1794
    %v1796 = vand.u32 2147483647, %v425
    %vm1797 = vcmp.le.f32.partialorder %v1796, 0.7853982
    %vm1798 = vcmp.lt.s32.totalorder %v425, 0
    %v1799 = vand.u32 %v425, 2139095040
    %v1800 = vshrl.u32 %v1799, 23
    %v1801 = vsub.s32 %v1800, 127
    %v1802 = vand.u32 2147483647, %v425
    %v1803 = vand.u32 %v1802, 8388607
    %v1804 = vor.u32 %v1803, 8388608
    %v1805 = vsub.s32 0, %v1804
    %v1806 = vadd.s32 %v1801, 1
    %vm1807 = vcmp.gt.s32.totalorder %v1806, 0
    %v1808 = vsel %vm1807, %v1806, 0
    %v1809 = vshrl.u32 %v1808, 5
    %v1810 = vand.u32 %v1808, 31
    %v1811 = vsub.s32 32, %v1810
    %v1812 = vshrl.u32 683565275, %v1811
    %v1813 = vshll.u32 683565275, %v1810
    %v1814 = vshrl.u32 2475754826, %v1811
    %v1815 = vor.u32 %v1813, %v1814
    %v1816 = vshll.u32 2475754826, %v1810
    %v1817 = vshrl.u32 2131351028, %v1811
    %v1818 = vor.u32 %v1816, %v1817
    %v1819 = vshll.u32 2131351028, %v1810
    %v1820 = vshrl.u32 2102212464, %v1811
    %v1821 = vor.u32 %v1819, %v1820
    %v1822 = vshll.u32 2102212464, %v1810
    %v1823 = vshrl.u32 920167782, %v1811
    %v1824 = vor.u32 %v1822, %v1823
    %v1825 = vshll.u32 920167782, %v1810
    %v1826 = vshrl.u32 1326507024, %v1811
    %v1827 = vor.u32 %v1825, %v1826
    %vm1828 = vcmp.lt.s32.totalorder %v1809, 1
    %vm1829 = vcmp.lt.s32.totalorder %v1809, 2
    %vm1830 = vcmp.lt.s32.totalorder %v1809, 3
    %vm1831 = vcmp.lt.s32.totalorder %v1809, 4
    %v1832 = vsel %vm1828, %v1812, %v1815
    %v1833 = vsel %vm1831, %v1821, 2102212464
    %v1834 = vsel %vm1830, %v1818, %v1833
    %v1835 = vsel %vm1829, %v1832, %v1834
    %v1836 = vsel %vm1828, %v1815, %v1818
    %v1837 = vsel %vm1831, %v1824, 920167782
    %v1838 = vsel %vm1830, %v1821, %v1837
    %v1839 = vsel %vm1829, %v1836, %v1838
    %v1840 = vsel %vm1828, %v1818, %v1821
    %v1841 = vsel %vm1831, %v1827, 1326507024
    %v1842 = vsel %vm1830, %v1824, %v1841
    %v1843 = vsel %vm1829, %v1840, %v1842
    %v1844 = vshll.u32 %v1804, 8
    %v1845 = vmul.u32.u64.compose %v1844, %v1843
    %v1846 = vextract.low.u32 %v1845
    %v1847 = vextract.high.u32 %v1845
    %v1848 = vmul.u32.u64.compose %v1844, %v1839
    %v1849 = vextract.low.u32 %v1848
    %v1850 = vextract.high.u32 %v1848
    %v1851 = vmul.u32 %v1844, %v1835
    %v1852 = vadd.s32 %v1847, %v1849
    %vm1853 = vc.u32 %v1847, %v1849
    %v1854 = vadd.s32 %v1850, 1
    %v1855 = vsel %vm1853, %v1854, %v1850
    %v1856 = vadd.s32 %v1851, %v1855
    %v1857 = vadd.s32 %v1856, 536870912
    %v1858 = vshrl.u32 %v1857, 30
    %v1859 = vshll.u32 %v1858, 30
    %v1860 = vsub.s32 %v1856, %v1859
    %vm1861 = vcmp.lt.s32.totalorder %v1860, 0
    %v1862 = vsub.s32 0, %v1860
    %v1863 = vsel %vm1861, %v1862, %v1860
    %v1864 = vclz %v1863
    %v1865 = vsub.s32 %v1864, 2
    %vm1866 = vcmp.gt.s32.totalorder 0, %v1865
    %v1867 = vsel %vm1866, 0, %v1865
    %v1868 = vsub.s32 32, %v1867
    %v1869 = vshll.u32 %v1860, %v1867
    %v1870 = vshrl.u32 %v1852, %v1868
    %v1871 = vor.u32 %v1869, %v1870
    %v1872 = vsub.s32 4294967266, %v1867
    %v1873 = vadd.s32 %v1872, 127
    %v1874 = vshll.u32 %v1873, 23
    %v1875 = vor.u32 4788187, %v1874
    %v1876 = vand.u32 2147483647, %v1875
    %v1878 = vcvt.s32.f32 %v1871
    %v1879 = vmul.f32 %v1878, %v1876
    %v1880 = vxor.u32 %v1879, 2147483648
    %v1881 = vsel %vm1798, %v1880, %v1879
    %v1882 = vsub.s32 4, %v1858
    %v1883 = vsel %vm1798, %v1882, %v1858
    %v1884 = vsel %vm1797, %v425, %v1881
    %v1885 = vsel %vm1797, 0, %v1883
    %v1886 = vcosq.f32.pop %v1884
    %v1887 = vsinq.f32.pop %v1884
    %vm1888 = vweird.f32 %v425
    %v1889 = vadd.s32 %v1885, 3
    %v1890 = vand.u32 %v1889, 3
    %vm1891 = vcmp.lt.s32.totalorder %v1890, 2
    %vm1892 = vcmp.eq.s32.totalorder %v1890, 0
    %v1893 = vxor.u32 %v1887, 2147483648
    %v1894 = vsel %vm1892, %v1886, %v1893
    %vm1895 = vcmp.eq.s32.totalorder %v1890, 2
    %v1896 = vxor.u32 %v1886, 2147483648
    %v1897 = vsel %vm1895, %v1896, %v1887
    %v1898 = vsel %vm1891, %v1894, %v1897
    %v1899 = vsel %vm1888, nan, %v1898
    %v1900 = vand.u32 2147483647, %v426
    %vm1901 = vcmp.le.f32.partialorder %v1900, 0.7853982
    %vm1902 = vcmp.lt.s32.totalorder %v426, 0
    %v1903 = vand.u32 %v426, 2139095040
    %v1904 = vshrl.u32 %v1903, 23
    %v1905 = vsub.s32 %v1904, 127
    %v1906 = vand.u32 2147483647, %v426
    %v1907 = vand.u32 %v1906, 8388607
    %v1908 = vor.u32 %v1907, 8388608
    %v1909 = vsub.s32 0, %v1908
    %v1910 = vadd.s32 %v1905, 1
    %vm1911 = vcmp.gt.s32.totalorder %v1910, 0
    %v1912 = vsel %vm1911, %v1910, 0
    %v1913 = vshrl.u32 %v1912, 5
    %v1914 = vand.u32 %v1912, 31
    %v1915 = vsub.s32 32, %v1914
    %v1916 = vshrl.u32 683565275, %v1915
    %v1917 = vshll.u32 683565275, %v1914
    %v1918 = vshrl.u32 2475754826, %v1915
    %v1919 = vor.u32 %v1917, %v1918
    %v1920 = vshll.u32 2475754826, %v1914
    %v1921 = vshrl.u32 2131351028, %v1915
    %v1922 = vor.u32 %v1920, %v1921
    %v1923 = vshll.u32 2131351028, %v1914
    %v1924 = vshrl.u32 2102212464, %v1915
    %v1925 = vor.u32 %v1923, %v1924
    %v1926 = vshll.u32 2102212464, %v1914
    %v1927 = vshrl.u32 920167782, %v1915
    %v1928 = vor.u32 %v1926, %v1927
    %v1929 = vshll.u32 920167782, %v1914
    %v1930 = vshrl.u32 1326507024, %v1915
    %v1931 = vor.u32 %v1929, %v1930
    %vm1932 = vcmp.lt.s32.totalorder %v1913, 1
    %vm1933 = vcmp.lt.s32.totalorder %v1913, 2
    %vm1934 = vcmp.lt.s32.totalorder %v1913, 3
    %vm1935 = vcmp.lt.s32.totalorder %v1913, 4
    %v1936 = vsel %vm1932, %v1916, %v1919
    %v1937 = vsel %vm1935, %v1925, 2102212464
    %v1938 = vsel %vm1934, %v1922, %v1937
    %v1939 = vsel %vm1933, %v1936, %v1938
    %v1940 = vsel %vm1932, %v1919, %v1922
    %v1941 = vsel %vm1935, %v1928, 920167782
    %v1942 = vsel %vm1934, %v1925, %v1941
    %v1943 = vsel %vm1933, %v1940, %v1942
    %v1944 = vsel %vm1932, %v1922, %v1925
    %v1945 = vsel %vm1935, %v1931, 1326507024
    %v1946 = vsel %vm1934, %v1928, %v1945
    %v1947 = vsel %vm1933, %v1944, %v1946
    %v1948 = vshll.u32 %v1908, 8
    %v1949 = vmul.u32.u64.compose %v1948, %v1947
    %v1950 = vextract.low.u32 %v1949
    %v1951 = vextract.high.u32 %v1949
    %v1952 = vmul.u32.u64.compose %v1948, %v1943
    %v1953 = vextract.low.u32 %v1952
    %v1954 = vextract.high.u32 %v1952
    %v1955 = vmul.u32 %v1948, %v1939
    %v1956 = vadd.s32 %v1951, %v1953
    %vm1957 = vc.u32 %v1951, %v1953
    %v1958 = vadd.s32 %v1954, 1
    %v1959 = vsel %vm1957, %v1958, %v1954
    %v1960 = vadd.s32 %v1955, %v1959
    %v1961 = vadd.s32 %v1960, 536870912
    %v1962 = vshrl.u32 %v1961, 30
    %v1963 = vshll.u32 %v1962, 30
    %v1964 = vsub.s32 %v1960, %v1963
    %vm1965 = vcmp.lt.s32.totalorder %v1964, 0
    %v1966 = vsub.s32 0, %v1964
    %v1967 = vsel %vm1965, %v1966, %v1964
    %v1968 = vclz %v1967
    %v1969 = vsub.s32 %v1968, 2
    %vm1970 = vcmp.gt.s32.totalorder 0, %v1969
    %v1971 = vsel %vm1970, 0, %v1969
    %v1972 = vsub.s32 32, %v1971
    %v1973 = vshll.u32 %v1964, %v1971
    %v1974 = vshrl.u32 %v1956, %v1972
    %v1975 = vor.u32 %v1973, %v1974
    %v1976 = vsub.s32 4294967266, %v1971
    %v1977 = vadd.s32 %v1976, 127
    %v1978 = vshll.u32 %v1977, 23
    %v1979 = vor.u32 4788187, %v1978
    %v1980 = vand.u32 2147483647, %v1979
    %v1982 = vcvt.s32.f32 %v1975
    %v1983 = vmul.f32 %v1982, %v1980
    %v1984 = vxor.u32 %v1983, 2147483648
    %v1985 = vsel %vm1902, %v1984, %v1983
    %v1986 = vsub.s32 4, %v1962
    %v1987 = vsel %vm1902, %v1986, %v1962
    %v1988 = vsel %vm1901, %v426, %v1985
    %v1989 = vsel %vm1901, 0, %v1987
    %v1990 = vcosq.f32.pop %v1988
    %v1991 = vsinq.f32.pop %v1988
    %vm1992 = vweird.f32 %v426
    %v1993 = vadd.s32 %v1989, 3
    %v1994 = vand.u32 %v1993, 3
    %vm1995 = vcmp.lt.s32.totalorder %v1994, 2
    %vm1996 = vcmp.eq.s32.totalorder %v1994, 0
    %v1997 = vxor.u32 %v1991, 2147483648
    %v1998 = vsel %vm1996, %v1990, %v1997
    %vm1999 = vcmp.eq.s32.totalorder %v1994, 2
    %v2000 = vxor.u32 %v1990, 2147483648
    %v2001 = vsel %vm1999, %v2000, %v1991
    %v2002 = vsel %vm1995, %v1998, %v2001
    %v2003 = vsel %vm1992, nan, %v2002
    %v2004 = vand.u32 2147483647, %v427
    %vm2005 = vcmp.le.f32.partialorder %v2004, 0.7853982
    %vm2006 = vcmp.lt.s32.totalorder %v427, 0
    %v2007 = vand.u32 %v427, 2139095040
    %v2008 = vshrl.u32 %v2007, 23
    %v2009 = vsub.s32 %v2008, 127
    %v2010 = vand.u32 2147483647, %v427
    %v2011 = vand.u32 %v2010, 8388607
    %v2012 = vor.u32 %v2011, 8388608
    %v2013 = vsub.s32 0, %v2012
    %v2014 = vadd.s32 %v2009, 1
    %vm2015 = vcmp.gt.s32.totalorder %v2014, 0
    %v2016 = vsel %vm2015, %v2014, 0
    %v2017 = vshrl.u32 %v2016, 5
    %v2018 = vand.u32 %v2016, 31
    %v2019 = vsub.s32 32, %v2018
    %v2020 = vshrl.u32 683565275, %v2019
    %v2021 = vshll.u32 683565275, %v2018
    %v2022 = vshrl.u32 2475754826, %v2019
    %v2023 = vor.u32 %v2021, %v2022
    %v2024 = vshll.u32 2475754826, %v2018
    %v2025 = vshrl.u32 2131351028, %v2019
    %v2026 = vor.u32 %v2024, %v2025
    %v2027 = vshll.u32 2131351028, %v2018
    %v2028 = vshrl.u32 2102212464, %v2019
    %v2029 = vor.u32 %v2027, %v2028
    %v2030 = vshll.u32 2102212464, %v2018
    %v2031 = vshrl.u32 920167782, %v2019
    %v2032 = vor.u32 %v2030, %v2031
    %v2033 = vshll.u32 920167782, %v2018
    %v2034 = vshrl.u32 1326507024, %v2019
    %v2035 = vor.u32 %v2033, %v2034
    %vm2036 = vcmp.lt.s32.totalorder %v2017, 1
    %vm2037 = vcmp.lt.s32.totalorder %v2017, 2
    %vm2038 = vcmp.lt.s32.totalorder %v2017, 3
    %vm2039 = vcmp.lt.s32.totalorder %v2017, 4
    %v2040 = vsel %vm2036, %v2020, %v2023
    %v2041 = vsel %vm2039, %v2029, 2102212464
    %v2042 = vsel %vm2038, %v2026, %v2041
    %v2043 = vsel %vm2037, %v2040, %v2042
    %v2044 = vsel %vm2036, %v2023, %v2026
    %v2045 = vsel %vm2039, %v2032, 920167782
    %v2046 = vsel %vm2038, %v2029, %v2045
    %v2047 = vsel %vm2037, %v2044, %v2046
    %v2048 = vsel %vm2036, %v2026, %v2029
    %v2049 = vsel %vm2039, %v2035, 1326507024
    %v2050 = vsel %vm2038, %v2032, %v2049
    %v2051 = vsel %vm2037, %v2048, %v2050
    %v2052 = vshll.u32 %v2012, 8
    %v2053 = vmul.u32.u64.compose %v2052, %v2051
    %v2054 = vextract.low.u32 %v2053
    %v2055 = vextract.high.u32 %v2053
    %v2056 = vmul.u32.u64.compose %v2052, %v2047
    %v2057 = vextract.low.u32 %v2056
    %v2058 = vextract.high.u32 %v2056
    %v2059 = vmul.u32 %v2052, %v2043
    %v2060 = vadd.s32 %v2055, %v2057
    %vm2061 = vc.u32 %v2055, %v2057
    %v2062 = vadd.s32 %v2058, 1
    %v2063 = vsel %vm2061, %v2062, %v2058
    %v2064 = vadd.s32 %v2059, %v2063
    %v2065 = vadd.s32 %v2064, 536870912
    %v2066 = vshrl.u32 %v2065, 30
    %v2067 = vshll.u32 %v2066, 30
    %v2068 = vsub.s32 %v2064, %v2067
    %vm2069 = vcmp.lt.s32.totalorder %v2068, 0
    %v2070 = vsub.s32 0, %v2068
    %v2071 = vsel %vm2069, %v2070, %v2068
    %v2072 = vclz %v2071
    %v2073 = vsub.s32 %v2072, 2
    %vm2074 = vcmp.gt.s32.totalorder 0, %v2073
    %v2075 = vsel %vm2074, 0, %v2073
    %v2076 = vsub.s32 32, %v2075
    %v2077 = vshll.u32 %v2068, %v2075
    %v2078 = vshrl.u32 %v2060, %v2076
    %v2079 = vor.u32 %v2077, %v2078
    %v2080 = vsub.s32 4294967266, %v2075
    %v2081 = vadd.s32 %v2080, 127
    %v2082 = vshll.u32 %v2081, 23
    %v2083 = vor.u32 4788187, %v2082
    %v2084 = vand.u32 2147483647, %v2083
    %v2086 = vcvt.s32.f32 %v2079
    %v2087 = vmul.f32 %v2086, %v2084
    %v2088 = vxor.u32 %v2087, 2147483648
    %v2089 = vsel %vm2006, %v2088, %v2087
    %v2090 = vsub.s32 4, %v2066
    %v2091 = vsel %vm2006, %v2090, %v2066
    %v2092 = vsel %vm2005, %v427, %v2089
    %v2093 = vsel %vm2005, 0, %v2091
    %v2094 = vcosq.f32.pop %v2092
    %v2095 = vsinq.f32.pop %v2092
    %vm2096 = vweird.f32 %v427
    %v2097 = vadd.s32 %v2093, 3
    %v2098 = vand.u32 %v2097, 3
    %vm2099 = vcmp.lt.s32.totalorder %v2098, 2
    %vm2100 = vcmp.eq.s32.totalorder %v2098, 0
    %v2101 = vxor.u32 %v2095, 2147483648
    %v2102 = vsel %vm2100, %v2094, %v2101
    %vm2103 = vcmp.eq.s32.totalorder %v2098, 2
    %v2104 = vxor.u32 %v2094, 2147483648
    %v2105 = vsel %vm2103, %v2104, %v2095
    %v2106 = vsel %vm2099, %v2102, %v2105
    %v2107 = vsel %vm2096, nan, %v2106
    %v2108 = vand.u32 2147483647, %v428
    %vm2109 = vcmp.le.f32.partialorder %v2108, 0.7853982
    %vm2110 = vcmp.lt.s32.totalorder %v428, 0
    %v2111 = vand.u32 %v428, 2139095040
    %v2112 = vshrl.u32 %v2111, 23
    %v2113 = vsub.s32 %v2112, 127
    %v2114 = vand.u32 2147483647, %v428
    %v2115 = vand.u32 %v2114, 8388607
    %v2116 = vor.u32 %v2115, 8388608
    %v2117 = vsub.s32 0, %v2116
    %v2118 = vadd.s32 %v2113, 1
    %vm2119 = vcmp.gt.s32.totalorder %v2118, 0
    %v2120 = vsel %vm2119, %v2118, 0
    %v2121 = vshrl.u32 %v2120, 5
    %v2122 = vand.u32 %v2120, 31
    %v2123 = vsub.s32 32, %v2122
    %v2124 = vshrl.u32 683565275, %v2123
    %v2125 = vshll.u32 683565275, %v2122
    %v2126 = vshrl.u32 2475754826, %v2123
    %v2127 = vor.u32 %v2125, %v2126
    %v2128 = vshll.u32 2475754826, %v2122
    %v2129 = vshrl.u32 2131351028, %v2123
    %v2130 = vor.u32 %v2128, %v2129
    %v2131 = vshll.u32 2131351028, %v2122
    %v2132 = vshrl.u32 2102212464, %v2123
    %v2133 = vor.u32 %v2131, %v2132
    %v2134 = vshll.u32 2102212464, %v2122
    %v2135 = vshrl.u32 920167782, %v2123
    %v2136 = vor.u32 %v2134, %v2135
    %v2137 = vshll.u32 920167782, %v2122
    %v2138 = vshrl.u32 1326507024, %v2123
    %v2139 = vor.u32 %v2137, %v2138
    %vm2140 = vcmp.lt.s32.totalorder %v2121, 1
    %vm2141 = vcmp.lt.s32.totalorder %v2121, 2
    %vm2142 = vcmp.lt.s32.totalorder %v2121, 3
    %vm2143 = vcmp.lt.s32.totalorder %v2121, 4
    %v2144 = vsel %vm2140, %v2124, %v2127
    %v2145 = vsel %vm2143, %v2133, 2102212464
    %v2146 = vsel %vm2142, %v2130, %v2145
    %v2147 = vsel %vm2141, %v2144, %v2146
    %v2148 = vsel %vm2140, %v2127, %v2130
    %v2149 = vsel %vm2143, %v2136, 920167782
    %v2150 = vsel %vm2142, %v2133, %v2149
    %v2151 = vsel %vm2141, %v2148, %v2150
    %v2152 = vsel %vm2140, %v2130, %v2133
    %v2153 = vsel %vm2143, %v2139, 1326507024
    %v2154 = vsel %vm2142, %v2136, %v2153
    %v2155 = vsel %vm2141, %v2152, %v2154
    %v2156 = vshll.u32 %v2116, 8
    %v2157 = vmul.u32.u64.compose %v2156, %v2155
    %v2158 = vextract.low.u32 %v2157
    %v2159 = vextract.high.u32 %v2157
    %v2160 = vmul.u32.u64.compose %v2156, %v2151
    %v2161 = vextract.low.u32 %v2160
    %v2162 = vextract.high.u32 %v2160
    %v2163 = vmul.u32 %v2156, %v2147
    %v2164 = vadd.s32 %v2159, %v2161
    %vm2165 = vc.u32 %v2159, %v2161
    %v2166 = vadd.s32 %v2162, 1
    %v2167 = vsel %vm2165, %v2166, %v2162
    %v2168 = vadd.s32 %v2163, %v2167
    %v2169 = vadd.s32 %v2168, 536870912
    %v2170 = vshrl.u32 %v2169, 30
    %v2171 = vshll.u32 %v2170, 30
    %v2172 = vsub.s32 %v2168, %v2171
    %vm2173 = vcmp.lt.s32.totalorder %v2172, 0
    %v2174 = vsub.s32 0, %v2172
    %v2175 = vsel %vm2173, %v2174, %v2172
    %v2176 = vclz %v2175
    %v2177 = vsub.s32 %v2176, 2
    %vm2178 = vcmp.gt.s32.totalorder 0, %v2177
    %v2179 = vsel %vm2178, 0, %v2177
    %v2180 = vsub.s32 32, %v2179
    %v2181 = vshll.u32 %v2172, %v2179
    %v2182 = vshrl.u32 %v2164, %v2180
    %v2183 = vor.u32 %v2181, %v2182
    %v2184 = vsub.s32 4294967266, %v2179
    %v2185 = vadd.s32 %v2184, 127
    %v2186 = vshll.u32 %v2185, 23
    %v2187 = vor.u32 4788187, %v2186
    %v2188 = vand.u32 2147483647, %v2187
    %v2190 = vcvt.s32.f32 %v2183
    %v2191 = vmul.f32 %v2190, %v2188
    %v2192 = vxor.u32 %v2191, 2147483648
    %v2193 = vsel %vm2110, %v2192, %v2191
    %v2194 = vsub.s32 4, %v2170
    %v2195 = vsel %vm2110, %v2194, %v2170
    %v2196 = vsel %vm2109, %v428, %v2193
    %v2197 = vsel %vm2109, 0, %v2195
    %v2198 = vcosq.f32.pop %v2196
    %v2199 = vsinq.f32.pop %v2196
    %vm2200 = vweird.f32 %v428
    %v2201 = vadd.s32 %v2197, 3
    %v2202 = vand.u32 %v2201, 3
    %vm2203 = vcmp.lt.s32.totalorder %v2202, 2
    %vm2204 = vcmp.eq.s32.totalorder %v2202, 0
    %v2205 = vxor.u32 %v2199, 2147483648
    %v2206 = vsel %vm2204, %v2198, %v2205
    %vm2207 = vcmp.eq.s32.totalorder %v2202, 2
    %v2208 = vxor.u32 %v2198, 2147483648
    %v2209 = vsel %vm2207, %v2208, %v2199
    %v2210 = vsel %vm2203, %v2206, %v2209
    %v2211 = vsel %vm2200, nan, %v2210
    %v2212 = vand.u32 2147483647, %v429
    %vm2213 = vcmp.le.f32.partialorder %v2212, 0.7853982
    %vm2214 = vcmp.lt.s32.totalorder %v429, 0
    %v2215 = vand.u32 %v429, 2139095040
    %v2216 = vshrl.u32 %v2215, 23
    %v2217 = vsub.s32 %v2216, 127
    %v2218 = vand.u32 2147483647, %v429
    %v2219 = vand.u32 %v2218, 8388607
    %v2220 = vor.u32 %v2219, 8388608
    %v2221 = vsub.s32 0, %v2220
    %v2222 = vadd.s32 %v2217, 1
    %vm2223 = vcmp.gt.s32.totalorder %v2222, 0
    %v2224 = vsel %vm2223, %v2222, 0
    %v2225 = vshrl.u32 %v2224, 5
    %v2226 = vand.u32 %v2224, 31
    %v2227 = vsub.s32 32, %v2226
    %v2228 = vshrl.u32 683565275, %v2227
    %v2229 = vshll.u32 683565275, %v2226
    %v2230 = vshrl.u32 2475754826, %v2227
    %v2231 = vor.u32 %v2229, %v2230
    %v2232 = vshll.u32 2475754826, %v2226
    %v2233 = vshrl.u32 2131351028, %v2227
    %v2234 = vor.u32 %v2232, %v2233
    %v2235 = vshll.u32 2131351028, %v2226
    %v2236 = vshrl.u32 2102212464, %v2227
    %v2237 = vor.u32 %v2235, %v2236
    %v2238 = vshll.u32 2102212464, %v2226
    %v2239 = vshrl.u32 920167782, %v2227
    %v2240 = vor.u32 %v2238, %v2239
    %v2241 = vshll.u32 920167782, %v2226
    %v2242 = vshrl.u32 1326507024, %v2227
    %v2243 = vor.u32 %v2241, %v2242
    %vm2244 = vcmp.lt.s32.totalorder %v2225, 1
    %vm2245 = vcmp.lt.s32.totalorder %v2225, 2
    %vm2246 = vcmp.lt.s32.totalorder %v2225, 3
    %vm2247 = vcmp.lt.s32.totalorder %v2225, 4
    %v2248 = vsel %vm2244, %v2228, %v2231
    %v2249 = vsel %vm2247, %v2237, 2102212464
    %v2250 = vsel %vm2246, %v2234, %v2249
    %v2251 = vsel %vm2245, %v2248, %v2250
    %v2252 = vsel %vm2244, %v2231, %v2234
    %v2253 = vsel %vm2247, %v2240, 920167782
    %v2254 = vsel %vm2246, %v2237, %v2253
    %v2255 = vsel %vm2245, %v2252, %v2254
    %v2256 = vsel %vm2244, %v2234, %v2237
    %v2257 = vsel %vm2247, %v2243, 1326507024
    %v2258 = vsel %vm2246, %v2240, %v2257
    %v2259 = vsel %vm2245, %v2256, %v2258
    %v2260 = vshll.u32 %v2220, 8
    %v2261 = vmul.u32.u64.compose %v2260, %v2259
    %v2262 = vextract.low.u32 %v2261
    %v2263 = vextract.high.u32 %v2261
    %v2264 = vmul.u32.u64.compose %v2260, %v2255
    %v2265 = vextract.low.u32 %v2264
    %v2266 = vextract.high.u32 %v2264
    %v2267 = vmul.u32 %v2260, %v2251
    %v2268 = vadd.s32 %v2263, %v2265
    %vm2269 = vc.u32 %v2263, %v2265
    %v2270 = vadd.s32 %v2266, 1
    %v2271 = vsel %vm2269, %v2270, %v2266
    %v2272 = vadd.s32 %v2267, %v2271
    %v2273 = vadd.s32 %v2272, 536870912
    %v2274 = vshrl.u32 %v2273, 30
    %v2275 = vshll.u32 %v2274, 30
    %v2276 = vsub.s32 %v2272, %v2275
    %vm2277 = vcmp.lt.s32.totalorder %v2276, 0
    %v2278 = vsub.s32 0, %v2276
    %v2279 = vsel %vm2277, %v2278, %v2276
    %v2280 = vclz %v2279
    %v2281 = vsub.s32 %v2280, 2
    %vm2282 = vcmp.gt.s32.totalorder 0, %v2281
    %v2283 = vsel %vm2282, 0, %v2281
    %v2284 = vsub.s32 32, %v2283
    %v2285 = vshll.u32 %v2276, %v2283
    %v2286 = vshrl.u32 %v2268, %v2284
    %v2287 = vor.u32 %v2285, %v2286
    %v2288 = vsub.s32 4294967266, %v2283
    %v2289 = vadd.s32 %v2288, 127
    %v2290 = vshll.u32 %v2289, 23
    %v2291 = vor.u32 4788187, %v2290
    %v2292 = vand.u32 2147483647, %v2291
    %v2294 = vcvt.s32.f32 %v2287
    %v2295 = vmul.f32 %v2294, %v2292
    %v2296 = vxor.u32 %v2295, 2147483648
    %v2297 = vsel %vm2214, %v2296, %v2295
    %v2298 = vsub.s32 4, %v2274
    %v2299 = vsel %vm2214, %v2298, %v2274
    %v2300 = vsel %vm2213, %v429, %v2297
    %v2301 = vsel %vm2213, 0, %v2299
    %v2302 = vcosq.f32.pop %v2300
    %v2303 = vsinq.f32.pop %v2300
    %vm2304 = vweird.f32 %v429
    %v2305 = vadd.s32 %v2301, 3
    %v2306 = vand.u32 %v2305, 3
    %vm2307 = vcmp.lt.s32.totalorder %v2306, 2
    %vm2308 = vcmp.eq.s32.totalorder %v2306, 0
    %v2309 = vxor.u32 %v2303, 2147483648
    %v2310 = vsel %vm2308, %v2302, %v2309
    %vm2311 = vcmp.eq.s32.totalorder %v2306, 2
    %v2312 = vxor.u32 %v2302, 2147483648
    %v2313 = vsel %vm2311, %v2312, %v2303
    %v2314 = vsel %vm2307, %v2310, %v2313
    %v2315 = vsel %vm2304, nan, %v2314
    %v2316 = vand.u32 2147483647, %v430
    %vm2317 = vcmp.le.f32.partialorder %v2316, 0.7853982
    %vm2318 = vcmp.lt.s32.totalorder %v430, 0
    %v2319 = vand.u32 %v430, 2139095040
    %v2320 = vshrl.u32 %v2319, 23
    %v2321 = vsub.s32 %v2320, 127
    %v2322 = vand.u32 2147483647, %v430
    %v2323 = vand.u32 %v2322, 8388607
    %v2324 = vor.u32 %v2323, 8388608
    %v2325 = vsub.s32 0, %v2324
    %v2326 = vadd.s32 %v2321, 1
    %vm2327 = vcmp.gt.s32.totalorder %v2326, 0
    %v2328 = vsel %vm2327, %v2326, 0
    %v2329 = vshrl.u32 %v2328, 5
    %v2330 = vand.u32 %v2328, 31
    %v2331 = vsub.s32 32, %v2330
    %v2332 = vshrl.u32 683565275, %v2331
    %v2333 = vshll.u32 683565275, %v2330
    %v2334 = vshrl.u32 2475754826, %v2331
    %v2335 = vor.u32 %v2333, %v2334
    %v2336 = vshll.u32 2475754826, %v2330
    %v2337 = vshrl.u32 2131351028, %v2331
    %v2338 = vor.u32 %v2336, %v2337
    %v2339 = vshll.u32 2131351028, %v2330
    %v2340 = vshrl.u32 2102212464, %v2331
    %v2341 = vor.u32 %v2339, %v2340
    %v2342 = vshll.u32 2102212464, %v2330
    %v2343 = vshrl.u32 920167782, %v2331
    %v2344 = vor.u32 %v2342, %v2343
    %v2345 = vshll.u32 920167782, %v2330
    %v2346 = vshrl.u32 1326507024, %v2331
    %v2347 = vor.u32 %v2345, %v2346
    %vm2348 = vcmp.lt.s32.totalorder %v2329, 1
    %vm2349 = vcmp.lt.s32.totalorder %v2329, 2
    %vm2350 = vcmp.lt.s32.totalorder %v2329, 3
    %vm2351 = vcmp.lt.s32.totalorder %v2329, 4
    %v2352 = vsel %vm2348, %v2332, %v2335
    %v2353 = vsel %vm2351, %v2341, 2102212464
    %v2354 = vsel %vm2350, %v2338, %v2353
    %v2355 = vsel %vm2349, %v2352, %v2354
    %v2356 = vsel %vm2348, %v2335, %v2338
    %v2357 = vsel %vm2351, %v2344, 920167782
    %v2358 = vsel %vm2350, %v2341, %v2357
    %v2359 = vsel %vm2349, %v2356, %v2358
    %v2360 = vsel %vm2348, %v2338, %v2341
    %v2361 = vsel %vm2351, %v2347, 1326507024
    %v2362 = vsel %vm2350, %v2344, %v2361
    %v2363 = vsel %vm2349, %v2360, %v2362
    %v2364 = vshll.u32 %v2324, 8
    %v2365 = vmul.u32.u64.compose %v2364, %v2363
    %v2366 = vextract.low.u32 %v2365
    %v2367 = vextract.high.u32 %v2365
    %v2368 = vmul.u32.u64.compose %v2364, %v2359
    %v2369 = vextract.low.u32 %v2368
    %v2370 = vextract.high.u32 %v2368
    %v2371 = vmul.u32 %v2364, %v2355
    %v2372 = vadd.s32 %v2367, %v2369
    %vm2373 = vc.u32 %v2367, %v2369
    %v2374 = vadd.s32 %v2370, 1
    %v2375 = vsel %vm2373, %v2374, %v2370
    %v2376 = vadd.s32 %v2371, %v2375
    %v2377 = vadd.s32 %v2376, 536870912
    %v2378 = vshrl.u32 %v2377, 30
    %v2379 = vshll.u32 %v2378, 30
    %v2380 = vsub.s32 %v2376, %v2379
    %vm2381 = vcmp.lt.s32.totalorder %v2380, 0
    %v2382 = vsub.s32 0, %v2380
    %v2383 = vsel %vm2381, %v2382, %v2380
    %v2384 = vclz %v2383
    %v2385 = vsub.s32 %v2384, 2
    %vm2386 = vcmp.gt.s32.totalorder 0, %v2385
    %v2387 = vsel %vm2386, 0, %v2385
    %v2388 = vsub.s32 32, %v2387
    %v2389 = vshll.u32 %v2380, %v2387
    %v2390 = vshrl.u32 %v2372, %v2388
    %v2391 = vor.u32 %v2389, %v2390
    %v2392 = vsub.s32 4294967266, %v2387
    %v2393 = vadd.s32 %v2392, 127
    %v2394 = vshll.u32 %v2393, 23
    %v2395 = vor.u32 4788187, %v2394
    %v2396 = vand.u32 2147483647, %v2395
    %v2398 = vcvt.s32.f32 %v2391
    %v2399 = vmul.f32 %v2398, %v2396
    %v2400 = vxor.u32 %v2399, 2147483648
    %v2401 = vsel %vm2318, %v2400, %v2399
    %v2402 = vsub.s32 4, %v2378
    %v2403 = vsel %vm2318, %v2402, %v2378
    %v2404 = vsel %vm2317, %v430, %v2401
    %v2405 = vsel %vm2317, 0, %v2403
    %v2406 = vcosq.f32.pop %v2404
    %v2407 = vsinq.f32.pop %v2404
    %vm2408 = vweird.f32 %v430
    %v2409 = vadd.s32 %v2405, 3
    %v2410 = vand.u32 %v2409, 3
    %vm2411 = vcmp.lt.s32.totalorder %v2410, 2
    %vm2412 = vcmp.eq.s32.totalorder %v2410, 0
    %v2413 = vxor.u32 %v2407, 2147483648
    %v2414 = vsel %vm2412, %v2406, %v2413
    %vm2415 = vcmp.eq.s32.totalorder %v2410, 2
    %v2416 = vxor.u32 %v2406, 2147483648
    %v2417 = vsel %vm2415, %v2416, %v2407
    %v2418 = vsel %vm2411, %v2414, %v2417
    %v2419 = vsel %vm2408, nan, %v2418
    %v2420 = vand.u32 2147483647, %v431
    %vm2421 = vcmp.le.f32.partialorder %v2420, 0.7853982
    %vm2422 = vcmp.lt.s32.totalorder %v431, 0
    %v2423 = vand.u32 %v431, 2139095040
    %v2424 = vshrl.u32 %v2423, 23
    %v2425 = vsub.s32 %v2424, 127
    %v2426 = vand.u32 2147483647, %v431
    %v2427 = vand.u32 %v2426, 8388607
    %v2428 = vor.u32 %v2427, 8388608
    %v2429 = vsub.s32 0, %v2428
    %v2430 = vadd.s32 %v2425, 1
    %vm2431 = vcmp.gt.s32.totalorder %v2430, 0
    %v2432 = vsel %vm2431, %v2430, 0
    %v2433 = vshrl.u32 %v2432, 5
    %v2434 = vand.u32 %v2432, 31
    %v2435 = vsub.s32 32, %v2434
    %v2436 = vshrl.u32 683565275, %v2435
    %v2437 = vshll.u32 683565275, %v2434
    %v2438 = vshrl.u32 2475754826, %v2435
    %v2439 = vor.u32 %v2437, %v2438
    %v2440 = vshll.u32 2475754826, %v2434
    %v2441 = vshrl.u32 2131351028, %v2435
    %v2442 = vor.u32 %v2440, %v2441
    %v2443 = vshll.u32 2131351028, %v2434
    %v2444 = vshrl.u32 2102212464, %v2435
    %v2445 = vor.u32 %v2443, %v2444
    %v2446 = vshll.u32 2102212464, %v2434
    %v2447 = vshrl.u32 920167782, %v2435
    %v2448 = vor.u32 %v2446, %v2447
    %v2449 = vshll.u32 920167782, %v2434
    %v2450 = vshrl.u32 1326507024, %v2435
    %v2451 = vor.u32 %v2449, %v2450
    %vm2452 = vcmp.lt.s32.totalorder %v2433, 1
    %vm2453 = vcmp.lt.s32.totalorder %v2433, 2
    %vm2454 = vcmp.lt.s32.totalorder %v2433, 3
    %vm2455 = vcmp.lt.s32.totalorder %v2433, 4
    %v2456 = vsel %vm2452, %v2436, %v2439
    %v2457 = vsel %vm2455, %v2445, 2102212464
    %v2458 = vsel %vm2454, %v2442, %v2457
    %v2459 = vsel %vm2453, %v2456, %v2458
    %v2460 = vsel %vm2452, %v2439, %v2442
    %v2461 = vsel %vm2455, %v2448, 920167782
    %v2462 = vsel %vm2454, %v2445, %v2461
    %v2463 = vsel %vm2453, %v2460, %v2462
    %v2464 = vsel %vm2452, %v2442, %v2445
    %v2465 = vsel %vm2455, %v2451, 1326507024
    %v2466 = vsel %vm2454, %v2448, %v2465
    %v2467 = vsel %vm2453, %v2464, %v2466
    %v2468 = vshll.u32 %v2428, 8
    %v2469 = vmul.u32.u64.compose %v2468, %v2467
    %v2470 = vextract.low.u32 %v2469
    %v2471 = vextract.high.u32 %v2469
    %v2472 = vmul.u32.u64.compose %v2468, %v2463
    %v2473 = vextract.low.u32 %v2472
    %v2474 = vextract.high.u32 %v2472
    %v2475 = vmul.u32 %v2468, %v2459
    %v2476 = vadd.s32 %v2471, %v2473
    %vm2477 = vc.u32 %v2471, %v2473
    %v2478 = vadd.s32 %v2474, 1
    %v2479 = vsel %vm2477, %v2478, %v2474
    %v2480 = vadd.s32 %v2475, %v2479
    %v2481 = vadd.s32 %v2480, 536870912
    %v2482 = vshrl.u32 %v2481, 30
    %v2483 = vshll.u32 %v2482, 30
    %v2484 = vsub.s32 %v2480, %v2483
    %vm2485 = vcmp.lt.s32.totalorder %v2484, 0
    %v2486 = vsub.s32 0, %v2484
    %v2487 = vsel %vm2485, %v2486, %v2484
    %v2488 = vclz %v2487
    %v2489 = vsub.s32 %v2488, 2
    %vm2490 = vcmp.gt.s32.totalorder 0, %v2489
    %v2491 = vsel %vm2490, 0, %v2489
    %v2492 = vsub.s32 32, %v2491
    %v2493 = vshll.u32 %v2484, %v2491
    %v2494 = vshrl.u32 %v2476, %v2492
    %v2495 = vor.u32 %v2493, %v2494
    %v2496 = vsub.s32 4294967266, %v2491
    %v2497 = vadd.s32 %v2496, 127
    %v2498 = vshll.u32 %v2497, 23
    %v2499 = vor.u32 4788187, %v2498
    %v2500 = vand.u32 2147483647, %v2499
    %v2502 = vcvt.s32.f32 %v2495
    %v2503 = vmul.f32 %v2502, %v2500
    %v2504 = vxor.u32 %v2503, 2147483648
    %v2505 = vsel %vm2422, %v2504, %v2503
    %v2506 = vsub.s32 4, %v2482
    %v2507 = vsel %vm2422, %v2506, %v2482
    %v2508 = vsel %vm2421, %v431, %v2505
    %v2509 = vsel %vm2421, 0, %v2507
    %v2510 = vcosq.f32.pop %v2508
    %v2511 = vsinq.f32.pop %v2508
    %vm2512 = vweird.f32 %v431
    %v2513 = vadd.s32 %v2509, 3
    %v2514 = vand.u32 %v2513, 3
    %vm2515 = vcmp.lt.s32.totalorder %v2514, 2
    %vm2516 = vcmp.eq.s32.totalorder %v2514, 0
    %v2517 = vxor.u32 %v2511, 2147483648
    %v2518 = vsel %vm2516, %v2510, %v2517
    %vm2519 = vcmp.eq.s32.totalorder %v2514, 2
    %v2520 = vxor.u32 %v2510, 2147483648
    %v2521 = vsel %vm2519, %v2520, %v2511
    %v2522 = vsel %vm2515, %v2518, %v2521
    %v2523 = vsel %vm2512, nan, %v2522
    %v2524 = vand.u32 2147483647, %v432
    %vm2525 = vcmp.le.f32.partialorder %v2524, 0.7853982
    %vm2526 = vcmp.lt.s32.totalorder %v432, 0
    %v2527 = vand.u32 %v432, 2139095040
    %v2528 = vshrl.u32 %v2527, 23
    %v2529 = vsub.s32 %v2528, 127
    %v2530 = vand.u32 2147483647, %v432
    %v2531 = vand.u32 %v2530, 8388607
    %v2532 = vor.u32 %v2531, 8388608
    %v2533 = vsub.s32 0, %v2532
    %v2534 = vadd.s32 %v2529, 1
    %vm2535 = vcmp.gt.s32.totalorder %v2534, 0
    %v2536 = vsel %vm2535, %v2534, 0
    %v2537 = vshrl.u32 %v2536, 5
    %v2538 = vand.u32 %v2536, 31
    %v2539 = vsub.s32 32, %v2538
    %v2540 = vshrl.u32 683565275, %v2539
    %v2541 = vshll.u32 683565275, %v2538
    %v2542 = vshrl.u32 2475754826, %v2539
    %v2543 = vor.u32 %v2541, %v2542
    %v2544 = vshll.u32 2475754826, %v2538
    %v2545 = vshrl.u32 2131351028, %v2539
    %v2546 = vor.u32 %v2544, %v2545
    %v2547 = vshll.u32 2131351028, %v2538
    %v2548 = vshrl.u32 2102212464, %v2539
    %v2549 = vor.u32 %v2547, %v2548
    %v2550 = vshll.u32 2102212464, %v2538
    %v2551 = vshrl.u32 920167782, %v2539
    %v2552 = vor.u32 %v2550, %v2551
    %v2553 = vshll.u32 920167782, %v2538
    %v2554 = vshrl.u32 1326507024, %v2539
    %v2555 = vor.u32 %v2553, %v2554
    %vm2556 = vcmp.lt.s32.totalorder %v2537, 1
    %vm2557 = vcmp.lt.s32.totalorder %v2537, 2
    %vm2558 = vcmp.lt.s32.totalorder %v2537, 3
    %vm2559 = vcmp.lt.s32.totalorder %v2537, 4
    %v2560 = vsel %vm2556, %v2540, %v2543
    %v2561 = vsel %vm2559, %v2549, 2102212464
    %v2562 = vsel %vm2558, %v2546, %v2561
    %v2563 = vsel %vm2557, %v2560, %v2562
    %v2564 = vsel %vm2556, %v2543, %v2546
    %v2565 = vsel %vm2559, %v2552, 920167782
    %v2566 = vsel %vm2558, %v2549, %v2565
    %v2567 = vsel %vm2557, %v2564, %v2566
    %v2568 = vsel %vm2556, %v2546, %v2549
    %v2569 = vsel %vm2559, %v2555, 1326507024
    %v2570 = vsel %vm2558, %v2552, %v2569
    %v2571 = vsel %vm2557, %v2568, %v2570
    %v2572 = vshll.u32 %v2532, 8
    %v2573 = vmul.u32.u64.compose %v2572, %v2571
    %v2574 = vextract.low.u32 %v2573
    %v2575 = vextract.high.u32 %v2573
    %v2576 = vmul.u32.u64.compose %v2572, %v2567
    %v2577 = vextract.low.u32 %v2576
    %v2578 = vextract.high.u32 %v2576
    %v2579 = vmul.u32 %v2572, %v2563
    %v2580 = vadd.s32 %v2575, %v2577
    %vm2581 = vc.u32 %v2575, %v2577
    %v2582 = vadd.s32 %v2578, 1
    %v2583 = vsel %vm2581, %v2582, %v2578
    %v2584 = vadd.s32 %v2579, %v2583
    %v2585 = vadd.s32 %v2584, 536870912
    %v2586 = vshrl.u32 %v2585, 30
    %v2587 = vshll.u32 %v2586, 30
    %v2588 = vsub.s32 %v2584, %v2587
    %vm2589 = vcmp.lt.s32.totalorder %v2588, 0
    %v2590 = vsub.s32 0, %v2588
    %v2591 = vsel %vm2589, %v2590, %v2588
    %v2592 = vclz %v2591
    %v2593 = vsub.s32 %v2592, 2
    %vm2594 = vcmp.gt.s32.totalorder 0, %v2593
    %v2595 = vsel %vm2594, 0, %v2593
    %v2596 = vsub.s32 32, %v2595
    %v2597 = vshll.u32 %v2588, %v2595
    %v2598 = vshrl.u32 %v2580, %v2596
    %v2599 = vor.u32 %v2597, %v2598
    %v2600 = vsub.s32 4294967266, %v2595
    %v2601 = vadd.s32 %v2600, 127
    %v2602 = vshll.u32 %v2601, 23
    %v2603 = vor.u32 4788187, %v2602
    %v2604 = vand.u32 2147483647, %v2603
    %v2606 = vcvt.s32.f32 %v2599
    %v2607 = vmul.f32 %v2606, %v2604
    %v2608 = vxor.u32 %v2607, 2147483648
    %v2609 = vsel %vm2526, %v2608, %v2607
    %v2610 = vsub.s32 4, %v2586
    %v2611 = vsel %vm2526, %v2610, %v2586
    %v2612 = vsel %vm2525, %v432, %v2609
    %v2613 = vsel %vm2525, 0, %v2611
    %v2614 = vcosq.f32.pop %v2612
    %v2615 = vsinq.f32.pop %v2612
    %vm2616 = vweird.f32 %v432
    %v2617 = vadd.s32 %v2613, 3
    %v2618 = vand.u32 %v2617, 3
    %vm2619 = vcmp.lt.s32.totalorder %v2618, 2
    %vm2620 = vcmp.eq.s32.totalorder %v2618, 0
    %v2621 = vxor.u32 %v2615, 2147483648
    %v2622 = vsel %vm2620, %v2614, %v2621
    %vm2623 = vcmp.eq.s32.totalorder %v2618, 2
    %v2624 = vxor.u32 %v2614, 2147483648
    %v2625 = vsel %vm2623, %v2624, %v2615
    %v2626 = vsel %vm2619, %v2622, %v2625
    %v2627 = vsel %vm2616, nan, %v2626
    %v2628 = vand.u32 2147483647, %v433
    %vm2629 = vcmp.le.f32.partialorder %v2628, 0.7853982
    %vm2630 = vcmp.lt.s32.totalorder %v433, 0
    %v2631 = vand.u32 %v433, 2139095040
    %v2632 = vshrl.u32 %v2631, 23
    %v2633 = vsub.s32 %v2632, 127
    %v2634 = vand.u32 2147483647, %v433
    %v2635 = vand.u32 %v2634, 8388607
    %v2636 = vor.u32 %v2635, 8388608
    %v2637 = vsub.s32 0, %v2636
    %v2638 = vadd.s32 %v2633, 1
    %vm2639 = vcmp.gt.s32.totalorder %v2638, 0
    %v2640 = vsel %vm2639, %v2638, 0
    %v2641 = vshrl.u32 %v2640, 5
    %v2642 = vand.u32 %v2640, 31
    %v2643 = vsub.s32 32, %v2642
    %v2644 = vshrl.u32 683565275, %v2643
    %v2645 = vshll.u32 683565275, %v2642
    %v2646 = vshrl.u32 2475754826, %v2643
    %v2647 = vor.u32 %v2645, %v2646
    %v2648 = vshll.u32 2475754826, %v2642
    %v2649 = vshrl.u32 2131351028, %v2643
    %v2650 = vor.u32 %v2648, %v2649
    %v2651 = vshll.u32 2131351028, %v2642
    %v2652 = vshrl.u32 2102212464, %v2643
    %v2653 = vor.u32 %v2651, %v2652
    %v2654 = vshll.u32 2102212464, %v2642
    %v2655 = vshrl.u32 920167782, %v2643
    %v2656 = vor.u32 %v2654, %v2655
    %v2657 = vshll.u32 920167782, %v2642
    %v2658 = vshrl.u32 1326507024, %v2643
    %v2659 = vor.u32 %v2657, %v2658
    %vm2660 = vcmp.lt.s32.totalorder %v2641, 1
    %vm2661 = vcmp.lt.s32.totalorder %v2641, 2
    %vm2662 = vcmp.lt.s32.totalorder %v2641, 3
    %vm2663 = vcmp.lt.s32.totalorder %v2641, 4
    %v2664 = vsel %vm2660, %v2644, %v2647
    %v2665 = vsel %vm2663, %v2653, 2102212464
    %v2666 = vsel %vm2662, %v2650, %v2665
    %v2667 = vsel %vm2661, %v2664, %v2666
    %v2668 = vsel %vm2660, %v2647, %v2650
    %v2669 = vsel %vm2663, %v2656, 920167782
    %v2670 = vsel %vm2662, %v2653, %v2669
    %v2671 = vsel %vm2661, %v2668, %v2670
    %v2672 = vsel %vm2660, %v2650, %v2653
    %v2673 = vsel %vm2663, %v2659, 1326507024
    %v2674 = vsel %vm2662, %v2656, %v2673
    %v2675 = vsel %vm2661, %v2672, %v2674
    %v2676 = vshll.u32 %v2636, 8
    %v2677 = vmul.u32.u64.compose %v2676, %v2675
    %v2678 = vextract.low.u32 %v2677
    %v2679 = vextract.high.u32 %v2677
    %v2680 = vmul.u32.u64.compose %v2676, %v2671
    %v2681 = vextract.low.u32 %v2680
    %v2682 = vextract.high.u32 %v2680
    %v2683 = vmul.u32 %v2676, %v2667
    %v2684 = vadd.s32 %v2679, %v2681
    %vm2685 = vc.u32 %v2679, %v2681
    %v2686 = vadd.s32 %v2682, 1
    %v2687 = vsel %vm2685, %v2686, %v2682
    %v2688 = vadd.s32 %v2683, %v2687
    %v2689 = vadd.s32 %v2688, 536870912
    %v2690 = vshrl.u32 %v2689, 30
    %v2691 = vshll.u32 %v2690, 30
    %v2692 = vsub.s32 %v2688, %v2691
    %vm2693 = vcmp.lt.s32.totalorder %v2692, 0
    %v2694 = vsub.s32 0, %v2692
    %v2695 = vsel %vm2693, %v2694, %v2692
    %v2696 = vclz %v2695
    %v2697 = vsub.s32 %v2696, 2
    %vm2698 = vcmp.gt.s32.totalorder 0, %v2697
    %v2699 = vsel %vm2698, 0, %v2697
    %v2700 = vsub.s32 32, %v2699
    %v2701 = vshll.u32 %v2692, %v2699
    %v2702 = vshrl.u32 %v2684, %v2700
    %v2703 = vor.u32 %v2701, %v2702
    %v2704 = vsub.s32 4294967266, %v2699
    %v2705 = vadd.s32 %v2704, 127
    %v2706 = vshll.u32 %v2705, 23
    %v2707 = vor.u32 4788187, %v2706
    %v2708 = vand.u32 2147483647, %v2707
    %v2710 = vcvt.s32.f32 %v2703
    %v2711 = vmul.f32 %v2710, %v2708
    %v2712 = vxor.u32 %v2711, 2147483648
    %v2713 = vsel %vm2630, %v2712, %v2711
    %v2714 = vsub.s32 4, %v2690
    %v2715 = vsel %vm2630, %v2714, %v2690
    %v2716 = vsel %vm2629, %v433, %v2713
    %v2717 = vsel %vm2629, 0, %v2715
    %v2718 = vcosq.f32.pop %v2716
    %v2719 = vsinq.f32.pop %v2716
    %vm2720 = vweird.f32 %v433
    %v2721 = vadd.s32 %v2717, 3
    %v2722 = vand.u32 %v2721, 3
    %vm2723 = vcmp.lt.s32.totalorder %v2722, 2
    %vm2724 = vcmp.eq.s32.totalorder %v2722, 0
    %v2725 = vxor.u32 %v2719, 2147483648
    %v2726 = vsel %vm2724, %v2718, %v2725
    %vm2727 = vcmp.eq.s32.totalorder %v2722, 2
    %v2728 = vxor.u32 %v2718, 2147483648
    %v2729 = vsel %vm2727, %v2728, %v2719
    %v2730 = vsel %vm2723, %v2726, %v2729
    %v2731 = vsel %vm2720, nan, %v2730
    %v2732 = vand.u32 2147483647, %v434
    %vm2733 = vcmp.le.f32.partialorder %v2732, 0.7853982
    %vm2734 = vcmp.lt.s32.totalorder %v434, 0
    %v2735 = vand.u32 %v434, 2139095040
    %v2736 = vshrl.u32 %v2735, 23
    %v2737 = vsub.s32 %v2736, 127
    %v2738 = vand.u32 2147483647, %v434
    %v2739 = vand.u32 %v2738, 8388607
    %v2740 = vor.u32 %v2739, 8388608
    %v2741 = vsub.s32 0, %v2740
    %v2742 = vadd.s32 %v2737, 1
    %vm2743 = vcmp.gt.s32.totalorder %v2742, 0
    %v2744 = vsel %vm2743, %v2742, 0
    %v2745 = vshrl.u32 %v2744, 5
    %v2746 = vand.u32 %v2744, 31
    %v2747 = vsub.s32 32, %v2746
    %v2748 = vshrl.u32 683565275, %v2747
    %v2749 = vshll.u32 683565275, %v2746
    %v2750 = vshrl.u32 2475754826, %v2747
    %v2751 = vor.u32 %v2749, %v2750
    %v2752 = vshll.u32 2475754826, %v2746
    %v2753 = vshrl.u32 2131351028, %v2747
    %v2754 = vor.u32 %v2752, %v2753
    %v2755 = vshll.u32 2131351028, %v2746
    %v2756 = vshrl.u32 2102212464, %v2747
    %v2757 = vor.u32 %v2755, %v2756
    %v2758 = vshll.u32 2102212464, %v2746
    %v2759 = vshrl.u32 920167782, %v2747
    %v2760 = vor.u32 %v2758, %v2759
    %v2761 = vshll.u32 920167782, %v2746
    %v2762 = vshrl.u32 1326507024, %v2747
    %v2763 = vor.u32 %v2761, %v2762
    %vm2764 = vcmp.lt.s32.totalorder %v2745, 1
    %vm2765 = vcmp.lt.s32.totalorder %v2745, 2
    %vm2766 = vcmp.lt.s32.totalorder %v2745, 3
    %vm2767 = vcmp.lt.s32.totalorder %v2745, 4
    %v2768 = vsel %vm2764, %v2748, %v2751
    %v2769 = vsel %vm2767, %v2757, 2102212464
    %v2770 = vsel %vm2766, %v2754, %v2769
    %v2771 = vsel %vm2765, %v2768, %v2770
    %v2772 = vsel %vm2764, %v2751, %v2754
    %v2773 = vsel %vm2767, %v2760, 920167782
    %v2774 = vsel %vm2766, %v2757, %v2773
    %v2775 = vsel %vm2765, %v2772, %v2774
    %v2776 = vsel %vm2764, %v2754, %v2757
    %v2777 = vsel %vm2767, %v2763, 1326507024
    %v2778 = vsel %vm2766, %v2760, %v2777
    %v2779 = vsel %vm2765, %v2776, %v2778
    %v2780 = vshll.u32 %v2740, 8
    %v2781 = vmul.u32.u64.compose %v2780, %v2779
    %v2782 = vextract.low.u32 %v2781
    %v2783 = vextract.high.u32 %v2781
    %v2784 = vmul.u32.u64.compose %v2780, %v2775
    %v2785 = vextract.low.u32 %v2784
    %v2786 = vextract.high.u32 %v2784
    %v2787 = vmul.u32 %v2780, %v2771
    %v2788 = vadd.s32 %v2783, %v2785
    %vm2789 = vc.u32 %v2783, %v2785
    %v2790 = vadd.s32 %v2786, 1
    %v2791 = vsel %vm2789, %v2790, %v2786
    %v2792 = vadd.s32 %v2787, %v2791
    %v2793 = vadd.s32 %v2792, 536870912
    %v2794 = vshrl.u32 %v2793, 30
    %v2795 = vshll.u32 %v2794, 30
    %v2796 = vsub.s32 %v2792, %v2795
    %vm2797 = vcmp.lt.s32.totalorder %v2796, 0
    %v2798 = vsub.s32 0, %v2796
    %v2799 = vsel %vm2797, %v2798, %v2796
    %v2800 = vclz %v2799
    %v2801 = vsub.s32 %v2800, 2
    %vm2802 = vcmp.gt.s32.totalorder 0, %v2801
    %v2803 = vsel %vm2802, 0, %v2801
    %v2804 = vsub.s32 32, %v2803
    %v2805 = vshll.u32 %v2796, %v2803
    %v2806 = vshrl.u32 %v2788, %v2804
    %v2807 = vor.u32 %v2805, %v2806
    %v2808 = vsub.s32 4294967266, %v2803
    %v2809 = vadd.s32 %v2808, 127
    %v2810 = vshll.u32 %v2809, 23
    %v2811 = vor.u32 4788187, %v2810
    %v2812 = vand.u32 2147483647, %v2811
    %v2814 = vcvt.s32.f32 %v2807
    %v2815 = vmul.f32 %v2814, %v2812
    %v2816 = vxor.u32 %v2815, 2147483648
    %v2817 = vsel %vm2734, %v2816, %v2815
    %v2818 = vsub.s32 4, %v2794
    %v2819 = vsel %vm2734, %v2818, %v2794
    %v2820 = vsel %vm2733, %v434, %v2817
    %v2821 = vsel %vm2733, 0, %v2819
    %v2822 = vcosq.f32.pop %v2820
    %v2823 = vsinq.f32.pop %v2820
    %vm2824 = vweird.f32 %v434
    %v2825 = vadd.s32 %v2821, 3
    %v2826 = vand.u32 %v2825, 3
    %vm2827 = vcmp.lt.s32.totalorder %v2826, 2
    %vm2828 = vcmp.eq.s32.totalorder %v2826, 0
    %v2829 = vxor.u32 %v2823, 2147483648
    %v2830 = vsel %vm2828, %v2822, %v2829
    %vm2831 = vcmp.eq.s32.totalorder %v2826, 2
    %v2832 = vxor.u32 %v2822, 2147483648
    %v2833 = vsel %vm2831, %v2832, %v2823
    %v2834 = vsel %vm2827, %v2830, %v2833
    %v2835 = vsel %vm2824, nan, %v2834
    %v2836 = vand.u32 2147483647, %v435
    %vm2837 = vcmp.le.f32.partialorder %v2836, 0.7853982
    %vm2838 = vcmp.lt.s32.totalorder %v435, 0
    %v2839 = vand.u32 %v435, 2139095040
    %v2840 = vshrl.u32 %v2839, 23
    %v2841 = vsub.s32 %v2840, 127
    %v2842 = vand.u32 2147483647, %v435
    %v2843 = vand.u32 %v2842, 8388607
    %v2844 = vor.u32 %v2843, 8388608
    %v2845 = vsub.s32 0, %v2844
    %v2846 = vadd.s32 %v2841, 1
    %vm2847 = vcmp.gt.s32.totalorder %v2846, 0
    %v2848 = vsel %vm2847, %v2846, 0
    %v2849 = vshrl.u32 %v2848, 5
    %v2850 = vand.u32 %v2848, 31
    %v2851 = vsub.s32 32, %v2850
    %v2852 = vshrl.u32 683565275, %v2851
    %v2853 = vshll.u32 683565275, %v2850
    %v2854 = vshrl.u32 2475754826, %v2851
    %v2855 = vor.u32 %v2853, %v2854
    %v2856 = vshll.u32 2475754826, %v2850
    %v2857 = vshrl.u32 2131351028, %v2851
    %v2858 = vor.u32 %v2856, %v2857
    %v2859 = vshll.u32 2131351028, %v2850
    %v2860 = vshrl.u32 2102212464, %v2851
    %v2861 = vor.u32 %v2859, %v2860
    %v2862 = vshll.u32 2102212464, %v2850
    %v2863 = vshrl.u32 920167782, %v2851
    %v2864 = vor.u32 %v2862, %v2863
    %v2865 = vshll.u32 920167782, %v2850
    %v2866 = vshrl.u32 1326507024, %v2851
    %v2867 = vor.u32 %v2865, %v2866
    %vm2868 = vcmp.lt.s32.totalorder %v2849, 1
    %vm2869 = vcmp.lt.s32.totalorder %v2849, 2
    %vm2870 = vcmp.lt.s32.totalorder %v2849, 3
    %vm2871 = vcmp.lt.s32.totalorder %v2849, 4
    %v2872 = vsel %vm2868, %v2852, %v2855
    %v2873 = vsel %vm2871, %v2861, 2102212464
    %v2874 = vsel %vm2870, %v2858, %v2873
    %v2875 = vsel %vm2869, %v2872, %v2874
    %v2876 = vsel %vm2868, %v2855, %v2858
    %v2877 = vsel %vm2871, %v2864, 920167782
    %v2878 = vsel %vm2870, %v2861, %v2877
    %v2879 = vsel %vm2869, %v2876, %v2878
    %v2880 = vsel %vm2868, %v2858, %v2861
    %v2881 = vsel %vm2871, %v2867, 1326507024
    %v2882 = vsel %vm2870, %v2864, %v2881
    %v2883 = vsel %vm2869, %v2880, %v2882
    %v2884 = vshll.u32 %v2844, 8
    %v2885 = vmul.u32.u64.compose %v2884, %v2883
    %v2886 = vextract.low.u32 %v2885
    %v2887 = vextract.high.u32 %v2885
    %v2888 = vmul.u32.u64.compose %v2884, %v2879
    %v2889 = vextract.low.u32 %v2888
    %v2890 = vextract.high.u32 %v2888
    %v2891 = vmul.u32 %v2884, %v2875
    %v2892 = vadd.s32 %v2887, %v2889
    %vm2893 = vc.u32 %v2887, %v2889
    %v2894 = vadd.s32 %v2890, 1
    %v2895 = vsel %vm2893, %v2894, %v2890
    %v2896 = vadd.s32 %v2891, %v2895
    %v2897 = vadd.s32 %v2896, 536870912
    %v2898 = vshrl.u32 %v2897, 30
    %v2899 = vshll.u32 %v2898, 30
    %v2900 = vsub.s32 %v2896, %v2899
    %vm2901 = vcmp.lt.s32.totalorder %v2900, 0
    %v2902 = vsub.s32 0, %v2900
    %v2903 = vsel %vm2901, %v2902, %v2900
    %v2904 = vclz %v2903
    %v2905 = vsub.s32 %v2904, 2
    %vm2906 = vcmp.gt.s32.totalorder 0, %v2905
    %v2907 = vsel %vm2906, 0, %v2905
    %v2908 = vsub.s32 32, %v2907
    %v2909 = vshll.u32 %v2900, %v2907
    %v2910 = vshrl.u32 %v2892, %v2908
    %v2911 = vor.u32 %v2909, %v2910
    %v2912 = vsub.s32 4294967266, %v2907
    %v2913 = vadd.s32 %v2912, 127
    %v2914 = vshll.u32 %v2913, 23
    %v2915 = vor.u32 4788187, %v2914
    %v2916 = vand.u32 2147483647, %v2915
    %v2918 = vcvt.s32.f32 %v2911
    %v2919 = vmul.f32 %v2918, %v2916
    %v2920 = vxor.u32 %v2919, 2147483648
    %v2921 = vsel %vm2838, %v2920, %v2919
    %v2922 = vsub.s32 4, %v2898
    %v2923 = vsel %vm2838, %v2922, %v2898
    %v2924 = vsel %vm2837, %v435, %v2921
    %v2925 = vsel %vm2837, 0, %v2923
    %v2926 = vcosq.f32.pop %v2924
    %v2927 = vsinq.f32.pop %v2924
    %vm2928 = vweird.f32 %v435
    %v2929 = vadd.s32 %v2925, 3
    %v2930 = vand.u32 %v2929, 3
    %vm2931 = vcmp.lt.s32.totalorder %v2930, 2
    %vm2932 = vcmp.eq.s32.totalorder %v2930, 0
    %v2933 = vxor.u32 %v2927, 2147483648
    %v2934 = vsel %vm2932, %v2926, %v2933
    %vm2935 = vcmp.eq.s32.totalorder %v2930, 2
    %v2936 = vxor.u32 %v2926, 2147483648
    %v2937 = vsel %vm2935, %v2936, %v2927
    %v2938 = vsel %vm2931, %v2934, %v2937
    %v2939 = vsel %vm2928, nan, %v2938
    %v2940 = vand.u32 2147483647, %v436
    %vm2941 = vcmp.le.f32.partialorder %v2940, 0.7853982
    %vm2942 = vcmp.lt.s32.totalorder %v436, 0
    %v2943 = vand.u32 %v436, 2139095040
    %v2944 = vshrl.u32 %v2943, 23
    %v2945 = vsub.s32 %v2944, 127
    %v2946 = vand.u32 2147483647, %v436
    %v2947 = vand.u32 %v2946, 8388607
    %v2948 = vor.u32 %v2947, 8388608
    %v2949 = vsub.s32 0, %v2948
    %v2950 = vadd.s32 %v2945, 1
    %vm2951 = vcmp.gt.s32.totalorder %v2950, 0
    %v2952 = vsel %vm2951, %v2950, 0
    %v2953 = vshrl.u32 %v2952, 5
    %v2954 = vand.u32 %v2952, 31
    %v2955 = vsub.s32 32, %v2954
    %v2956 = vshrl.u32 683565275, %v2955
    %v2957 = vshll.u32 683565275, %v2954
    %v2958 = vshrl.u32 2475754826, %v2955
    %v2959 = vor.u32 %v2957, %v2958
    %v2960 = vshll.u32 2475754826, %v2954
    %v2961 = vshrl.u32 2131351028, %v2955
    %v2962 = vor.u32 %v2960, %v2961
    %v2963 = vshll.u32 2131351028, %v2954
    %v2964 = vshrl.u32 2102212464, %v2955
    %v2965 = vor.u32 %v2963, %v2964
    %v2966 = vshll.u32 2102212464, %v2954
    %v2967 = vshrl.u32 920167782, %v2955
    %v2968 = vor.u32 %v2966, %v2967
    %v2969 = vshll.u32 920167782, %v2954
    %v2970 = vshrl.u32 1326507024, %v2955
    %v2971 = vor.u32 %v2969, %v2970
    %vm2972 = vcmp.lt.s32.totalorder %v2953, 1
    %vm2973 = vcmp.lt.s32.totalorder %v2953, 2
    %vm2974 = vcmp.lt.s32.totalorder %v2953, 3
    %vm2975 = vcmp.lt.s32.totalorder %v2953, 4
    %v2976 = vsel %vm2972, %v2956, %v2959
    %v2977 = vsel %vm2975, %v2965, 2102212464
    %v2978 = vsel %vm2974, %v2962, %v2977
    %v2979 = vsel %vm2973, %v2976, %v2978
    %v2980 = vsel %vm2972, %v2959, %v2962
    %v2981 = vsel %vm2975, %v2968, 920167782
    %v2982 = vsel %vm2974, %v2965, %v2981
    %v2983 = vsel %vm2973, %v2980, %v2982
    %v2984 = vsel %vm2972, %v2962, %v2965
    %v2985 = vsel %vm2975, %v2971, 1326507024
    %v2986 = vsel %vm2974, %v2968, %v2985
    %v2987 = vsel %vm2973, %v2984, %v2986
    %v2988 = vshll.u32 %v2948, 8
    %v2989 = vmul.u32.u64.compose %v2988, %v2987
    %v2990 = vextract.low.u32 %v2989
    %v2991 = vextract.high.u32 %v2989
    %v2992 = vmul.u32.u64.compose %v2988, %v2983
    %v2993 = vextract.low.u32 %v2992
    %v2994 = vextract.high.u32 %v2992
    %v2995 = vmul.u32 %v2988, %v2979
    %v2996 = vadd.s32 %v2991, %v2993
    %vm2997 = vc.u32 %v2991, %v2993
    %v2998 = vadd.s32 %v2994, 1
    %v2999 = vsel %vm2997, %v2998, %v2994
    %v3000 = vadd.s32 %v2995, %v2999
    %v3001 = vadd.s32 %v3000, 536870912
    %v3002 = vshrl.u32 %v3001, 30
    %v3003 = vshll.u32 %v3002, 30
    %v3004 = vsub.s32 %v3000, %v3003
    %vm3005 = vcmp.lt.s32.totalorder %v3004, 0
    %v3006 = vsub.s32 0, %v3004
    %v3007 = vsel %vm3005, %v3006, %v3004
    %v3008 = vclz %v3007
    %v3009 = vsub.s32 %v3008, 2
    %vm3010 = vcmp.gt.s32.totalorder 0, %v3009
    %v3011 = vsel %vm3010, 0, %v3009
    %v3012 = vsub.s32 32, %v3011
    %v3013 = vshll.u32 %v3004, %v3011
    %v3014 = vshrl.u32 %v2996, %v3012
    %v3015 = vor.u32 %v3013, %v3014
    %v3016 = vsub.s32 4294967266, %v3011
    %v3017 = vadd.s32 %v3016, 127
    %v3018 = vshll.u32 %v3017, 23
    %v3019 = vor.u32 4788187, %v3018
    %v3020 = vand.u32 2147483647, %v3019
    %v3022 = vcvt.s32.f32 %v3015
    %v3023 = vmul.f32 %v3022, %v3020
    %v3024 = vxor.u32 %v3023, 2147483648
    %v3025 = vsel %vm2942, %v3024, %v3023
    %v3026 = vsub.s32 4, %v3002
    %v3027 = vsel %vm2942, %v3026, %v3002
    %v3028 = vsel %vm2941, %v436, %v3025
    %v3029 = vsel %vm2941, 0, %v3027
    %v3030 = vcosq.f32.pop %v3028
    %v3031 = vsinq.f32.pop %v3028
    %vm3032 = vweird.f32 %v436
    %v3033 = vadd.s32 %v3029, 3
    %v3034 = vand.u32 %v3033, 3
    %vm3035 = vcmp.lt.s32.totalorder %v3034, 2
    %vm3036 = vcmp.eq.s32.totalorder %v3034, 0
    %v3037 = vxor.u32 %v3031, 2147483648
    %v3038 = vsel %vm3036, %v3030, %v3037
    %vm3039 = vcmp.eq.s32.totalorder %v3034, 2
    %v3040 = vxor.u32 %v3030, 2147483648
    %v3041 = vsel %vm3039, %v3040, %v3031
    %v3042 = vsel %vm3035, %v3038, %v3041
    %v3043 = vsel %vm3032, nan, %v3042
    %v3044 = vand.u32 2147483647, %v437
    %vm3045 = vcmp.le.f32.partialorder %v3044, 0.7853982
    %vm3046 = vcmp.lt.s32.totalorder %v437, 0
    %v3047 = vand.u32 %v437, 2139095040
    %v3048 = vshrl.u32 %v3047, 23
    %v3049 = vsub.s32 %v3048, 127
    %v3050 = vand.u32 2147483647, %v437
    %v3051 = vand.u32 %v3050, 8388607
    %v3052 = vor.u32 %v3051, 8388608
    %v3053 = vsub.s32 0, %v3052
    %v3054 = vadd.s32 %v3049, 1
    %vm3055 = vcmp.gt.s32.totalorder %v3054, 0
    %v3056 = vsel %vm3055, %v3054, 0
    %v3057 = vshrl.u32 %v3056, 5
    %v3058 = vand.u32 %v3056, 31
    %v3059 = vsub.s32 32, %v3058
    %v3060 = vshrl.u32 683565275, %v3059
    %v3061 = vshll.u32 683565275, %v3058
    %v3062 = vshrl.u32 2475754826, %v3059
    %v3063 = vor.u32 %v3061, %v3062
    %v3064 = vshll.u32 2475754826, %v3058
    %v3065 = vshrl.u32 2131351028, %v3059
    %v3066 = vor.u32 %v3064, %v3065
    %v3067 = vshll.u32 2131351028, %v3058
    %v3068 = vshrl.u32 2102212464, %v3059
    %v3069 = vor.u32 %v3067, %v3068
    %v3070 = vshll.u32 2102212464, %v3058
    %v3071 = vshrl.u32 920167782, %v3059
    %v3072 = vor.u32 %v3070, %v3071
    %v3073 = vshll.u32 920167782, %v3058
    %v3074 = vshrl.u32 1326507024, %v3059
    %v3075 = vor.u32 %v3073, %v3074
    %vm3076 = vcmp.lt.s32.totalorder %v3057, 1
    %vm3077 = vcmp.lt.s32.totalorder %v3057, 2
    %vm3078 = vcmp.lt.s32.totalorder %v3057, 3
    %vm3079 = vcmp.lt.s32.totalorder %v3057, 4
    %v3080 = vsel %vm3076, %v3060, %v3063
    %v3081 = vsel %vm3079, %v3069, 2102212464
    %v3082 = vsel %vm3078, %v3066, %v3081
    %v3083 = vsel %vm3077, %v3080, %v3082
    %v3084 = vsel %vm3076, %v3063, %v3066
    %v3085 = vsel %vm3079, %v3072, 920167782
    %v3086 = vsel %vm3078, %v3069, %v3085
    %v3087 = vsel %vm3077, %v3084, %v3086
    %v3088 = vsel %vm3076, %v3066, %v3069
    %v3089 = vsel %vm3079, %v3075, 1326507024
    %v3090 = vsel %vm3078, %v3072, %v3089
    %v3091 = vsel %vm3077, %v3088, %v3090
    %v3092 = vshll.u32 %v3052, 8
    %v3093 = vmul.u32.u64.compose %v3092, %v3091
    %v3094 = vextract.low.u32 %v3093
    %v3095 = vextract.high.u32 %v3093
    %v3096 = vmul.u32.u64.compose %v3092, %v3087
    %v3097 = vextract.low.u32 %v3096
    %v3098 = vextract.high.u32 %v3096
    %v3099 = vmul.u32 %v3092, %v3083
    %v3100 = vadd.s32 %v3095, %v3097
    %vm3101 = vc.u32 %v3095, %v3097
    %v3102 = vadd.s32 %v3098, 1
    %v3103 = vsel %vm3101, %v3102, %v3098
    %v3104 = vadd.s32 %v3099, %v3103
    %v3105 = vadd.s32 %v3104, 536870912
    %v3106 = vshrl.u32 %v3105, 30
    %v3107 = vshll.u32 %v3106, 30
    %v3108 = vsub.s32 %v3104, %v3107
    %vm3109 = vcmp.lt.s32.totalorder %v3108, 0
    %v3110 = vsub.s32 0, %v3108
    %v3111 = vsel %vm3109, %v3110, %v3108
    %v3112 = vclz %v3111
    %v3113 = vsub.s32 %v3112, 2
    %vm3114 = vcmp.gt.s32.totalorder 0, %v3113
    %v3115 = vsel %vm3114, 0, %v3113
    %v3116 = vsub.s32 32, %v3115
    %v3117 = vshll.u32 %v3108, %v3115
    %v3118 = vshrl.u32 %v3100, %v3116
    %v3119 = vor.u32 %v3117, %v3118
    %v3120 = vsub.s32 4294967266, %v3115
    %v3121 = vadd.s32 %v3120, 127
    %v3122 = vshll.u32 %v3121, 23
    %v3123 = vor.u32 4788187, %v3122
    %v3124 = vand.u32 2147483647, %v3123
    %v3126 = vcvt.s32.f32 %v3119
    %v3127 = vmul.f32 %v3126, %v3124
    %v3128 = vxor.u32 %v3127, 2147483648
    %v3129 = vsel %vm3046, %v3128, %v3127
    %v3130 = vsub.s32 4, %v3106
    %v3131 = vsel %vm3046, %v3130, %v3106
    %v3132 = vsel %vm3045, %v437, %v3129
    %v3133 = vsel %vm3045, 0, %v3131
    %v3134 = vcosq.f32.pop %v3132
    %v3135 = vsinq.f32.pop %v3132
    %vm3136 = vweird.f32 %v437
    %v3137 = vadd.s32 %v3133, 3
    %v3138 = vand.u32 %v3137, 3
    %vm3139 = vcmp.lt.s32.totalorder %v3138, 2
    %vm3140 = vcmp.eq.s32.totalorder %v3138, 0
    %v3141 = vxor.u32 %v3135, 2147483648
    %v3142 = vsel %vm3140, %v3134, %v3141
    %vm3143 = vcmp.eq.s32.totalorder %v3138, 2
    %v3144 = vxor.u32 %v3134, 2147483648
    %v3145 = vsel %vm3143, %v3144, %v3135
    %v3146 = vsel %vm3139, %v3142, %v3145
    %v3147 = vsel %vm3136, nan, %v3146
    %v3148 = vand.u32 2147483647, %v438
    %vm3149 = vcmp.le.f32.partialorder %v3148, 0.7853982
    %vm3150 = vcmp.lt.s32.totalorder %v438, 0
    %v3151 = vand.u32 %v438, 2139095040
    %v3152 = vshrl.u32 %v3151, 23
    %v3153 = vsub.s32 %v3152, 127
    %v3154 = vand.u32 2147483647, %v438
    %v3155 = vand.u32 %v3154, 8388607
    %v3156 = vor.u32 %v3155, 8388608
    %v3157 = vsub.s32 0, %v3156
    %v3158 = vadd.s32 %v3153, 1
    %vm3159 = vcmp.gt.s32.totalorder %v3158, 0
    %v3160 = vsel %vm3159, %v3158, 0
    %v3161 = vshrl.u32 %v3160, 5
    %v3162 = vand.u32 %v3160, 31
    %v3163 = vsub.s32 32, %v3162
    %v3164 = vshrl.u32 683565275, %v3163
    %v3165 = vshll.u32 683565275, %v3162
    %v3166 = vshrl.u32 2475754826, %v3163
    %v3167 = vor.u32 %v3165, %v3166
    %v3168 = vshll.u32 2475754826, %v3162
    %v3169 = vshrl.u32 2131351028, %v3163
    %v3170 = vor.u32 %v3168, %v3169
    %v3171 = vshll.u32 2131351028, %v3162
    %v3172 = vshrl.u32 2102212464, %v3163
    %v3173 = vor.u32 %v3171, %v3172
    %v3174 = vshll.u32 2102212464, %v3162
    %v3175 = vshrl.u32 920167782, %v3163
    %v3176 = vor.u32 %v3174, %v3175
    %v3177 = vshll.u32 920167782, %v3162
    %v3178 = vshrl.u32 1326507024, %v3163
    %v3179 = vor.u32 %v3177, %v3178
    %vm3180 = vcmp.lt.s32.totalorder %v3161, 1
    %vm3181 = vcmp.lt.s32.totalorder %v3161, 2
    %vm3182 = vcmp.lt.s32.totalorder %v3161, 3
    %vm3183 = vcmp.lt.s32.totalorder %v3161, 4
    %v3184 = vsel %vm3180, %v3164, %v3167
    %v3185 = vsel %vm3183, %v3173, 2102212464
    %v3186 = vsel %vm3182, %v3170, %v3185
    %v3187 = vsel %vm3181, %v3184, %v3186
    %v3188 = vsel %vm3180, %v3167, %v3170
    %v3189 = vsel %vm3183, %v3176, 920167782
    %v3190 = vsel %vm3182, %v3173, %v3189
    %v3191 = vsel %vm3181, %v3188, %v3190
    %v3192 = vsel %vm3180, %v3170, %v3173
    %v3193 = vsel %vm3183, %v3179, 1326507024
    %v3194 = vsel %vm3182, %v3176, %v3193
    %v3195 = vsel %vm3181, %v3192, %v3194
    %v3196 = vshll.u32 %v3156, 8
    %v3197 = vmul.u32.u64.compose %v3196, %v3195
    %v3198 = vextract.low.u32 %v3197
    %v3199 = vextract.high.u32 %v3197
    %v3200 = vmul.u32.u64.compose %v3196, %v3191
    %v3201 = vextract.low.u32 %v3200
    %v3202 = vextract.high.u32 %v3200
    %v3203 = vmul.u32 %v3196, %v3187
    %v3204 = vadd.s32 %v3199, %v3201
    %vm3205 = vc.u32 %v3199, %v3201
    %v3206 = vadd.s32 %v3202, 1
    %v3207 = vsel %vm3205, %v3206, %v3202
    %v3208 = vadd.s32 %v3203, %v3207
    %v3209 = vadd.s32 %v3208, 536870912
    %v3210 = vshrl.u32 %v3209, 30
    %v3211 = vshll.u32 %v3210, 30
    %v3212 = vsub.s32 %v3208, %v3211
    %vm3213 = vcmp.lt.s32.totalorder %v3212, 0
    %v3214 = vsub.s32 0, %v3212
    %v3215 = vsel %vm3213, %v3214, %v3212
    %v3216 = vclz %v3215
    %v3217 = vsub.s32 %v3216, 2
    %vm3218 = vcmp.gt.s32.totalorder 0, %v3217
    %v3219 = vsel %vm3218, 0, %v3217
    %v3220 = vsub.s32 32, %v3219
    %v3221 = vshll.u32 %v3212, %v3219
    %v3222 = vshrl.u32 %v3204, %v3220
    %v3223 = vor.u32 %v3221, %v3222
    %v3224 = vsub.s32 4294967266, %v3219
    %v3225 = vadd.s32 %v3224, 127
    %v3226 = vshll.u32 %v3225, 23
    %v3227 = vor.u32 4788187, %v3226
    %v3228 = vand.u32 2147483647, %v3227
    %v3230 = vcvt.s32.f32 %v3223
    %v3231 = vmul.f32 %v3230, %v3228
    %v3232 = vxor.u32 %v3231, 2147483648
    %v3233 = vsel %vm3150, %v3232, %v3231
    %v3234 = vsub.s32 4, %v3210
    %v3235 = vsel %vm3150, %v3234, %v3210
    %v3236 = vsel %vm3149, %v438, %v3233
    %v3237 = vsel %vm3149, 0, %v3235
    %v3238 = vcosq.f32.pop %v3236
    %v3239 = vsinq.f32.pop %v3236
    %vm3240 = vweird.f32 %v438
    %v3241 = vadd.s32 %v3237, 3
    %v3242 = vand.u32 %v3241, 3
    %vm3243 = vcmp.lt.s32.totalorder %v3242, 2
    %vm3244 = vcmp.eq.s32.totalorder %v3242, 0
    %v3245 = vxor.u32 %v3239, 2147483648
    %v3246 = vsel %vm3244, %v3238, %v3245
    %vm3247 = vcmp.eq.s32.totalorder %v3242, 2
    %v3248 = vxor.u32 %v3238, 2147483648
    %v3249 = vsel %vm3247, %v3248, %v3239
    %v3250 = vsel %vm3243, %v3246, %v3249
    %v3251 = vsel %vm3240, nan, %v3250
    %v3252 = vand.u32 2147483647, %v439
    %vm3253 = vcmp.le.f32.partialorder %v3252, 0.7853982
    %vm3254 = vcmp.lt.s32.totalorder %v439, 0
    %v3255 = vand.u32 %v439, 2139095040
    %v3256 = vshrl.u32 %v3255, 23
    %v3257 = vsub.s32 %v3256, 127
    %v3258 = vand.u32 2147483647, %v439
    %v3259 = vand.u32 %v3258, 8388607
    %v3260 = vor.u32 %v3259, 8388608
    %v3261 = vsub.s32 0, %v3260
    %v3262 = vadd.s32 %v3257, 1
    %vm3263 = vcmp.gt.s32.totalorder %v3262, 0
    %v3264 = vsel %vm3263, %v3262, 0
    %v3265 = vshrl.u32 %v3264, 5
    %v3266 = vand.u32 %v3264, 31
    %v3267 = vsub.s32 32, %v3266
    %v3268 = vshrl.u32 683565275, %v3267
    %v3269 = vshll.u32 683565275, %v3266
    %v3270 = vshrl.u32 2475754826, %v3267
    %v3271 = vor.u32 %v3269, %v3270
    %v3272 = vshll.u32 2475754826, %v3266
    %v3273 = vshrl.u32 2131351028, %v3267
    %v3274 = vor.u32 %v3272, %v3273
    %v3275 = vshll.u32 2131351028, %v3266
    %v3276 = vshrl.u32 2102212464, %v3267
    %v3277 = vor.u32 %v3275, %v3276
    %v3278 = vshll.u32 2102212464, %v3266
    %v3279 = vshrl.u32 920167782, %v3267
    %v3280 = vor.u32 %v3278, %v3279
    %v3281 = vshll.u32 920167782, %v3266
    %v3282 = vshrl.u32 1326507024, %v3267
    %v3283 = vor.u32 %v3281, %v3282
    %vm3284 = vcmp.lt.s32.totalorder %v3265, 1
    %vm3285 = vcmp.lt.s32.totalorder %v3265, 2
    %vm3286 = vcmp.lt.s32.totalorder %v3265, 3
    %vm3287 = vcmp.lt.s32.totalorder %v3265, 4
    %v3288 = vsel %vm3284, %v3268, %v3271
    %v3289 = vsel %vm3287, %v3277, 2102212464
    %v3290 = vsel %vm3286, %v3274, %v3289
    %v3291 = vsel %vm3285, %v3288, %v3290
    %v3292 = vsel %vm3284, %v3271, %v3274
    %v3293 = vsel %vm3287, %v3280, 920167782
    %v3294 = vsel %vm3286, %v3277, %v3293
    %v3295 = vsel %vm3285, %v3292, %v3294
    %v3296 = vsel %vm3284, %v3274, %v3277
    %v3297 = vsel %vm3287, %v3283, 1326507024
    %v3298 = vsel %vm3286, %v3280, %v3297
    %v3299 = vsel %vm3285, %v3296, %v3298
    %v3300 = vshll.u32 %v3260, 8
    %v3301 = vmul.u32.u64.compose %v3300, %v3299
    %v3302 = vextract.low.u32 %v3301
    %v3303 = vextract.high.u32 %v3301
    %v3304 = vmul.u32.u64.compose %v3300, %v3295
    %v3305 = vextract.low.u32 %v3304
    %v3306 = vextract.high.u32 %v3304
    %v3307 = vmul.u32 %v3300, %v3291
    %v3308 = vadd.s32 %v3303, %v3305
    %vm3309 = vc.u32 %v3303, %v3305
    %v3310 = vadd.s32 %v3306, 1
    %v3311 = vsel %vm3309, %v3310, %v3306
    %v3312 = vadd.s32 %v3307, %v3311
    %v3313 = vadd.s32 %v3312, 536870912
    %v3314 = vshrl.u32 %v3313, 30
    %v3315 = vshll.u32 %v3314, 30
    %v3316 = vsub.s32 %v3312, %v3315
    %vm3317 = vcmp.lt.s32.totalorder %v3316, 0
    %v3318 = vsub.s32 0, %v3316
    %v3319 = vsel %vm3317, %v3318, %v3316
    %v3320 = vclz %v3319
    %v3321 = vsub.s32 %v3320, 2
    %vm3322 = vcmp.gt.s32.totalorder 0, %v3321
    %v3323 = vsel %vm3322, 0, %v3321
    %v3324 = vsub.s32 32, %v3323
    %v3325 = vshll.u32 %v3316, %v3323
    %v3326 = vshrl.u32 %v3308, %v3324
    %v3327 = vor.u32 %v3325, %v3326
    %v3328 = vsub.s32 4294967266, %v3323
    %v3329 = vadd.s32 %v3328, 127
    %v3330 = vshll.u32 %v3329, 23
    %v3331 = vor.u32 4788187, %v3330
    %v3332 = vand.u32 2147483647, %v3331
    %v3334 = vcvt.s32.f32 %v3327
    %v3335 = vmul.f32 %v3334, %v3332
    %v3336 = vxor.u32 %v3335, 2147483648
    %v3337 = vsel %vm3254, %v3336, %v3335
    %v3338 = vsub.s32 4, %v3314
    %v3339 = vsel %vm3254, %v3338, %v3314
    %v3340 = vsel %vm3253, %v439, %v3337
    %v3341 = vsel %vm3253, 0, %v3339
    %v3342 = vcosq.f32.pop %v3340
    %v3343 = vsinq.f32.pop %v3340
    %vm3344 = vweird.f32 %v439
    %v3345 = vadd.s32 %v3341, 3
    %v3346 = vand.u32 %v3345, 3
    %vm3347 = vcmp.lt.s32.totalorder %v3346, 2
    %vm3348 = vcmp.eq.s32.totalorder %v3346, 0
    %v3349 = vxor.u32 %v3343, 2147483648
    %v3350 = vsel %vm3348, %v3342, %v3349
    %vm3351 = vcmp.eq.s32.totalorder %v3346, 2
    %v3352 = vxor.u32 %v3342, 2147483648
    %v3353 = vsel %vm3351, %v3352, %v3343
    %v3354 = vsel %vm3347, %v3350, %v3353
    %v3355 = vsel %vm3344, nan, %v3354
    %v3356 = vand.u32 2147483647, %v440
    %vm3357 = vcmp.le.f32.partialorder %v3356, 0.7853982
    %vm3358 = vcmp.lt.s32.totalorder %v440, 0
    %v3359 = vand.u32 %v440, 2139095040
    %v3360 = vshrl.u32 %v3359, 23
    %v3361 = vsub.s32 %v3360, 127
    %v3362 = vand.u32 2147483647, %v440
    %v3363 = vand.u32 %v3362, 8388607
    %v3364 = vor.u32 %v3363, 8388608
    %v3365 = vsub.s32 0, %v3364
    %v3366 = vadd.s32 %v3361, 1
    %vm3367 = vcmp.gt.s32.totalorder %v3366, 0
    %v3368 = vsel %vm3367, %v3366, 0
    %v3369 = vshrl.u32 %v3368, 5
    %v3370 = vand.u32 %v3368, 31
    %v3371 = vsub.s32 32, %v3370
    %v3372 = vshrl.u32 683565275, %v3371
    %v3373 = vshll.u32 683565275, %v3370
    %v3374 = vshrl.u32 2475754826, %v3371
    %v3375 = vor.u32 %v3373, %v3374
    %v3376 = vshll.u32 2475754826, %v3370
    %v3377 = vshrl.u32 2131351028, %v3371
    %v3378 = vor.u32 %v3376, %v3377
    %v3379 = vshll.u32 2131351028, %v3370
    %v3380 = vshrl.u32 2102212464, %v3371
    %v3381 = vor.u32 %v3379, %v3380
    %v3382 = vshll.u32 2102212464, %v3370
    %v3383 = vshrl.u32 920167782, %v3371
    %v3384 = vor.u32 %v3382, %v3383
    %v3385 = vshll.u32 920167782, %v3370
    %v3386 = vshrl.u32 1326507024, %v3371
    %v3387 = vor.u32 %v3385, %v3386
    %vm3388 = vcmp.lt.s32.totalorder %v3369, 1
    %vm3389 = vcmp.lt.s32.totalorder %v3369, 2
    %vm3390 = vcmp.lt.s32.totalorder %v3369, 3
    %vm3391 = vcmp.lt.s32.totalorder %v3369, 4
    %v3392 = vsel %vm3388, %v3372, %v3375
    %v3393 = vsel %vm3391, %v3381, 2102212464
    %v3394 = vsel %vm3390, %v3378, %v3393
    %v3395 = vsel %vm3389, %v3392, %v3394
    %v3396 = vsel %vm3388, %v3375, %v3378
    %v3397 = vsel %vm3391, %v3384, 920167782
    %v3398 = vsel %vm3390, %v3381, %v3397
    %v3399 = vsel %vm3389, %v3396, %v3398
    %v3400 = vsel %vm3388, %v3378, %v3381
    %v3401 = vsel %vm3391, %v3387, 1326507024
    %v3402 = vsel %vm3390, %v3384, %v3401
    %v3403 = vsel %vm3389, %v3400, %v3402
    %v3404 = vshll.u32 %v3364, 8
    %v3405 = vmul.u32.u64.compose %v3404, %v3403
    %v3406 = vextract.low.u32 %v3405
    %v3407 = vextract.high.u32 %v3405
    %v3408 = vmul.u32.u64.compose %v3404, %v3399
    %v3409 = vextract.low.u32 %v3408
    %v3410 = vextract.high.u32 %v3408
    %v3411 = vmul.u32 %v3404, %v3395
    %v3412 = vadd.s32 %v3407, %v3409
    %vm3413 = vc.u32 %v3407, %v3409
    %v3414 = vadd.s32 %v3410, 1
    %v3415 = vsel %vm3413, %v3414, %v3410
    %v3416 = vadd.s32 %v3411, %v3415
    %v3417 = vadd.s32 %v3416, 536870912
    %v3418 = vshrl.u32 %v3417, 30
    %v3419 = vshll.u32 %v3418, 30
    %v3420 = vsub.s32 %v3416, %v3419
    %vm3421 = vcmp.lt.s32.totalorder %v3420, 0
    %v3422 = vsub.s32 0, %v3420
    %v3423 = vsel %vm3421, %v3422, %v3420
    %v3424 = vclz %v3423
    %v3425 = vsub.s32 %v3424, 2
    %vm3426 = vcmp.gt.s32.totalorder 0, %v3425
    %v3427 = vsel %vm3426, 0, %v3425
    %v3428 = vsub.s32 32, %v3427
    %v3429 = vshll.u32 %v3420, %v3427
    %v3430 = vshrl.u32 %v3412, %v3428
    %v3431 = vor.u32 %v3429, %v3430
    %v3432 = vsub.s32 4294967266, %v3427
    %v3433 = vadd.s32 %v3432, 127
    %v3434 = vshll.u32 %v3433, 23
    %v3435 = vor.u32 4788187, %v3434
    %v3436 = vand.u32 2147483647, %v3435
    %v3438 = vcvt.s32.f32 %v3431
    %v3439 = vmul.f32 %v3438, %v3436
    %v3440 = vxor.u32 %v3439, 2147483648
    %v3441 = vsel %vm3358, %v3440, %v3439
    %v3442 = vsub.s32 4, %v3418
    %v3443 = vsel %vm3358, %v3442, %v3418
    %v3444 = vsel %vm3357, %v440, %v3441
    %v3445 = vsel %vm3357, 0, %v3443
    %v3446 = vcosq.f32.pop %v3444
    %v3447 = vsinq.f32.pop %v3444
    %vm3448 = vweird.f32 %v440
    %v3449 = vadd.s32 %v3445, 3
    %v3450 = vand.u32 %v3449, 3
    %vm3451 = vcmp.lt.s32.totalorder %v3450, 2
    %vm3452 = vcmp.eq.s32.totalorder %v3450, 0
    %v3453 = vxor.u32 %v3447, 2147483648
    %v3454 = vsel %vm3452, %v3446, %v3453
    %vm3455 = vcmp.eq.s32.totalorder %v3450, 2
    %v3456 = vxor.u32 %v3446, 2147483648
    %v3457 = vsel %vm3455, %v3456, %v3447
    %v3458 = vsel %vm3451, %v3454, %v3457
    %v3459 = vsel %vm3448, nan, %v3458
    %v3460 = vand.u32 2147483647, %v441
    %vm3461 = vcmp.le.f32.partialorder %v3460, 0.7853982
    %vm3462 = vcmp.lt.s32.totalorder %v441, 0
    %v3463 = vand.u32 %v441, 2139095040
    %v3464 = vshrl.u32 %v3463, 23
    %v3465 = vsub.s32 %v3464, 127
    %v3466 = vand.u32 2147483647, %v441
    %v3467 = vand.u32 %v3466, 8388607
    %v3468 = vor.u32 %v3467, 8388608
    %v3469 = vsub.s32 0, %v3468
    %v3470 = vadd.s32 %v3465, 1
    %vm3471 = vcmp.gt.s32.totalorder %v3470, 0
    %v3472 = vsel %vm3471, %v3470, 0
    %v3473 = vshrl.u32 %v3472, 5
    %v3474 = vand.u32 %v3472, 31
    %v3475 = vsub.s32 32, %v3474
    %v3476 = vshrl.u32 683565275, %v3475
    %v3477 = vshll.u32 683565275, %v3474
    %v3478 = vshrl.u32 2475754826, %v3475
    %v3479 = vor.u32 %v3477, %v3478
    %v3480 = vshll.u32 2475754826, %v3474
    %v3481 = vshrl.u32 2131351028, %v3475
    %v3482 = vor.u32 %v3480, %v3481
    %v3483 = vshll.u32 2131351028, %v3474
    %v3484 = vshrl.u32 2102212464, %v3475
    %v3485 = vor.u32 %v3483, %v3484
    %v3486 = vshll.u32 2102212464, %v3474
    %v3487 = vshrl.u32 920167782, %v3475
    %v3488 = vor.u32 %v3486, %v3487
    %v3489 = vshll.u32 920167782, %v3474
    %v3490 = vshrl.u32 1326507024, %v3475
    %v3491 = vor.u32 %v3489, %v3490
    %vm3492 = vcmp.lt.s32.totalorder %v3473, 1
    %vm3493 = vcmp.lt.s32.totalorder %v3473, 2
    %vm3494 = vcmp.lt.s32.totalorder %v3473, 3
    %vm3495 = vcmp.lt.s32.totalorder %v3473, 4
    %v3496 = vsel %vm3492, %v3476, %v3479
    %v3497 = vsel %vm3495, %v3485, 2102212464
    %v3498 = vsel %vm3494, %v3482, %v3497
    %v3499 = vsel %vm3493, %v3496, %v3498
    %v3500 = vsel %vm3492, %v3479, %v3482
    %v3501 = vsel %vm3495, %v3488, 920167782
    %v3502 = vsel %vm3494, %v3485, %v3501
    %v3503 = vsel %vm3493, %v3500, %v3502
    %v3504 = vsel %vm3492, %v3482, %v3485
    %v3505 = vsel %vm3495, %v3491, 1326507024
    %v3506 = vsel %vm3494, %v3488, %v3505
    %v3507 = vsel %vm3493, %v3504, %v3506
    %v3508 = vshll.u32 %v3468, 8
    %v3509 = vmul.u32.u64.compose %v3508, %v3507
    %v3510 = vextract.low.u32 %v3509
    %v3511 = vextract.high.u32 %v3509
    %v3512 = vmul.u32.u64.compose %v3508, %v3503
    %v3513 = vextract.low.u32 %v3512
    %v3514 = vextract.high.u32 %v3512
    %v3515 = vmul.u32 %v3508, %v3499
    %v3516 = vadd.s32 %v3511, %v3513
    %vm3517 = vc.u32 %v3511, %v3513
    %v3518 = vadd.s32 %v3514, 1
    %v3519 = vsel %vm3517, %v3518, %v3514
    %v3520 = vadd.s32 %v3515, %v3519
    %v3521 = vadd.s32 %v3520, 536870912
    %v3522 = vshrl.u32 %v3521, 30
    %v3523 = vshll.u32 %v3522, 30
    %v3524 = vsub.s32 %v3520, %v3523
    %vm3525 = vcmp.lt.s32.totalorder %v3524, 0
    %v3526 = vsub.s32 0, %v3524
    %v3527 = vsel %vm3525, %v3526, %v3524
    %v3528 = vclz %v3527
    %v3529 = vsub.s32 %v3528, 2
    %vm3530 = vcmp.gt.s32.totalorder 0, %v3529
    %v3531 = vsel %vm3530, 0, %v3529
    %v3532 = vsub.s32 32, %v3531
    %v3533 = vshll.u32 %v3524, %v3531
    %v3534 = vshrl.u32 %v3516, %v3532
    %v3535 = vor.u32 %v3533, %v3534
    %v3536 = vsub.s32 4294967266, %v3531
    %v3537 = vadd.s32 %v3536, 127
    %v3538 = vshll.u32 %v3537, 23
    %v3539 = vor.u32 4788187, %v3538
    %v3540 = vand.u32 2147483647, %v3539
    %v3542 = vcvt.s32.f32 %v3535
    %v3543 = vmul.f32 %v3542, %v3540
    %v3544 = vxor.u32 %v3543, 2147483648
    %v3545 = vsel %vm3462, %v3544, %v3543
    %v3546 = vsub.s32 4, %v3522
    %v3547 = vsel %vm3462, %v3546, %v3522
    %v3548 = vsel %vm3461, %v441, %v3545
    %v3549 = vsel %vm3461, 0, %v3547
    %v3550 = vcosq.f32.pop %v3548
    %v3551 = vsinq.f32.pop %v3548
    %vm3552 = vweird.f32 %v441
    %v3553 = vadd.s32 %v3549, 3
    %v3554 = vand.u32 %v3553, 3
    %vm3555 = vcmp.lt.s32.totalorder %v3554, 2
    %vm3556 = vcmp.eq.s32.totalorder %v3554, 0
    %v3557 = vxor.u32 %v3551, 2147483648
    %v3558 = vsel %vm3556, %v3550, %v3557
    %vm3559 = vcmp.eq.s32.totalorder %v3554, 2
    %v3560 = vxor.u32 %v3550, 2147483648
    %v3561 = vsel %vm3559, %v3560, %v3551
    %v3562 = vsel %vm3555, %v3558, %v3561
    %v3563 = vsel %vm3552, nan, %v3562
    %v3564 = vand.u32 2147483647, %v442
    %vm3565 = vcmp.le.f32.partialorder %v3564, 0.7853982
    %vm3566 = vcmp.lt.s32.totalorder %v442, 0
    %v3567 = vand.u32 %v442, 2139095040
    %v3568 = vshrl.u32 %v3567, 23
    %v3569 = vsub.s32 %v3568, 127
    %v3570 = vand.u32 2147483647, %v442
    %v3571 = vand.u32 %v3570, 8388607
    %v3572 = vor.u32 %v3571, 8388608
    %v3573 = vsub.s32 0, %v3572
    %v3574 = vadd.s32 %v3569, 1
    %vm3575 = vcmp.gt.s32.totalorder %v3574, 0
    %v3576 = vsel %vm3575, %v3574, 0
    %v3577 = vshrl.u32 %v3576, 5
    %v3578 = vand.u32 %v3576, 31
    %v3579 = vsub.s32 32, %v3578
    %v3580 = vshrl.u32 683565275, %v3579
    %v3581 = vshll.u32 683565275, %v3578
    %v3582 = vshrl.u32 2475754826, %v3579
    %v3583 = vor.u32 %v3581, %v3582
    %v3584 = vshll.u32 2475754826, %v3578
    %v3585 = vshrl.u32 2131351028, %v3579
    %v3586 = vor.u32 %v3584, %v3585
    %v3587 = vshll.u32 2131351028, %v3578
    %v3588 = vshrl.u32 2102212464, %v3579
    %v3589 = vor.u32 %v3587, %v3588
    %v3590 = vshll.u32 2102212464, %v3578
    %v3591 = vshrl.u32 920167782, %v3579
    %v3592 = vor.u32 %v3590, %v3591
    %v3593 = vshll.u32 920167782, %v3578
    %v3594 = vshrl.u32 1326507024, %v3579
    %v3595 = vor.u32 %v3593, %v3594
    %vm3596 = vcmp.lt.s32.totalorder %v3577, 1
    %vm3597 = vcmp.lt.s32.totalorder %v3577, 2
    %vm3598 = vcmp.lt.s32.totalorder %v3577, 3
    %vm3599 = vcmp.lt.s32.totalorder %v3577, 4
    %v3600 = vsel %vm3596, %v3580, %v3583
    %v3601 = vsel %vm3599, %v3589, 2102212464
    %v3602 = vsel %vm3598, %v3586, %v3601
    %v3603 = vsel %vm3597, %v3600, %v3602
    %v3604 = vsel %vm3596, %v3583, %v3586
    %v3605 = vsel %vm3599, %v3592, 920167782
    %v3606 = vsel %vm3598, %v3589, %v3605
    %v3607 = vsel %vm3597, %v3604, %v3606
    %v3608 = vsel %vm3596, %v3586, %v3589
    %v3609 = vsel %vm3599, %v3595, 1326507024
    %v3610 = vsel %vm3598, %v3592, %v3609
    %v3611 = vsel %vm3597, %v3608, %v3610
    %v3612 = vshll.u32 %v3572, 8
    %v3613 = vmul.u32.u64.compose %v3612, %v3611
    %v3614 = vextract.low.u32 %v3613
    %v3615 = vextract.high.u32 %v3613
    %v3616 = vmul.u32.u64.compose %v3612, %v3607
    %v3617 = vextract.low.u32 %v3616
    %v3618 = vextract.high.u32 %v3616
    %v3619 = vmul.u32 %v3612, %v3603
    %v3620 = vadd.s32 %v3615, %v3617
    %vm3621 = vc.u32 %v3615, %v3617
    %v3622 = vadd.s32 %v3618, 1
    %v3623 = vsel %vm3621, %v3622, %v3618
    %v3624 = vadd.s32 %v3619, %v3623
    %v3625 = vadd.s32 %v3624, 536870912
    %v3626 = vshrl.u32 %v3625, 30
    %v3627 = vshll.u32 %v3626, 30
    %v3628 = vsub.s32 %v3624, %v3627
    %vm3629 = vcmp.lt.s32.totalorder %v3628, 0
    %v3630 = vsub.s32 0, %v3628
    %v3631 = vsel %vm3629, %v3630, %v3628
    %v3632 = vclz %v3631
    %v3633 = vsub.s32 %v3632, 2
    %vm3634 = vcmp.gt.s32.totalorder 0, %v3633
    %v3635 = vsel %vm3634, 0, %v3633
    %v3636 = vsub.s32 32, %v3635
    %v3637 = vshll.u32 %v3628, %v3635
    %v3638 = vshrl.u32 %v3620, %v3636
    %v3639 = vor.u32 %v3637, %v3638
    %v3640 = vsub.s32 4294967266, %v3635
    %v3641 = vadd.s32 %v3640, 127
    %v3642 = vshll.u32 %v3641, 23
    %v3643 = vor.u32 4788187, %v3642
    %v3644 = vand.u32 2147483647, %v3643
    %v3646 = vcvt.s32.f32 %v3639
    %v3647 = vmul.f32 %v3646, %v3644
    %v3648 = vxor.u32 %v3647, 2147483648
    %v3649 = vsel %vm3566, %v3648, %v3647
    %v3650 = vsub.s32 4, %v3626
    %v3651 = vsel %vm3566, %v3650, %v3626
    %v3652 = vsel %vm3565, %v442, %v3649
    %v3653 = vsel %vm3565, 0, %v3651
    %v3654 = vcosq.f32.pop %v3652
    %v3655 = vsinq.f32.pop %v3652
    %vm3656 = vweird.f32 %v442
    %v3657 = vadd.s32 %v3653, 3
    %v3658 = vand.u32 %v3657, 3
    %vm3659 = vcmp.lt.s32.totalorder %v3658, 2
    %vm3660 = vcmp.eq.s32.totalorder %v3658, 0
    %v3661 = vxor.u32 %v3655, 2147483648
    %v3662 = vsel %vm3660, %v3654, %v3661
    %vm3663 = vcmp.eq.s32.totalorder %v3658, 2
    %v3664 = vxor.u32 %v3654, 2147483648
    %v3665 = vsel %vm3663, %v3664, %v3655
    %v3666 = vsel %vm3659, %v3662, %v3665
    %v3667 = vsel %vm3656, nan, %v3666
    %v3668 = vand.u32 2147483647, %v443
    %vm3669 = vcmp.le.f32.partialorder %v3668, 0.7853982
    %vm3670 = vcmp.lt.s32.totalorder %v443, 0
    %v3671 = vand.u32 %v443, 2139095040
    %v3672 = vshrl.u32 %v3671, 23
    %v3673 = vsub.s32 %v3672, 127
    %v3674 = vand.u32 2147483647, %v443
    %v3675 = vand.u32 %v3674, 8388607
    %v3676 = vor.u32 %v3675, 8388608
    %v3677 = vsub.s32 0, %v3676
    %v3678 = vadd.s32 %v3673, 1
    %vm3679 = vcmp.gt.s32.totalorder %v3678, 0
    %v3680 = vsel %vm3679, %v3678, 0
    %v3681 = vshrl.u32 %v3680, 5
    %v3682 = vand.u32 %v3680, 31
    %v3683 = vsub.s32 32, %v3682
    %v3684 = vshrl.u32 683565275, %v3683
    %v3685 = vshll.u32 683565275, %v3682
    %v3686 = vshrl.u32 2475754826, %v3683
    %v3687 = vor.u32 %v3685, %v3686
    %v3688 = vshll.u32 2475754826, %v3682
    %v3689 = vshrl.u32 2131351028, %v3683
    %v3690 = vor.u32 %v3688, %v3689
    %v3691 = vshll.u32 2131351028, %v3682
    %v3692 = vshrl.u32 2102212464, %v3683
    %v3693 = vor.u32 %v3691, %v3692
    %v3694 = vshll.u32 2102212464, %v3682
    %v3695 = vshrl.u32 920167782, %v3683
    %v3696 = vor.u32 %v3694, %v3695
    %v3697 = vshll.u32 920167782, %v3682
    %v3698 = vshrl.u32 1326507024, %v3683
    %v3699 = vor.u32 %v3697, %v3698
    %vm3700 = vcmp.lt.s32.totalorder %v3681, 1
    %vm3701 = vcmp.lt.s32.totalorder %v3681, 2
    %vm3702 = vcmp.lt.s32.totalorder %v3681, 3
    %vm3703 = vcmp.lt.s32.totalorder %v3681, 4
    %v3704 = vsel %vm3700, %v3684, %v3687
    %v3705 = vsel %vm3703, %v3693, 2102212464
    %v3706 = vsel %vm3702, %v3690, %v3705
    %v3707 = vsel %vm3701, %v3704, %v3706
    %v3708 = vsel %vm3700, %v3687, %v3690
    %v3709 = vsel %vm3703, %v3696, 920167782
    %v3710 = vsel %vm3702, %v3693, %v3709
    %v3711 = vsel %vm3701, %v3708, %v3710
    %v3712 = vsel %vm3700, %v3690, %v3693
    %v3713 = vsel %vm3703, %v3699, 1326507024
    %v3714 = vsel %vm3702, %v3696, %v3713
    %v3715 = vsel %vm3701, %v3712, %v3714
    %v3716 = vshll.u32 %v3676, 8
    %v3717 = vmul.u32.u64.compose %v3716, %v3715
    %v3718 = vextract.low.u32 %v3717
    %v3719 = vextract.high.u32 %v3717
    %v3720 = vmul.u32.u64.compose %v3716, %v3711
    %v3721 = vextract.low.u32 %v3720
    %v3722 = vextract.high.u32 %v3720
    %v3723 = vmul.u32 %v3716, %v3707
    %v3724 = vadd.s32 %v3719, %v3721
    %vm3725 = vc.u32 %v3719, %v3721
    %v3726 = vadd.s32 %v3722, 1
    %v3727 = vsel %vm3725, %v3726, %v3722
    %v3728 = vadd.s32 %v3723, %v3727
    %v3729 = vadd.s32 %v3728, 536870912
    %v3730 = vshrl.u32 %v3729, 30
    %v3731 = vshll.u32 %v3730, 30
    %v3732 = vsub.s32 %v3728, %v3731
    %vm3733 = vcmp.lt.s32.totalorder %v3732, 0
    %v3734 = vsub.s32 0, %v3732
    %v3735 = vsel %vm3733, %v3734, %v3732
    %v3736 = vclz %v3735
    %v3737 = vsub.s32 %v3736, 2
    %vm3738 = vcmp.gt.s32.totalorder 0, %v3737
    %v3739 = vsel %vm3738, 0, %v3737
    %v3740 = vsub.s32 32, %v3739
    %v3741 = vshll.u32 %v3732, %v3739
    %v3742 = vshrl.u32 %v3724, %v3740
    %v3743 = vor.u32 %v3741, %v3742
    %v3744 = vsub.s32 4294967266, %v3739
    %v3745 = vadd.s32 %v3744, 127
    %v3746 = vshll.u32 %v3745, 23
    %v3747 = vor.u32 4788187, %v3746
    %v3748 = vand.u32 2147483647, %v3747
    %v3750 = vcvt.s32.f32 %v3743
    %v3751 = vmul.f32 %v3750, %v3748
    %v3752 = vxor.u32 %v3751, 2147483648
    %v3753 = vsel %vm3670, %v3752, %v3751
    %v3754 = vsub.s32 4, %v3730
    %v3755 = vsel %vm3670, %v3754, %v3730
    %v3756 = vsel %vm3669, %v443, %v3753
    %v3757 = vsel %vm3669, 0, %v3755
    %v3758 = vcosq.f32.pop %v3756
    %v3759 = vsinq.f32.pop %v3756
    %vm3760 = vweird.f32 %v443
    %v3761 = vadd.s32 %v3757, 3
    %v3762 = vand.u32 %v3761, 3
    %vm3763 = vcmp.lt.s32.totalorder %v3762, 2
    %vm3764 = vcmp.eq.s32.totalorder %v3762, 0
    %v3765 = vxor.u32 %v3759, 2147483648
    %v3766 = vsel %vm3764, %v3758, %v3765
    %vm3767 = vcmp.eq.s32.totalorder %v3762, 2
    %v3768 = vxor.u32 %v3758, 2147483648
    %v3769 = vsel %vm3767, %v3768, %v3759
    %v3770 = vsel %vm3763, %v3766, %v3769
    %v3771 = vsel %vm3760, nan, %v3770
    %3772 = vst [vmem:[#allocation2] sm:$0xff] %v547
    %3773 = vst [vmem:[#allocation2 + $0x8] sm:$0xff] %v651
    %3774 = vst [vmem:[#allocation2 + $0x10] sm:$0xff] %v755
    %3775 = vst [vmem:[#allocation2 + $0x18] sm:$0xff] %v859
    %3776 = vst [vmem:[#allocation2 + $0x20] sm:$0xff] %v963
    %3777 = vst [vmem:[#allocation2 + $0x28] sm:$0xff] %v1067
    %3778 = vst [vmem:[#allocation2 + $0x30] sm:$0xff] %v1171
    %3779 = vst [vmem:[#allocation2 + $0x38] sm:$0xff] %v1275
    %3780 = vst [vmem:[#allocation2 + $0x40] sm:$0xff] %v1379
    %3781 = vst [vmem:[#allocation2 + $0x48] sm:$0xff] %v1483
    %3782 = vst [vmem:[#allocation2 + $0x50] sm:$0xff] %v1587
    %3783 = vst [vmem:[#allocation2 + $0x58] sm:$0xff] %v1691
    %3784 = vst [vmem:[#allocation2 + $0x60] sm:$0xff] %v1795
    %3785 = vst [vmem:[#allocation2 + $0x68] sm:$0xff] %v1899
    %3786 = vst [vmem:[#allocation2 + $0x70] sm:$0xff] %v2003
    %3787 = vst [vmem:[#allocation2 + $0x78] sm:$0xff] %v2107
    %3788 = vst [vmem:[#allocation2 + $0x80] sm:$0xff] %v2211
    %3789 = vst [vmem:[#allocation2 + $0x88] sm:$0xff] %v2315
    %3790 = vst [vmem:[#allocation2 + $0x90] sm:$0xff] %v2419
    %3791 = vst [vmem:[#allocation2 + $0x98] sm:$0xff] %v2523
    %3792 = vst [vmem:[#allocation2 + $0xa0] sm:$0xff] %v2627
    %3793 = vst [vmem:[#allocation2 + $0xa8] sm:$0xff] %v2731
    %3794 = vst [vmem:[#allocation2 + $0xb0] sm:$0xff] %v2835
    %3795 = vst [vmem:[#allocation2 + $0xb8] sm:$0xff] %v2939
    %3796 = vst [vmem:[#allocation2 + $0xc0] sm:$0xff] %v3043
    %3797 = vst [vmem:[#allocation2 + $0xc8] sm:$0xff] %v3147
    %3798 = vst [vmem:[#allocation2 + $0xd0] sm:$0xff] %v3251
    %3799 = vst [vmem:[#allocation2 + $0xd8] sm:$0xff] %v3355
    %3800 = vst [vmem:[#allocation2 + $0xe0] sm:$0xff] %v3459
    %3801 = vst [vmem:[#allocation2 + $0xe8] sm:$0xff] %v3563
    %3802 = vst [vmem:[#allocation2 + $0xf0] sm:$0xff] %v3667
    %3803 = vst [vmem:[#allocation2 + $0xf8] sm:$0xff] %v3771
    // Predicated region
    $region14: #{tpu_custom_call.1} parent=1 // pred_check
      _
    $region15: #{tpu_custom_call.1} parent=1 // pred_check_branch
      %3805 = sbr.rel (0) target = $region17
    $region16: #{tpu_custom_call.1} parent=1 // pred_region
      %s3807 = ssub.s32 4096, 4096
      %3808 = vsyncadd [#allocation3], %s3807
      %s3809 = sshll.u32 [#allocation2], 4
      %s3810 = int_to_ptr.vmem [resolvable:$true] %s3809
      %3815 = dma.vmem_to_hbm [thread:$0]  %s3810, 4096, %s3, [#allocation3], 128, 128, 8
    $region17: #{tpu_custom_call.1} parent=1 // pred_fallthru
      _
    // Predicated region
    $region18: #{tpu_custom_call.1} parent=1 // pred_check
      _
    $region19: #{tpu_custom_call.1} parent=1 // pred_check_branch
      %3817 = sbr.rel (0) target = $region21
    $region20: #{tpu_custom_call.1} parent=1 // pred_region
      %3818 = dma.done [#allocation3], 4096
    $region21: #{tpu_custom_call.1} parent=1 // pred_fallthru
      _
    %3819 = vsyncpa [#allocation3], 1

</llo_original>
